<compile_context>
chip_gen: v6e
topology: v6e:2x2x1
jax: 0.10.0
libtpu: 0.0.40
codegen_flags: <defaults>
</compile_context>

<pallas_src>
import functools

import jax
import jax.numpy as jnp
from jax.experimental import pallas as pl
from jax.experimental.pallas import tpu as pltpu

EPS = 1e-5
LANES = 128


def _round_up(c, m=LANES):
    return ((c + m - 1) // m) * m


def _pad_last(a, cp):
    c = a.shape[-1]
    if c == cp:
        return a
    pad = [(0, 0)] * (a.ndim - 1) + [(0, cp - c)]
    return jnp.pad(a, pad)


# ---------------- Pallas kernels ----------------

def fused_conv_kernel(x_ref, insc_ref, insh_ref, w_ref,
                      y_ref, sum_ref, sq_ref,
                      xp_ref, patch_ref, *, apply_input_act):
    """Fused [optional BN+ReLU on input] -> 3x3 conv (single big-K matmul) -> BN-stats accum.

    x_ref    : (1, H, W, Cinp)      input block for one batch element (channels lane-padded)
    insc_ref : (1, Cinp)            folded BN scale of the previous layer (unused for layer 1)
    insh_ref : (1, Cinp)            folded BN shift of the previous layer (unused for layer 1)
    w_ref    : (9*Cinp, Coutp)      tap-major weights, zero-padded channels
    y_ref    : (1, H, W, Coutp)     conv output (pre-BN)
    sum_ref  : (1, Coutp)           accumulated per-channel sum over (N, H, W)
    sq_ref   : (1, Coutp)           accumulated per-channel sum of squares over (N, H, W)
    xp_ref   : VMEM (H+2, W+2, Cinp) scratch holding the zero-halo padded input
    patch_ref: VMEM (H*W, 9*Cinp)    scratch holding the im2col slab
    """
    H, W, Coutp = y_ref.shape[1], y_ref.shape[2], y_ref.shape[3]
    Cinp = x_ref.shape[3]

    x = x_ref[0]                                           # (H, W, Cinp)
    if apply_input_act:
        # Previous layer's BatchNorm (folded to scale/shift) + ReLU, fused into the load path.
        x = jnp.maximum(x * insc_ref[0] + insh_ref[0], 0.0)

    # In-kernel zero halo (padding='same'): zero the scratch, write the interior.
    xp_ref[...] = jnp.zeros_like(xp_ref)
    xp_ref[pl.ds(1, H), pl.ds(1, W), :] = x
    xp = xp_ref[...]                                       # (H+2, W+2, Cinp)

    # im2col into a lane-aligned slab, then ONE K = 9*Cinp matmul on the MXU.
    for k in range(9):                                     # static unroll over taps
        dy, dx = k // 3, k % 3
        patch_ref[:, pl.ds(k * Cinp, Cinp)] = (
            xp[dy:dy + H, dx:dx + W, :].reshape(H * W, Cinp))
    acc = jnp.dot(patch_ref[...], w_ref[...],
                  preferred_element_type=jnp.float32)      # (H*W, Coutp)

    y_ref[...] = acc.reshape(1, H, W, Coutp)

    # Fused BatchNorm batch statistics, accumulated across the (sequential) batch grid axis.
    @pl.when(pl.program_id(0) == 0)
    def _init():
        sum_ref[...] = jnp.zeros_like(sum_ref)
        sq_ref[...] = jnp.zeros_like(sq_ref)

    sum_ref[...] += jnp.sum(acc, axis=0, keepdims=True)
    sq_ref[...] += jnp.sum(acc * acc, axis=0, keepdims=True)


def bn_relu_kernel(y_ref, sc_ref, sh_ref, o_ref):
    """Final folded BatchNorm (per-channel scale/shift) + ReLU."""
    y = y_ref[...]                                         # (1, H, W, Cp)
    o_ref[...] = jnp.maximum(y * sc_ref[0] + sh_ref[0], 0.0)


# ---------------- wrappers ----------------

def fused_conv_bnstats(x, w9, in_scale, in_shift, *, apply_input_act):
    """x: (N, H, W, Cinp), w9: (9*Cinp, Coutp) -> (conv_out, ch_sum, ch_sumsq)."""
    N, H, W, Cinp = x.shape
    Coutp = w9.shape[1]
    kernel = functools.partial(fused_conv_kernel, apply_input_act=apply_input_act)
    return pl.pallas_call(
        kernel,
        out_shape=(jax.ShapeDtypeStruct((N, H, W, Coutp), jnp.float32),
                   jax.ShapeDtypeStruct((1, Coutp), jnp.float32),
                   jax.ShapeDtypeStruct((1, Coutp), jnp.float32)),
        grid=(N,),
        in_specs=[
            pl.BlockSpec((1, H, W, Cinp), lambda n: (n, 0, 0, 0)),
            pl.BlockSpec((1, Cinp), lambda n: (0, 0)),
            pl.BlockSpec((1, Cinp), lambda n: (0, 0)),
            pl.BlockSpec((9 * Cinp, Coutp), lambda n: (0, 0)),
        ],
        out_specs=(
            pl.BlockSpec((1, H, W, Coutp), lambda n: (n, 0, 0, 0)),
            pl.BlockSpec((1, Coutp), lambda n: (0, 0)),   # resident accumulator
            pl.BlockSpec((1, Coutp), lambda n: (0, 0)),   # resident accumulator
        ),
        scratch_shapes=[
            pltpu.VMEM((H + 2, W + 2, Cinp), jnp.float32),
            pltpu.VMEM((H * W, 9 * Cinp), jnp.float32),
        ],
        compiler_params=pltpu.CompilerParams(dimension_semantics=("arbitrary",)),
    )(x, in_scale, in_shift, w9)


def bn_relu_apply(y, scale, shift):
    """y: (N, H, W, Cp) pre-BN conv output; scale/shift: (1, Cp) folded BN params."""
    N, H, W, Cp = y.shape
    return pl.pallas_call(
        bn_relu_kernel,
        out_shape=jax.ShapeDtypeStruct((N, H, W, Cp), jnp.float32),
        grid=(N,),
        in_specs=[
            pl.BlockSpec((1, H, W, Cp), lambda n: (n, 0, 0, 0)),
            pl.BlockSpec((1, Cp), lambda n: (0, 0)),
            pl.BlockSpec((1, Cp), lambda n: (0, 0)),
        ],
        out_specs=pl.BlockSpec((1, H, W, Cp), lambda n: (n, 0, 0, 0)),
        compiler_params=pltpu.CompilerParams(dimension_semantics=("parallel",)),
    )(y, scale, shift)


def _fold_bn(ch_sum, ch_sumsq, gamma_p, beta_p, m):
    """Training-mode BN (batch stats, biased var) folded to per-channel scale/shift."""
    mean = ch_sum[0] / m
    # NOTE: E[x^2] - E[x]^2 can cancel for large-mean channels; fine at these magnitudes
    # since activations are renormalized every layer. Use a two-pass variance if needed.
    var = ch_sumsq[0] / m - mean * mean
    scale = gamma_p * jax.lax.rsqrt(var + EPS)
    shift = beta_p - mean * scale
    return scale.reshape(1, -1), shift.reshape(1, -1)


def _prep_weight(w, cinp, coutp):
    """(3, 3, Cin, Cout) -> zero-padded, tap-major (9*Cinp, Coutp)."""
    kh, kw, cin, cout = w.shape
    wp = jnp.pad(w, ((0, 0), (0, 0), (0, cinp - cin), (0, coutp - cout)))
    return wp.reshape(kh * kw * cinp, coutp)


def conv_block_nested_forward(x_nchw, p):
    """PyTorch-layout entry point: x_nchw (N, Cin, H, W) -> (N, out_ch, H, W)."""
    N, in_ch, H, W = x_nchw.shape
    mid_ch = p["w1"].shape[-1]
    out_ch = p["w2"].shape[-1]
    cinp, cmidp, coutp = _round_up(in_ch), _round_up(mid_ch), _round_up(out_ch)
    m = N * H * W

    x = jnp.transpose(x_nchw, (0, 2, 3, 1))                # NCHW -> NHWC
    x = _pad_last(x, cinp)                                 # lane-dense channels

    w1 = _prep_weight(p["w1"], cinp, cmidp)
    w2 = _prep_weight(p["w2"], cmidp, coutp)
    g1, be1 = _pad_last(p["g1"], cmidp), _pad_last(p["be1"], cmidp)
    g2, be2 = _pad_last(p["g2"], coutp), _pad_last(p["be2"], coutp)
    # Conv biases p["b1"], p["b2"] are intentionally unused: training-mode BN subtracts the
    # per-channel mean, which cancels any per-channel constant added by the conv bias.

    ident_sc = jnp.ones((1, cinp), jnp.float32)
    ident_sh = jnp.zeros((1, cinp), jnp.float32)

    # Layer 1: conv + BN-stats (no input activation).
    y1, s1, q1 = fused_conv_bnstats(x, w1, ident_sc, ident_sh, apply_input_act=False)
    sc1, sh1 = _fold_bn(s1, q1, g1, be1, m)

    # Layer 2: BN1+ReLU fused into the input load, conv + BN-stats.
    y2, s2, q2 = fused_conv_bnstats(y1, w2, sc1, sh1, apply_input_act=True)
    sc2, sh2 = _fold_bn(s2, q2, g2, be2, m)

    # Final BN2 + ReLU.
    out = bn_relu_apply(y2, sc2, sh2)
    out = out[..., :out_ch]                                # drop channel padding
    return jnp.transpose(out, (0, 3, 1, 2))                # NHWC -> NCHW


# ---------------- pure-JAX reference for validation ----------------

def ref_forward(x_nchw, p):
    def conv(x, w, b):
        w_oihw = jnp.transpose(w, (3, 2, 0, 1))
        y = jax.lax.conv_general_dilated(
            x, w_oihw, (1, 1), "SAME",
            dimension_numbers=("NCHW", "OIHW", "NCHW"))
        return y + b[None, :, None, None]

    def bn_relu(y, g, be):
        mean = jnp.mean(y, axis=(0, 2, 3), keepdims=True)
        var = jnp.var(y, axis=(0, 2, 3), keepdims=True)
        yn = (y - mean) / jnp.sqrt(var + EPS)
        return jnp.maximum(yn * g[None, :, None, None] + be[None, :, None, None], 0.0)

    y = bn_relu(conv(x_nchw, p["w1"], p["b1"]), p["g1"], p["be1"])
    y = bn_relu(conv(y, p["w2"], p["b2"]), p["g2"], p["be2"])
    return y


if __name__ == "__main__":
    N, in_ch, mid_ch, out_ch, H, W = 2, 4, 8, 8, 16, 16

    key = jax.random.PRNGKey(0)
    ks = jax.random.split(key, 7)
    params = {
        "w1": 0.1 * jax.random.normal(ks[0], (3, 3, in_ch, mid_ch), jnp.float32),
        "b1": 0.1 * jax.random.normal(ks[1], (mid_ch,), jnp.float32),
        "g1": 1.0 + 0.1 * jax.random.normal(ks[2], (mid_ch,), jnp.float32),
        "be1": 0.1 * jax.random.normal(ks[3], (mid_ch,), jnp.float32),
        "w2": 0.1 * jax.random.normal(ks[4], (3, 3, mid_ch, out_ch), jnp.float32),
        "b2": 0.1 * jax.random.normal(ks[5], (out_ch,), jnp.float32),
        "g2": 1.0 + 0.1 * jax.random.normal(ks[6], (out_ch,), jnp.float32),
        "be2": jnp.zeros((out_ch,), jnp.float32),
    }
    x = jax.random.normal(jax.random.PRNGKey(42), (N, in_ch, H, W), jnp.float32)

    out = jax.block_until_ready(conv_block_nested_forward(x, params))
    ref = jax.block_until_ready(ref_forward(x, params))

    assert out.shape == (N, out_ch, H, W)
    assert jnp.allclose(out, ref, atol=1e-4, rtol=1e-4), float(jnp.max(jnp.abs(out - ref)))
    print("KERNEL_OK")
</pallas_src>

<mosaic_0001>
module attributes {stable_mosaic.version = 11 : i64} {
  func.func @fused_conv_kernel(%arg0: i32, %arg1: memref<1x16x16x128xf32, #tpu.memory_space<vmem>>, %arg2: memref<1x128xf32, #tpu.memory_space<vmem>>, %arg3: memref<1x128xf32, #tpu.memory_space<vmem>>, %arg4: memref<1152x128xf32, #tpu.memory_space<vmem>>, %arg5: memref<1x16x16x128xf32, #tpu.memory_space<vmem>>, %arg6: memref<1x128xf32, #tpu.memory_space<vmem>>, %arg7: memref<1x128xf32, #tpu.memory_space<vmem>>, %arg8: memref<18x18x128xf32, #tpu.memory_space<vmem>>, %arg9: memref<256x1152xf32, #tpu.memory_space<vmem>>) attributes {dimension_semantics = [#tpu.dimension_semantics<arbitrary>], iteration_bounds = array<i64: 2>, scalar_prefetch = 0 : i64, scratch_operands = 2 : i64, tpu.core_type = #tpu.core_type<tc>, window_params = [{transform_indices = @transform_0, window_bounds = array<i64: 1, 16, 16, 128>}, {pipeline_mode = #tpu.pipeline_mode<synchronous>, transform_indices = @transform_1, window_bounds = array<i64: 1, 128>}, {pipeline_mode = #tpu.pipeline_mode<synchronous>, transform_indices = @transform_2, window_bounds = array<i64: 1, 128>}, {pipeline_mode = #tpu.pipeline_mode<synchronous>, transform_indices = @transform_3, window_bounds = array<i64: 1152, 128>}, {transform_indices = @transform_4, window_bounds = array<i64: 1, 16, 16, 128>}, {pipeline_mode = #tpu.pipeline_mode<synchronous>, transform_indices = @transform_5, window_bounds = array<i64: 1, 128>}, {pipeline_mode = #tpu.pipeline_mode<synchronous>, transform_indices = @transform_6, window_bounds = array<i64: 1, 128>}]} {
    %c0 = arith.constant 0 : index
    %c0_0 = arith.constant 0 : index
    %c0_1 = arith.constant 0 : index
    %c0_2 = arith.constant 0 : index
    %0 = vector.load %arg1[%c0, %c0_0, %c0_1, %c0_2] : memref<1x16x16x128xf32, #tpu.memory_space<vmem>>, vector<1x16x16x128xf32>
    %1 = vector.shape_cast %0 : vector<1x16x16x128xf32> to vector<16x16x128xf32>
    %cst = arith.constant 0.000000e+00 : f32
    %2 = vector.broadcast %cst : f32 to vector<18x18x128xf32>
    %c0_3 = arith.constant 0 : index
    %c0_4 = arith.constant 0 : index
    %c0_5 = arith.constant 0 : index
    %3 = vector.load %arg8[%c0_3, %c0_4, %c0_5] : memref<18x18x128xf32, #tpu.memory_space<vmem>>, vector<18x18x128xf32>
    tpu.vector_store %arg8[%c0_3, %c0_4, %c0_5], %2 {strides = array<i32>} : memref<18x18x128xf32, #tpu.memory_space<vmem>>, vector<18x18x128xf32>,
    %c1 = arith.constant 1 : index
    %c1_6 = arith.constant 1 : index
    %c0_7 = arith.constant 0 : index
    %4 = vector.load %arg8[%c1, %c1_6, %c0_7] : memref<18x18x128xf32, #tpu.memory_space<vmem>>, vector<16x16x128xf32>
    tpu.vector_store %arg8[%c1, %c1_6, %c0_7], %1 {strides = array<i32>} : memref<18x18x128xf32, #tpu.memory_space<vmem>>, vector<16x16x128xf32>,
    %c0_8 = arith.constant 0 : index
    %c0_9 = arith.constant 0 : index
    %c0_10 = arith.constant 0 : index
    %5 = vector.load %arg8[%c0_8, %c0_9, %c0_10] : memref<18x18x128xf32, #tpu.memory_space<vmem>>, vector<18x18x128xf32>
    %6 = vector.extract_strided_slice %5 {offsets = [0, 0, 0], sizes = [16, 16, 128], strides = [1, 1, 1]} : vector<18x18x128xf32> to vector<16x16x128xf32>
    %7 = vector.shape_cast %6 : vector<16x16x128xf32> to vector<256x128xf32>
    %c0_11 = arith.constant 0 : index
    %c0_12 = arith.constant 0 : index
    %8 = vector.load %arg9[%c0_11, %c0_12] : memref<256x1152xf32, #tpu.memory_space<vmem>>, vector<256x128xf32>
    tpu.vector_store %arg9[%c0_11, %c0_12], %7 {strides = array<i32>} : memref<256x1152xf32, #tpu.memory_space<vmem>>, vector<256x128xf32>,
    %9 = vector.extract_strided_slice %5 {offsets = [0, 1, 0], sizes = [16, 16, 128], strides = [1, 1, 1]} : vector<18x18x128xf32> to vector<16x16x128xf32>
    %10 = vector.shape_cast %9 : vector<16x16x128xf32> to vector<256x128xf32>
    %c0_13 = arith.constant 0 : index
    %c128 = arith.constant 128 : index
    %11 = vector.load %arg9[%c0_13, %c128] : memref<256x1152xf32, #tpu.memory_space<vmem>>, vector<256x128xf32>
    tpu.vector_store %arg9[%c0_13, %c128], %10 {strides = array<i32>} : memref<256x1152xf32, #tpu.memory_space<vmem>>, vector<256x128xf32>,
    %12 = vector.extract_strided_slice %5 {offsets = [0, 2, 0], sizes = [16, 16, 128], strides = [1, 1, 1]} : vector<18x18x128xf32> to vector<16x16x128xf32>
    %13 = vector.shape_cast %12 : vector<16x16x128xf32> to vector<256x128xf32>
    %c0_14 = arith.constant 0 : index
    %c256 = arith.constant 256 : index
    %14 = vector.load %arg9[%c0_14, %c256] : memref<256x1152xf32, #tpu.memory_space<vmem>>, vector<256x128xf32>
    tpu.vector_store %arg9[%c0_14, %c256], %13 {strides = array<i32>} : memref<256x1152xf32, #tpu.memory_space<vmem>>, vector<256x128xf32>,
    %15 = vector.extract_strided_slice %5 {offsets = [1, 0, 0], sizes = [16, 16, 128], strides = [1, 1, 1]} : vector<18x18x128xf32> to vector<16x16x128xf32>
    %16 = vector.shape_cast %15 : vector<16x16x128xf32> to vector<256x128xf32>
    %c0_15 = arith.constant 0 : index
    %c384 = arith.constant 384 : index
    %17 = vector.load %arg9[%c0_15, %c384] : memref<256x1152xf32, #tpu.memory_space<vmem>>, vector<256x128xf32>
    tpu.vector_store %arg9[%c0_15, %c384], %16 {strides = array<i32>} : memref<256x1152xf32, #tpu.memory_space<vmem>>, vector<256x128xf32>,
    %18 = vector.extract_strided_slice %5 {offsets = [1, 1, 0], sizes = [16, 16, 128], strides = [1, 1, 1]} : vector<18x18x128xf32> to vector<16x16x128xf32>
    %19 = vector.shape_cast %18 : vector<16x16x128xf32> to vector<256x128xf32>
    %c0_16 = arith.constant 0 : index
    %c512 = arith.constant 512 : index
    %20 = vector.load %arg9[%c0_16, %c512] : memref<256x1152xf32, #tpu.memory_space<vmem>>, vector<256x128xf32>
    tpu.vector_store %arg9[%c0_16, %c512], %19 {strides = array<i32>} : memref<256x1152xf32, #tpu.memory_space<vmem>>, vector<256x128xf32>,
    %21 = vector.extract_strided_slice %5 {offsets = [1, 2, 0], sizes = [16, 16, 128], strides = [1, 1, 1]} : vector<18x18x128xf32> to vector<16x16x128xf32>
    %22 = vector.shape_cast %21 : vector<16x16x128xf32> to vector<256x128xf32>
    %c0_17 = arith.constant 0 : index
    %c640 = arith.constant 640 : index
    %23 = vector.load %arg9[%c0_17, %c640] : memref<256x1152xf32, #tpu.memory_space<vmem>>, vector<256x128xf32>
    tpu.vector_store %arg9[%c0_17, %c640], %22 {strides = array<i32>} : memref<256x1152xf32, #tpu.memory_space<vmem>>, vector<256x128xf32>,
    %24 = vector.extract_strided_slice %5 {offsets = [2, 0, 0], sizes = [16, 16, 128], strides = [1, 1, 1]} : vector<18x18x128xf32> to vector<16x16x128xf32>
    %25 = vector.shape_cast %24 : vector<16x16x128xf32> to vector<256x128xf32>
    %c0_18 = arith.constant 0 : index
    %c768 = arith.constant 768 : index
    %26 = vector.load %arg9[%c0_18, %c768] : memref<256x1152xf32, #tpu.memory_space<vmem>>, vector<256x128xf32>
    tpu.vector_store %arg9[%c0_18, %c768], %25 {strides = array<i32>} : memref<256x1152xf32, #tpu.memory_space<vmem>>, vector<256x128xf32>,
    %27 = vector.extract_strided_slice %5 {offsets = [2, 1, 0], sizes = [16, 16, 128], strides = [1, 1, 1]} : vector<18x18x128xf32> to vector<16x16x128xf32>
    %28 = vector.shape_cast %27 : vector<16x16x128xf32> to vector<256x128xf32>
    %c0_19 = arith.constant 0 : index
    %c896 = arith.constant 896 : index
    %29 = vector.load %arg9[%c0_19, %c896] : memref<256x1152xf32, #tpu.memory_space<vmem>>, vector<256x128xf32>
    tpu.vector_store %arg9[%c0_19, %c896], %28 {strides = array<i32>} : memref<256x1152xf32, #tpu.memory_space<vmem>>, vector<256x128xf32>,
    %30 = vector.extract_strided_slice %5 {offsets = [2, 2, 0], sizes = [16, 16, 128], strides = [1, 1, 1]} : vector<18x18x128xf32> to vector<16x16x128xf32>
    %31 = vector.shape_cast %30 : vector<16x16x128xf32> to vector<256x128xf32>
    %c0_20 = arith.constant 0 : index
    %c1024 = arith.constant 1024 : index
    %32 = vector.load %arg9[%c0_20, %c1024] : memref<256x1152xf32, #tpu.memory_space<vmem>>, vector<256x128xf32>
    tpu.vector_store %arg9[%c0_20, %c1024], %31 {strides = array<i32>} : memref<256x1152xf32, #tpu.memory_space<vmem>>, vector<256x128xf32>,
    %c0_21 = arith.constant 0 : index
    %c0_22 = arith.constant 0 : index
    %33 = vector.load %arg9[%c0_21, %c0_22] : memref<256x1152xf32, #tpu.memory_space<vmem>>, vector<256x1152xf32>
    %c0_23 = arith.constant 0 : index
    %c0_24 = arith.constant 0 : index
    %34 = vector.load %arg4[%c0_23, %c0_24] : memref<1152x128xf32, #tpu.memory_space<vmem>>, vector<1152x128xf32>
    %cst_25 = arith.constant dense<0.000000e+00> : vector<256x128xf32>
    %35 = tpu.matmul %33, %34, %cst_25 {dimension_numbers = #tpu.dot_dimension_numbers<[1], [0], [0], [1], [0, 0, 1, 1], [], []>} : vector<256x1152xf32>, vector<1152x128xf32>, vector<256x128xf32> -> vector<256x128xf32>
    %36 = vector.shape_cast %35 : vector<256x128xf32> to vector<1x16x16x128xf32>
    %c0_26 = arith.constant 0 : index
    %c0_27 = arith.constant 0 : index
    %c0_28 = arith.constant 0 : index
    %c0_29 = arith.constant 0 : index
    %37 = vector.load %arg5[%c0_26, %c0_27, %c0_28, %c0_29] : memref<1x16x16x128xf32, #tpu.memory_space<vmem>>, vector<1x16x16x128xf32>
    tpu.vector_store %arg5[%c0_26, %c0_27, %c0_28, %c0_29], %36 {strides = array<i32>} : memref<1x16x16x128xf32, #tpu.memory_space<vmem>>, vector<1x16x16x128xf32>,
    %c0_i32 = arith.constant 0 : i32
    %38 = arith.cmpi eq, %arg0, %c0_i32 : i32
    %39 = arith.extui %38 : i1 to i32
    %c0_i32_30 = arith.constant 0 : i32
    %40 = arith.cmpi ne, %39, %c0_i32_30 : i32
    scf.if %40 {
      %cst_41 = arith.constant 0.000000e+00 : f32
      %52 = vector.broadcast %cst_41 : f32 to vector<1x128xf32>
      %c0_42 = arith.constant 0 : index
      %c0_43 = arith.constant 0 : index
      %53 = vector.load %arg6[%c0_42, %c0_43] : memref<1x128xf32, #tpu.memory_space<vmem>>, vector<1x128xf32>
      tpu.vector_store %arg6[%c0_42, %c0_43], %52 {strides = array<i32>} : memref<1x128xf32, #tpu.memory_space<vmem>>, vector<1x128xf32>,
      %cst_44 = arith.constant 0.000000e+00 : f32
      %54 = vector.broadcast %cst_44 : f32 to vector<1x128xf32>
      %c0_45 = arith.constant 0 : index
      %c0_46 = arith.constant 0 : index
      %55 = vector.load %arg7[%c0_45, %c0_46] : memref<1x128xf32, #tpu.memory_space<vmem>>, vector<1x128xf32>
      tpu.vector_store %arg7[%c0_45, %c0_46], %54 {strides = array<i32>} : memref<1x128xf32, #tpu.memory_space<vmem>>, vector<1x128xf32>,
    } else {
    }
    %c0_31 = arith.constant 0 : index
    %c0_32 = arith.constant 0 : index
    %41 = vector.load %arg6[%c0_31, %c0_32] : memref<1x128xf32, #tpu.memory_space<vmem>>, vector<1x128xf32>
    %cst_33 = arith.constant dense<0.000000e+00> : vector<128xf32>
    %42 = vector.multi_reduction <add>, %35, %cst_33 [0] : vector<256x128xf32> to vector<128xf32>
    %43 = vector.shape_cast %42 : vector<128xf32> to vector<1x128xf32>
    %44 = arith.addf %41, %43 : vector<1x128xf32>
    %c0_34 = arith.constant 0 : index
    %c0_35 = arith.constant 0 : index
    %45 = vector.load %arg6[%c0_34, %c0_35] : memref<1x128xf32, #tpu.memory_space<vmem>>, vector<1x128xf32>
    tpu.vector_store %arg6[%c0_34, %c0_35], %44 {strides = array<i32>} : memref<1x128xf32, #tpu.memory_space<vmem>>, vector<1x128xf32>,
    %c0_36 = arith.constant 0 : index
    %c0_37 = arith.constant 0 : index
    %46 = vector.load %arg7[%c0_36, %c0_37] : memref<1x128xf32, #tpu.memory_space<vmem>>, vector<1x128xf32>
    %47 = arith.mulf %35, %35 : vector<256x128xf32>
    %cst_38 = arith.constant dense<0.000000e+00> : vector<128xf32>
    %48 = vector.multi_reduction <add>, %47, %cst_38 [0] : vector<256x128xf32> to vector<128xf32>
    %49 = vector.shape_cast %48 : vector<128xf32> to vector<1x128xf32>
    %50 = arith.addf %46, %49 : vector<1x128xf32>
    %c0_39 = arith.constant 0 : index
    %c0_40 = arith.constant 0 : index
    %51 = vector.load %arg7[%c0_39, %c0_40] : memref<1x128xf32, #tpu.memory_space<vmem>>, vector<1x128xf32>
    tpu.vector_store %arg7[%c0_39, %c0_40], %50 {strides = array<i32>} : memref<1x128xf32, #tpu.memory_space<vmem>>, vector<1x128xf32>,
    return
  }
  func.func @transform_0(%arg0: i32) -> (i32, i32, i32, i32) {
    %c0_i32 = arith.constant 0 : i32
    %c0_i32_0 = arith.constant 0 : i32
    %c0_i32_1 = arith.constant 0 : i32
    %c0_i32_2 = arith.constant 0 : i32
    return %arg0, %c0_i32, %c0_i32_0, %c0_i32_1 : i32, i32, i32, i32
  }
  func.func @transform_1(%arg0: i32) -> (i32, i32) {
    %c0_i32 = arith.constant 0 : i32
    %c0_i32_0 = arith.constant 0 : i32
    %c0_i32_1 = arith.constant 0 : i32
    return %c0_i32, %c0_i32_0 : i32, i32
  }
  func.func @transform_2(%arg0: i32) -> (i32, i32) {
    %c0_i32 = arith.constant 0 : i32
    %c0_i32_0 = arith.constant 0 : i32
    %c0_i32_1 = arith.constant 0 : i32
    return %c0_i32, %c0_i32_0 : i32, i32
  }
  func.func @transform_3(%arg0: i32) -> (i32, i32) {
    %c0_i32 = arith.constant 0 : i32
    %c0_i32_0 = arith.constant 0 : i32
    %c0_i32_1 = arith.constant 0 : i32
    return %c0_i32, %c0_i32_0 : i32, i32
  }
  func.func @transform_4(%arg0: i32) -> (i32, i32, i32, i32) {
    %c0_i32 = arith.constant 0 : i32
    %c0_i32_0 = arith.constant 0 : i32
    %c0_i32_1 = arith.constant 0 : i32
    %c0_i32_2 = arith.constant 0 : i32
    return %arg0, %c0_i32, %c0_i32_0, %c0_i32_1 : i32, i32, i32, i32
  }
  func.func @transform_5(%arg0: i32) -> (i32, i32) {
    %c0_i32 = arith.constant 0 : i32
    %c0_i32_0 = arith.constant 0 : i32
    %c0_i32_1 = arith.constant 0 : i32
    return %c0_i32, %c0_i32_0 : i32, i32
  }
  func.func @transform_6(%arg0: i32) -> (i32, i32) {
    %c0_i32 = arith.constant 0 : i32
    %c0_i32_0 = arith.constant 0 : i32
    %c0_i32_1 = arith.constant 0 : i32
    return %c0_i32, %c0_i32_0 : i32, i32
  }
}

</mosaic_0001>

<llo_original>
// kernel: tpu_custom_call.1
$region0: #{tpu_custom_call.1}
  #allocation0 [shape = 'u32[]', space=smem, size = 0x4, offset = 0x4, fixed_abs, tag = 'smem constant byte address 0x4 - core index']
  #allocation1 [shape = 'u32[144,128]{1,0:T(1,128)}', space=vmem, size = 0x12000, scoped, tag = 'internal scratch']
  #allocation2 [shape = 'f32[18,18,128]{2,1,0:T(8,128)}', space=vmem, size = 0x36000, scoped, tag = 'scratch operand']
  #allocation3 [shape = 'f32[256,1152]{1,0:T(8,128)}', space=vmem, size = 0x120000, scoped, tag = 'scratch operand']
  %s0 = inlined_call_operand.hbm [shape: f32[2,16,16,128], index: 0, kind: input, shape index: {}]
  %s1 = inlined_call_operand.vmem [shape: f32[1,128], index: 1, kind: input, shape index: {}]
  %s2 = inlined_call_operand.vmem [shape: f32[1,128], index: 2, kind: input, shape index: {}]
  %s3 = inlined_call_operand.hbm [shape: f32[1152,128], index: 3, kind: input, shape index: {}]
  %s4 = inlined_call_operand.hbm [shape: f32[2,16,16,128], index: 4, kind: output, shape index: {0}]
  %s5 = inlined_call_operand.hbm [shape: f32[1,128], index: 5, kind: output, shape index: {1}]
  %s6 = inlined_call_operand.hbm [shape: f32[1,128], index: 6, kind: output, shape index: {2}]
  %7 = xla_tuple %s4, %s5, %s6
  %s8 = sld [smem:[#allocation0]]
  $region77: #{tpu_custom_call.1} parent=0
    _
  %s10 = ssub.s32 1, %s8
  %s11 = scalar_select 0, %s10, %s8
  $region1: #{tpu_custom_call.1} parent=0
    #allocation4 [shape = 'u8[262144]{0}', space=vmem, size = 0x40000, scoped, tag = 'input window, operand 0']
    #allocation5 [shape = 's32[2]{0}', space=sflag, size = 0x8, scoped, tag = 'scoped memory for tpu_custom_call.1']
    #allocation6 [shape = 's32[2]{0}', space=sflag, size = 0x8, scoped, tag = 'scoped memory for tpu_custom_call.1']
    #allocation7 [shape = 'u8[589824]{0}', space=vmem, size = 0x90000, scoped, tag = 'input window, operand 3, single buffered']
    #allocation8 [shape = 's32[1]{0}', space=sflag, size = 0x4, scoped, tag = 'scoped memory for tpu_custom_call.1']
    #allocation9 [shape = 'u8[262144]{0}', space=vmem, size = 0x40000, scoped, tag = 'output window, operand 0']
    #allocation10 [shape = 'u8[512]{0}', space=vmem, size = 0x400, scoped, tag = 'output window, operand 1, single buffered']
    #allocation11 [shape = 's32[1]{0}', space=sflag, size = 0x4, scoped, tag = 'scoped memory for tpu_custom_call.1']
    #allocation12 [shape = 'u8[512]{0}', space=vmem, size = 0x400, scoped, tag = 'output window, operand 2, single buffered']
    %12 = vsyncpa [#allocation5], 0
    %s13 = scalar_lea.sflag [#allocation5], 1
    %14 = vsyncpa %s13, 0
    %15 = vsyncpa [#allocation8], 0
    %16 = vsyncpa [#allocation6], 0
    %s17 = scalar_lea.sflag [#allocation6], 1
    %18 = vsyncpa %s17, 0
    %19 = vsyncpa [#allocation11], 0
    loop: start=0, step=1, limit=4
    $region2: #{tpu_custom_call.1} parent=1 // loop_pre_header
      _
    $region3: #{tpu_custom_call.1} parent=1 // loop_header
      %s21 = sphi 0, %s25
      %p22 = scmp.ge.s32.totalorder %s21, 4
      %s31 = sphi 0, %s33
      %s34 = sphi 0, %s31
      %s35 = sphi 0, %s34
      %s51 = sphi 0, %s35
      %s55 = sphi 0, %s55
      %s57 = sphi 0, %s55
      %s58 = sphi 0, %s57
      %s72 = sphi 0, %s58
      %s76 = sphi 0, %s76
      %s78 = sphi 0, %s76
      %s79 = sphi 0, %s78
      %s93 = sphi 0, %s79
      %s97 = sphi 0, %s97
      %s99 = sphi 0, %s97
      %s100 = sphi 0, %s99
      %s114 = sphi 0, %s100
      %s120 = sphi 0, %s122
      %s123 = sphi 0, %s120
      %s124 = sphi 0, %s123
      %s140 = sphi 0, %s124
      %s144 = sphi 0, %s144
      %s146 = sphi 0, %s144
      %s147 = sphi 0, %s146
      %s161 = sphi 0, %s147
      %s165 = sphi 0, %s165
      %s167 = sphi 0, %s165
      %s168 = sphi 0, %s167
      %s182 = sphi 0, %s168
    $region4: #{tpu_custom_call.1} parent=1 // loop_header_branch
      %24 = sbr.rel (%p22) target = $region8
    $region5: #{tpu_custom_call.1} parent=1 // loop_body
      %s26 = ssub.s32 %s21, 1
      %s27 = ssub.s32 %s21, 2
      %s28 = sadd.s32 %s21, 1
      %s29 = ssub.s32 %s21, %s28
      %p30 = scmp.eq.s32.totalorder %s29, 0
      %s32 = sadd.s32 %s31, 1
      %s33 = scalar_select %p30, %s31, %s32
      %p36 = pneg %p30
      %p37 = scmp.eq.s32.totalorder %s21, 1
      %p38 = por %p36, %p37
      %p39 = scmp.ne.s32.totalorder %s31, %s34
      %p40 = scmp.eq.s32.totalorder %s21, 0
      %p41 = por %p39, %p40
      %p42 = scmp.ne.s32.totalorder %s31, %s34
      %p43 = scmp.eq.s32.totalorder %s26, 1
      %p44 = por %p42, %p43
      %p45 = scmp.ne.s32.totalorder %s34, %s35
      %p46 = scmp.eq.s32.totalorder %s26, 0
      %p47 = por %p45, %p46
      %p48 = scmp.ne.s32.totalorder %s34, %s35
      %p49 = scmp.eq.s32.totalorder %s27, 1
      %p50 = por %p48, %p49
      %p52 = scmp.ne.s32.totalorder %s35, %s51
      %p53 = scmp.eq.s32.totalorder %s27, 0
      %p54 = por %p52, %p53
      %s56 = sadd.s32 %s55, 1
      %p59 = scmp.eq.s32.totalorder %s21, 1
      %p60 = scmp.ne.s32.totalorder %s55, %s57
      %p61 = scmp.eq.s32.totalorder %s21, 0
      %p62 = por %p60, %p61
      %p63 = scmp.ne.s32.totalorder %s55, %s57
      %p64 = scmp.eq.s32.totalorder %s26, 1
      %p65 = por %p63, %p64
      %p66 = scmp.ne.s32.totalorder %s57, %s58
      %p67 = scmp.eq.s32.totalorder %s26, 0
      %p68 = por %p66, %p67
      %p69 = scmp.ne.s32.totalorder %s57, %s58
      %p70 = scmp.eq.s32.totalorder %s27, 1
      %p71 = por %p69, %p70
      %p73 = scmp.ne.s32.totalorder %s58, %s72
      %p74 = scmp.eq.s32.totalorder %s27, 0
      %p75 = por %p73, %p74
      %s77 = sadd.s32 %s76, 1
      %p80 = scmp.eq.s32.totalorder %s21, 1
      %p81 = scmp.ne.s32.totalorder %s76, %s78
      %p82 = scmp.eq.s32.totalorder %s21, 0
      %p83 = por %p81, %p82
      %p84 = scmp.ne.s32.totalorder %s76, %s78
      %p85 = scmp.eq.s32.totalorder %s26, 1
      %p86 = por %p84, %p85
      %p87 = scmp.ne.s32.totalorder %s78, %s79
      %p88 = scmp.eq.s32.totalorder %s26, 0
      %p89 = por %p87, %p88
      %p90 = scmp.ne.s32.totalorder %s78, %s79
      %p91 = scmp.eq.s32.totalorder %s27, 1
      %p92 = por %p90, %p91
      %p94 = scmp.ne.s32.totalorder %s79, %s93
      %p95 = scmp.eq.s32.totalorder %s27, 0
      %p96 = por %p94, %p95
      %s98 = sadd.s32 %s97, 1
      %p101 = scmp.eq.s32.totalorder %s21, 1
      %p102 = scmp.ne.s32.totalorder %s97, %s99
      %p103 = scmp.eq.s32.totalorder %s21, 0
      %p104 = por %p102, %p103
      %p105 = scmp.ne.s32.totalorder %s97, %s99
      %p106 = scmp.eq.s32.totalorder %s26, 1
      %p107 = por %p105, %p106
      %p108 = scmp.ne.s32.totalorder %s99, %s100
      %p109 = scmp.eq.s32.totalorder %s26, 0
      %p110 = por %p108, %p109
      %p111 = scmp.ne.s32.totalorder %s99, %s100
      %p112 = scmp.eq.s32.totalorder %s27, 1
      %p113 = por %p111, %p112
      %p115 = scmp.ne.s32.totalorder %s100, %s114
      %p116 = scmp.eq.s32.totalorder %s27, 0
      %p117 = por %p115, %p116
      %s118 = ssub.s32 %s21, %s28
      %p119 = scmp.eq.s32.totalorder %s118, 0
      %s121 = sadd.s32 %s120, 1
      %s122 = scalar_select %p119, %s120, %s121
      %p125 = pneg %p119
      %p126 = scmp.eq.s32.totalorder %s21, 1
      %p127 = por %p125, %p126
      %p128 = scmp.ne.s32.totalorder %s120, %s123
      %p129 = scmp.eq.s32.totalorder %s21, 0
      %p130 = por %p128, %p129
      %p131 = scmp.ne.s32.totalorder %s120, %s123
      %p132 = scmp.eq.s32.totalorder %s26, 1
      %p133 = por %p131, %p132
      %p134 = scmp.ne.s32.totalorder %s123, %s124
      %p135 = scmp.eq.s32.totalorder %s26, 0
      %p136 = por %p134, %p135
      %p137 = scmp.ne.s32.totalorder %s123, %s124
      %p138 = scmp.eq.s32.totalorder %s27, 1
      %p139 = por %p137, %p138
      %p141 = scmp.ne.s32.totalorder %s124, %s140
      %p142 = scmp.eq.s32.totalorder %s27, 0
      %p143 = por %p141, %p142
      %s145 = sadd.s32 %s144, 1
      %p148 = scmp.eq.s32.totalorder %s21, 1
      %p149 = scmp.ne.s32.totalorder %s144, %s146
      %p150 = scmp.eq.s32.totalorder %s21, 0
      %p151 = por %p149, %p150
      %p152 = scmp.ne.s32.totalorder %s144, %s146
      %p153 = scmp.eq.s32.totalorder %s26, 1
      %p154 = por %p152, %p153
      %p155 = scmp.ne.s32.totalorder %s146, %s147
      %p156 = scmp.eq.s32.totalorder %s26, 0
      %p157 = por %p155, %p156
      %p158 = scmp.ne.s32.totalorder %s146, %s147
      %p159 = scmp.eq.s32.totalorder %s27, 1
      %p160 = por %p158, %p159
      %p162 = scmp.ne.s32.totalorder %s147, %s161
      %p163 = scmp.eq.s32.totalorder %s27, 0
      %p164 = por %p162, %p163
      %s166 = sadd.s32 %s165, 1
      %p169 = scmp.eq.s32.totalorder %s21, 1
      %p170 = scmp.ne.s32.totalorder %s165, %s167
      %p171 = scmp.eq.s32.totalorder %s21, 0
      %p172 = por %p170, %p171
      %p173 = scmp.ne.s32.totalorder %s165, %s167
      %p174 = scmp.eq.s32.totalorder %s26, 1
      %p175 = por %p173, %p174
      %p176 = scmp.ne.s32.totalorder %s167, %s168
      %p177 = scmp.eq.s32.totalorder %s26, 0
      %p178 = por %p176, %p177
      %p179 = scmp.ne.s32.totalorder %s167, %s168
      %p180 = scmp.eq.s32.totalorder %s27, 1
      %p181 = por %p179, %p180
      %p183 = scmp.ne.s32.totalorder %s168, %s182
      %p184 = scmp.eq.s32.totalorder %s27, 0
      %p185 = por %p183, %p184
      %p186 = scmp.le.s32.totalorder 1, %s21
      %p187 = scmp.lt.s32.totalorder %s21, 3
      %p188 = pnand %p186, %p187
      %p189 = pneg %p188
      // Predicated region
      $region9: #{tpu_custom_call.1} parent=5 // pred_check
        _
      $region10: #{tpu_custom_call.1} parent=5 // pred_check_branch
        %191 = sbr.rel (%p188) target = $region12
      $region11: #{tpu_custom_call.1} parent=5 // pred_region
        %s192 = ssub.s32 %s21, 1
        // Predicated region
        $region13: #{tpu_custom_call.1} parent=11 // pred_check
          %p193 = pneg %p68
        $region14: #{tpu_custom_call.1} parent=11 // pred_check_branch
          %195 = sbr.rel (%p193) target = $region16
        $region15: #{tpu_custom_call.1} parent=11 // pred_region
          _
        $region16: #{tpu_custom_call.1} parent=11 // pred_fallthru
          _
        // Predicated region
        $region17: #{tpu_custom_call.1} parent=11 // pred_check
          %p196 = pneg %p89
        $region18: #{tpu_custom_call.1} parent=11 // pred_check_branch
          %198 = sbr.rel (%p196) target = $region20
        $region19: #{tpu_custom_call.1} parent=11 // pred_region
          _
        $region20: #{tpu_custom_call.1} parent=11 // pred_fallthru
          _
        // Predicated region
        $region21: #{tpu_custom_call.1} parent=11 // pred_check
          %p199 = pneg %p110
        $region22: #{tpu_custom_call.1} parent=11 // pred_check_branch
          %201 = sbr.rel (%p199) target = $region24
        $region23: #{tpu_custom_call.1} parent=11 // pred_region
          %s203 = ssub.s32 18432, 18432
          %204 = vsyncadd [#allocation8], %s203
          %s205 = sshll.u32 [#allocation7], 4
          %s206 = int_to_ptr.vmem [resolvable:$true] %s205
          %211 = dma.hbm_to_vmem [thread:$0]  %s3, 18432, %s206, [#allocation8], 128, 128, 8
        $region24: #{tpu_custom_call.1} parent=11 // pred_fallthru
          _
      $region12: #{tpu_custom_call.1} parent=5 // pred_fallthru
        _
      %p212 = scmp.lt.s32.totalorder %s21, 2
      // Predicated region
      $region25: #{tpu_custom_call.1} parent=5 // pred_check
        %p213 = pneg %p212
      $region26: #{tpu_custom_call.1} parent=5 // pred_check_branch
        %215 = sbr.rel (%p213) target = $region28
      $region27: #{tpu_custom_call.1} parent=5 // pred_region
        // Predicated region
        $region29: #{tpu_custom_call.1} parent=27 // pred_check
          %p216 = pneg %p41
        $region30: #{tpu_custom_call.1} parent=27 // pred_check_branch
          %218 = sbr.rel (%p216) target = $region32
        $region31: #{tpu_custom_call.1} parent=27 // pred_region
          %s219 = sand.u32 %s31, 1
          %s220 = scalar_lea.sflag [#allocation5], %s219
          %s221 = sand.u32 %s31, 1
          %s222 = smul.addr %s221, 256
          %s223 = scalar_lea.vmem [#allocation4], %s222
          %s225 = ssub.s32 4096, 4096
          %226 = vsyncadd %s220, %s225
          %s227 = smul.addr %s21, 32
          %s228 = smul.addr %s227, 128
          %s229 = scalar_lea.hbm %s0, %s228
          %s230 = sshll.u32 %s223, 4
          %s231 = int_to_ptr.vmem [resolvable:$true] %s230
          %236 = dma.hbm_to_vmem [thread:$0]  %s229, 4096, %s231, %s220, 128, 128, 8
        $region32: #{tpu_custom_call.1} parent=27 // pred_fallthru
          _
      $region28: #{tpu_custom_call.1} parent=5 // pred_fallthru
        _
      %p237 = scmp.le.s32.totalorder 1, %s21
      %p238 = scmp.lt.s32.totalorder %s21, 3
      %p239 = pnand %p237, %p238
      %p240 = pneg %p239
      // Predicated region
      $region33: #{tpu_custom_call.1} parent=5 // pred_check
        _
      $region34: #{tpu_custom_call.1} parent=5 // pred_check_branch
        %242 = sbr.rel (%p239) target = $region36
      $region35: #{tpu_custom_call.1} parent=5 // pred_region
        %s243 = ssub.s32 %s21, 1
        %s244 = sand.u32 %s34, 1
        %s245 = scalar_lea.sflag [#allocation5], %s244
        %s246 = sand.u32 %s34, 1
        %s247 = smul.addr %s246, 256
        %s248 = scalar_lea.vmem [#allocation4], %s247
        // Predicated region
        $region37: #{tpu_custom_call.1} parent=35 // pred_check
          %p249 = pneg %p47
        $region38: #{tpu_custom_call.1} parent=35 // pred_check_branch
          %251 = sbr.rel (%p249) target = $region40
        $region39: #{tpu_custom_call.1} parent=35 // pred_region
          %252 = dma.done %s245, 4096
        $region40: #{tpu_custom_call.1} parent=35 // pred_fallthru
          _
        // Predicated region
        $region41: #{tpu_custom_call.1} parent=35 // pred_check
          %p253 = pneg %p110
        $region42: #{tpu_custom_call.1} parent=35 // pred_check_branch
          %255 = sbr.rel (%p253) target = $region44
        $region43: #{tpu_custom_call.1} parent=35 // pred_region
          %256 = dma.done [#allocation8], 18432
        $region44: #{tpu_custom_call.1} parent=35 // pred_fallthru
          _
        %s257 = sand.u32 %s34, 1
        %s258 = scalar_lea.sflag [#allocation5], %s257
        %s259 = sand.u32 %s34, 1
        %s260 = smul.addr %s259, 256
        %s261 = scalar_lea.vmem [#allocation4], %s260
        %p262 = pneg %p47
        %p263 = pneg %p44
        %p264 = pneg %p68
        %p265 = pneg %p65
        %p266 = pneg %p89
        %p267 = pneg %p86
        %p268 = pneg %p110
        %p269 = pneg %p107
        %p270 = pneg %p136
        %p271 = pneg %p133
        %s272 = sand.u32 %s123, 1
        %s273 = scalar_lea.sflag [#allocation6], %s272
        %s274 = sand.u32 %s123, 1
        %s275 = smul.addr %s274, 256
        %s276 = scalar_lea.vmem [#allocation9], %s275
        %p277 = pneg %p157
        %p278 = pneg %p154
        %p279 = pneg %p178
        %p280 = pneg %p175
        %v281 = vld [vmem:[%s248] sm:$0xff]
        %v282 = vld [vmem:[%s248 + $0x8] sm:$0xff]
        %v283 = vld [vmem:[%s248 + $0x10] sm:$0xff]
        %v284 = vld [vmem:[%s248 + $0x18] sm:$0xff]
        %v285 = vld [vmem:[%s248 + $0x20] sm:$0xff]
        %v286 = vld [vmem:[%s248 + $0x28] sm:$0xff]
        %v287 = vld [vmem:[%s248 + $0x30] sm:$0xff]
        %v288 = vld [vmem:[%s248 + $0x38] sm:$0xff]
        %v289 = vld [vmem:[%s248 + $0x40] sm:$0xff]
        %v290 = vld [vmem:[%s248 + $0x48] sm:$0xff]
        %v291 = vld [vmem:[%s248 + $0x50] sm:$0xff]
        %v292 = vld [vmem:[%s248 + $0x58] sm:$0xff]
        %v293 = vld [vmem:[%s248 + $0x60] sm:$0xff]
        %v294 = vld [vmem:[%s248 + $0x68] sm:$0xff]
        %v295 = vld [vmem:[%s248 + $0x70] sm:$0xff]
        %v296 = vld [vmem:[%s248 + $0x78] sm:$0xff]
        %v297 = vld [vmem:[%s248 + $0x80] sm:$0xff]
        %v298 = vld [vmem:[%s248 + $0x88] sm:$0xff]
        %v299 = vld [vmem:[%s248 + $0x90] sm:$0xff]
        %v300 = vld [vmem:[%s248 + $0x98] sm:$0xff]
        %v301 = vld [vmem:[%s248 + $0xa0] sm:$0xff]
        %v302 = vld [vmem:[%s248 + $0xa8] sm:$0xff]
        %v303 = vld [vmem:[%s248 + $0xb0] sm:$0xff]
        %v304 = vld [vmem:[%s248 + $0xb8] sm:$0xff]
        %v305 = vld [vmem:[%s248 + $0xc0] sm:$0xff]
        %v306 = vld [vmem:[%s248 + $0xc8] sm:$0xff]
        %v307 = vld [vmem:[%s248 + $0xd0] sm:$0xff]
        %v308 = vld [vmem:[%s248 + $0xd8] sm:$0xff]
        %v309 = vld [vmem:[%s248 + $0xe0] sm:$0xff]
        %v310 = vld [vmem:[%s248 + $0xe8] sm:$0xff]
        %v311 = vld [vmem:[%s248 + $0xf0] sm:$0xff]
        %v312 = vld [vmem:[%s248 + $0xf8] sm:$0xff]
        %313 = vst [vmem:[#allocation2] sm:$0xff] 0.0
        %314 = vst [vmem:[#allocation2 + $0x8] sm:$0xff] 0.0
        %315 = vst [vmem:[#allocation2 + $0x10] sm:$0x3] 0.0
        %316 = vst [vmem:[#allocation2 + $0x18] sm:$0xff] 0.0
        %317 = vst [vmem:[#allocation2 + $0x20] sm:$0xff] 0.0
        %318 = vst [vmem:[#allocation2 + $0x28] sm:$0x3] 0.0
        %319 = vst [vmem:[#allocation2 + $0x30] sm:$0xff] 0.0
        %320 = vst [vmem:[#allocation2 + $0x38] sm:$0xff] 0.0
        %321 = vst [vmem:[#allocation2 + $0x40] sm:$0x3] 0.0
        %322 = vst [vmem:[#allocation2 + $0x48] sm:$0xff] 0.0
        %323 = vst [vmem:[#allocation2 + $0x50] sm:$0xff] 0.0
        %324 = vst [vmem:[#allocation2 + $0x58] sm:$0x3] 0.0
        %325 = vst [vmem:[#allocation2 + $0x60] sm:$0xff] 0.0
        %326 = vst [vmem:[#allocation2 + $0x68] sm:$0xff] 0.0
        %327 = vst [vmem:[#allocation2 + $0x70] sm:$0x3] 0.0
        %328 = vst [vmem:[#allocation2 + $0x78] sm:$0xff] 0.0
        %329 = vst [vmem:[#allocation2 + $0x80] sm:$0xff] 0.0
        %330 = vst [vmem:[#allocation2 + $0x88] sm:$0x3] 0.0
        %331 = vst [vmem:[#allocation2 + $0x90] sm:$0xff] 0.0
        %332 = vst [vmem:[#allocation2 + $0x98] sm:$0xff] 0.0
        %333 = vst [vmem:[#allocation2 + $0xa0] sm:$0x3] 0.0
        %334 = vst [vmem:[#allocation2 + $0xa8] sm:$0xff] 0.0
        %335 = vst [vmem:[#allocation2 + $0xb0] sm:$0xff] 0.0
        %336 = vst [vmem:[#allocation2 + $0xb8] sm:$0x3] 0.0
        %337 = vst [vmem:[#allocation2 + $0xc0] sm:$0xff] 0.0
        %338 = vst [vmem:[#allocation2 + $0xc8] sm:$0xff] 0.0
        %339 = vst [vmem:[#allocation2 + $0xd0] sm:$0x3] 0.0
        %340 = vst [vmem:[#allocation2 + $0xd8] sm:$0xff] 0.0
        %341 = vst [vmem:[#allocation2 + $0xe0] sm:$0xff] 0.0
        %342 = vst [vmem:[#allocation2 + $0xe8] sm:$0x3] 0.0
        %343 = vst [vmem:[#allocation2 + $0xf0] sm:$0xff] 0.0
        %344 = vst [vmem:[#allocation2 + $0xf8] sm:$0xff] 0.0
        %345 = vst [vmem:[#allocation2 + $0x100] sm:$0x3] 0.0
        %346 = vst [vmem:[#allocation2 + $0x108] sm:$0xff] 0.0
        %347 = vst [vmem:[#allocation2 + $0x110] sm:$0xff] 0.0
        %348 = vst [vmem:[#allocation2 + $0x118] sm:$0x3] 0.0
        %349 = vst [vmem:[#allocation2 + $0x120] sm:$0xff] 0.0
        %350 = vst [vmem:[#allocation2 + $0x128] sm:$0xff] 0.0
        %351 = vst [vmem:[#allocation2 + $0x130] sm:$0x3] 0.0
        %352 = vst [vmem:[#allocation2 + $0x138] sm:$0xff] 0.0
        %353 = vst [vmem:[#allocation2 + $0x140] sm:$0xff] 0.0
        %354 = vst [vmem:[#allocation2 + $0x148] sm:$0x3] 0.0
        %355 = vst [vmem:[#allocation2 + $0x150] sm:$0xff] 0.0
        %356 = vst [vmem:[#allocation2 + $0x158] sm:$0xff] 0.0
        %357 = vst [vmem:[#allocation2 + $0x160] sm:$0x3] 0.0
        %358 = vst [vmem:[#allocation2 + $0x168] sm:$0xff] 0.0
        %359 = vst [vmem:[#allocation2 + $0x170] sm:$0xff] 0.0
        %360 = vst [vmem:[#allocation2 + $0x178] sm:$0x3] 0.0
        %361 = vst [vmem:[#allocation2 + $0x180] sm:$0xff] 0.0
        %362 = vst [vmem:[#allocation2 + $0x188] sm:$0xff] 0.0
        %363 = vst [vmem:[#allocation2 + $0x190] sm:$0x3] 0.0
        %364 = vst [vmem:[#allocation2 + $0x198] sm:$0xff] 0.0
        %365 = vst [vmem:[#allocation2 + $0x1a0] sm:$0xff] 0.0
        %366 = vst [vmem:[#allocation2 + $0x1a8] sm:$0x3] 0.0
        %s367 = scalar_lea.vmem [#allocation2], 24
        %368 = vst [vmem:[%s367 + $0x1] sm:$0xff] %v281
        %369 = vst [vmem:[%s367 + $0x9] sm:$0xff] %v282
        %370 = vst [vmem:[%s367 + $0x19] sm:$0xff] %v283
        %371 = vst [vmem:[%s367 + $0x21] sm:$0xff] %v284
        %372 = vst [vmem:[%s367 + $0x31] sm:$0xff] %v285
        %373 = vst [vmem:[%s367 + $0x39] sm:$0xff] %v286
        %374 = vst [vmem:[%s367 + $0x49] sm:$0xff] %v287
        %375 = vst [vmem:[%s367 + $0x51] sm:$0xff] %v288
        %376 = vst [vmem:[%s367 + $0x61] sm:$0xff] %v289
        %377 = vst [vmem:[%s367 + $0x69] sm:$0xff] %v290
        %378 = vst [vmem:[%s367 + $0x79] sm:$0xff] %v291
        %379 = vst [vmem:[%s367 + $0x81] sm:$0xff] %v292
        %380 = vst [vmem:[%s367 + $0x91] sm:$0xff] %v293
        %381 = vst [vmem:[%s367 + $0x99] sm:$0xff] %v294
        %382 = vst [vmem:[%s367 + $0xa9] sm:$0xff] %v295
        %383 = vst [vmem:[%s367 + $0xb1] sm:$0xff] %v296
        %384 = vst [vmem:[%s367 + $0xc1] sm:$0xff] %v297
        %385 = vst [vmem:[%s367 + $0xc9] sm:$0xff] %v298
        %386 = vst [vmem:[%s367 + $0xd9] sm:$0xff] %v299
        %387 = vst [vmem:[%s367 + $0xe1] sm:$0xff] %v300
        %388 = vst [vmem:[%s367 + $0xf1] sm:$0xff] %v301
        %389 = vst [vmem:[%s367 + $0xf9] sm:$0xff] %v302
        %390 = vst [vmem:[%s367 + $0x109] sm:$0xff] %v303
        %391 = vst [vmem:[%s367 + $0x111] sm:$0xff] %v304
        %392 = vst [vmem:[%s367 + $0x121] sm:$0xff] %v305
        %393 = vst [vmem:[%s367 + $0x129] sm:$0xff] %v306
        %394 = vst [vmem:[%s367 + $0x139] sm:$0xff] %v307
        %395 = vst [vmem:[%s367 + $0x141] sm:$0xff] %v308
        %396 = vst [vmem:[%s367 + $0x151] sm:$0xff] %v309
        %397 = vst [vmem:[%s367 + $0x159] sm:$0xff] %v310
        %398 = vst [vmem:[%s367 + $0x169] sm:$0xff] %v311
        %399 = vst [vmem:[%s367 + $0x171] sm:$0xff] %v312
        %v400 = vld [vmem:[#allocation2] sm:$0xff]
        %v401 = vld [vmem:[#allocation2 + $0x8] sm:$0xff]
        %v402 = vld [vmem:[#allocation2 + $0x10] sm:$0x3]
        %v403 = vld [vmem:[#allocation2 + $0x18] sm:$0xff]
        %v404 = vld [vmem:[#allocation2 + $0x20] sm:$0xff]
        %v405 = vld [vmem:[#allocation2 + $0x28] sm:$0x3]
        %v406 = vld [vmem:[#allocation2 + $0x30] sm:$0xff]
        %v407 = vld [vmem:[#allocation2 + $0x38] sm:$0xff]
        %v408 = vld [vmem:[#allocation2 + $0x40] sm:$0x3]
        %v409 = vld [vmem:[#allocation2 + $0x48] sm:$0xff]
        %v410 = vld [vmem:[#allocation2 + $0x50] sm:$0xff]
        %v411 = vld [vmem:[#allocation2 + $0x58] sm:$0x3]
        %v412 = vld [vmem:[#allocation2 + $0x60] sm:$0xff]
        %v413 = vld [vmem:[#allocation2 + $0x68] sm:$0xff]
        %v414 = vld [vmem:[#allocation2 + $0x70] sm:$0x3]
        %v415 = vld [vmem:[#allocation2 + $0x78] sm:$0xff]
        %v416 = vld [vmem:[#allocation2 + $0x80] sm:$0xff]
        %v417 = vld [vmem:[#allocation2 + $0x88] sm:$0x3]
        %v418 = vld [vmem:[#allocation2 + $0x90] sm:$0xff]
        %v419 = vld [vmem:[#allocation2 + $0x98] sm:$0xff]
        %v420 = vld [vmem:[#allocation2 + $0xa0] sm:$0x3]
        %v421 = vld [vmem:[#allocation2 + $0xa8] sm:$0xff]
        %v422 = vld [vmem:[#allocation2 + $0xb0] sm:$0xff]
        %v423 = vld [vmem:[#allocation2 + $0xb8] sm:$0x3]
        %v424 = vld [vmem:[#allocation2 + $0xc0] sm:$0xff]
        %v425 = vld [vmem:[#allocation2 + $0xc8] sm:$0xff]
        %v426 = vld [vmem:[#allocation2 + $0xd0] sm:$0x3]
        %v427 = vld [vmem:[#allocation2 + $0xd8] sm:$0xff]
        %v428 = vld [vmem:[#allocation2 + $0xe0] sm:$0xff]
        %v429 = vld [vmem:[#allocation2 + $0xe8] sm:$0x3]
        %v430 = vld [vmem:[#allocation2 + $0xf0] sm:$0xff]
        %v431 = vld [vmem:[#allocation2 + $0xf8] sm:$0xff]
        %v432 = vld [vmem:[#allocation2 + $0x100] sm:$0x3]
        %v433 = vld [vmem:[#allocation2 + $0x108] sm:$0xff]
        %v434 = vld [vmem:[#allocation2 + $0x110] sm:$0xff]
        %v435 = vld [vmem:[#allocation2 + $0x118] sm:$0x3]
        %v436 = vld [vmem:[#allocation2 + $0x120] sm:$0xff]
        %v437 = vld [vmem:[#allocation2 + $0x128] sm:$0xff]
        %v438 = vld [vmem:[#allocation2 + $0x130] sm:$0x3]
        %v439 = vld [vmem:[#allocation2 + $0x138] sm:$0xff]
        %v440 = vld [vmem:[#allocation2 + $0x140] sm:$0xff]
        %v441 = vld [vmem:[#allocation2 + $0x148] sm:$0x3]
        %v442 = vld [vmem:[#allocation2 + $0x150] sm:$0xff]
        %v443 = vld [vmem:[#allocation2 + $0x158] sm:$0xff]
        %v444 = vld [vmem:[#allocation2 + $0x160] sm:$0x3]
        %v445 = vld [vmem:[#allocation2 + $0x168] sm:$0xff]
        %v446 = vld [vmem:[#allocation2 + $0x170] sm:$0xff]
        %v447 = vld [vmem:[#allocation2 + $0x178] sm:$0x3]
        %v448 = vld [vmem:[#allocation2 + $0x180] sm:$0xff]
        %v449 = vld [vmem:[#allocation2 + $0x188] sm:$0xff]
        %v450 = vld [vmem:[#allocation2 + $0x190] sm:$0x3]
        %v451 = vld [vmem:[#allocation2 + $0x198] sm:$0xff]
        %v452 = vld [vmem:[#allocation2 + $0x1a0] sm:$0xff]
        %v453 = vld [vmem:[#allocation2 + $0x1a8] sm:$0x3]
        %454 = vst [vmem:[#allocation3] sm:$0xff] %v400
        %455 = vst [vmem:[#allocation3 + $0x48] sm:$0xff] %v401
        %456 = vst [vmem:[#allocation3 + $0x90] sm:$0xff] %v403
        %457 = vst [vmem:[#allocation3 + $0xd8] sm:$0xff] %v404
        %458 = vst [vmem:[#allocation3 + $0x120] sm:$0xff] %v406
        %459 = vst [vmem:[#allocation3 + $0x168] sm:$0xff] %v407
        %460 = vst [vmem:[#allocation3 + $0x1b0] sm:$0xff] %v409
        %461 = vst [vmem:[#allocation3 + $0x1f8] sm:$0xff] %v410
        %462 = vst [vmem:[#allocation3 + $0x240] sm:$0xff] %v412
        %463 = vst [vmem:[#allocation3 + $0x288] sm:$0xff] %v413
        %464 = vst [vmem:[#allocation3 + $0x2d0] sm:$0xff] %v415
        %465 = vst [vmem:[#allocation3 + $0x318] sm:$0xff] %v416
        %466 = vst [vmem:[#allocation3 + $0x360] sm:$0xff] %v418
        %467 = vst [vmem:[#allocation3 + $0x3a8] sm:$0xff] %v419
        %468 = vst [vmem:[#allocation3 + $0x3f0] sm:$0xff] %v421
        %469 = vst [vmem:[#allocation3 + $0x438] sm:$0xff] %v422
        %470 = vst [vmem:[#allocation3 + $0x480] sm:$0xff] %v424
        %471 = vst [vmem:[#allocation3 + $0x4c8] sm:$0xff] %v425
        %472 = vst [vmem:[#allocation3 + $0x510] sm:$0xff] %v427
        %473 = vst [vmem:[#allocation3 + $0x558] sm:$0xff] %v428
        %474 = vst [vmem:[#allocation3 + $0x5a0] sm:$0xff] %v430
        %475 = vst [vmem:[#allocation3 + $0x5e8] sm:$0xff] %v431
        %476 = vst [vmem:[#allocation3 + $0x630] sm:$0xff] %v433
        %477 = vst [vmem:[#allocation3 + $0x678] sm:$0xff] %v434
        %478 = vst [vmem:[#allocation3 + $0x6c0] sm:$0xff] %v436
        %479 = vst [vmem:[#allocation3 + $0x708] sm:$0xff] %v437
        %480 = vst [vmem:[#allocation3 + $0x750] sm:$0xff] %v439
        %481 = vst [vmem:[#allocation3 + $0x798] sm:$0xff] %v440
        %482 = vst [vmem:[#allocation3 + $0x7e0] sm:$0xff] %v442
        %483 = vst [vmem:[#allocation3 + $0x828] sm:$0xff] %v443
        %484 = vst [vmem:[#allocation3 + $0x870] sm:$0xff] %v445
        %485 = vst [vmem:[#allocation3 + $0x8b8] sm:$0xff] %v446
        %vm534 = vcmask 1046528
        %v535 = vrot.slane %v400, 1
        %v536 = vrot.slane %v401, 1
        %v537 = vsel %vm534, %v535, %v536
        %v538 = vrot.slane %v402, 1
        %v539 = vsel %vm534, %v536, %v538
        %v540 = vrot.slane %v403, 1
        %v541 = vrot.slane %v404, 1
        %v542 = vsel %vm534, %v540, %v541
        %v543 = vrot.slane %v405, 1
        %v544 = vsel %vm534, %v541, %v543
        %v545 = vrot.slane %v406, 1
        %v546 = vrot.slane %v407, 1
        %v547 = vsel %vm534, %v545, %v546
        %v548 = vrot.slane %v408, 1
        %v549 = vsel %vm534, %v546, %v548
        %v550 = vrot.slane %v409, 1
        %v551 = vrot.slane %v410, 1
        %v552 = vsel %vm534, %v550, %v551
        %v553 = vrot.slane %v411, 1
        %v554 = vsel %vm534, %v551, %v553
        %v555 = vrot.slane %v412, 1
        %v556 = vrot.slane %v413, 1
        %v557 = vsel %vm534, %v555, %v556
        %v558 = vrot.slane %v414, 1
        %v559 = vsel %vm534, %v556, %v558
        %v560 = vrot.slane %v415, 1
        %v561 = vrot.slane %v416, 1
        %v562 = vsel %vm534, %v560, %v561
        %v563 = vrot.slane %v417, 1
        %v564 = vsel %vm534, %v561, %v563
        %v565 = vrot.slane %v418, 1
        %v566 = vrot.slane %v419, 1
        %v567 = vsel %vm534, %v565, %v566
        %v568 = vrot.slane %v420, 1
        %v569 = vsel %vm534, %v566, %v568
        %v570 = vrot.slane %v421, 1
        %v571 = vrot.slane %v422, 1
        %v572 = vsel %vm534, %v570, %v571
        %v573 = vrot.slane %v423, 1
        %v574 = vsel %vm534, %v571, %v573
        %v575 = vrot.slane %v424, 1
        %v576 = vrot.slane %v425, 1
        %v577 = vsel %vm534, %v575, %v576
        %v578 = vrot.slane %v426, 1
        %v579 = vsel %vm534, %v576, %v578
        %v580 = vrot.slane %v427, 1
        %v581 = vrot.slane %v428, 1
        %v582 = vsel %vm534, %v580, %v581
        %v583 = vrot.slane %v429, 1
        %v584 = vsel %vm534, %v581, %v583
        %v585 = vrot.slane %v430, 1
        %v586 = vrot.slane %v431, 1
        %v587 = vsel %vm534, %v585, %v586
        %v588 = vrot.slane %v432, 1
        %v589 = vsel %vm534, %v586, %v588
        %v590 = vrot.slane %v433, 1
        %v591 = vrot.slane %v434, 1
        %v592 = vsel %vm534, %v590, %v591
        %v593 = vrot.slane %v435, 1
        %v594 = vsel %vm534, %v591, %v593
        %v595 = vrot.slane %v436, 1
        %v596 = vrot.slane %v437, 1
        %v597 = vsel %vm534, %v595, %v596
        %v598 = vrot.slane %v438, 1
        %v599 = vsel %vm534, %v596, %v598
        %v600 = vrot.slane %v439, 1
        %v601 = vrot.slane %v440, 1
        %v602 = vsel %vm534, %v600, %v601
        %v603 = vrot.slane %v441, 1
        %v604 = vsel %vm534, %v601, %v603
        %v605 = vrot.slane %v442, 1
        %v606 = vrot.slane %v443, 1
        %v607 = vsel %vm534, %v605, %v606
        %v608 = vrot.slane %v444, 1
        %v609 = vsel %vm534, %v606, %v608
        %v610 = vrot.slane %v445, 1
        %v611 = vrot.slane %v446, 1
        %v612 = vsel %vm534, %v610, %v611
        %v613 = vrot.slane %v447, 1
        %v614 = vsel %vm534, %v611, %v613
        %647 = vst [vmem:[#allocation3 + $0x8] sm:$0xff] %v537
        %648 = vst [vmem:[#allocation3 + $0x50] sm:$0xff] %v539
        %649 = vst [vmem:[#allocation3 + $0x98] sm:$0xff] %v542
        %650 = vst [vmem:[#allocation3 + $0xe0] sm:$0xff] %v544
        %651 = vst [vmem:[#allocation3 + $0x128] sm:$0xff] %v547
        %652 = vst [vmem:[#allocation3 + $0x170] sm:$0xff] %v549
        %653 = vst [vmem:[#allocation3 + $0x1b8] sm:$0xff] %v552
        %654 = vst [vmem:[#allocation3 + $0x200] sm:$0xff] %v554
        %655 = vst [vmem:[#allocation3 + $0x248] sm:$0xff] %v557
        %656 = vst [vmem:[#allocation3 + $0x290] sm:$0xff] %v559
        %657 = vst [vmem:[#allocation3 + $0x2d8] sm:$0xff] %v562
        %658 = vst [vmem:[#allocation3 + $0x320] sm:$0xff] %v564
        %659 = vst [vmem:[#allocation3 + $0x368] sm:$0xff] %v567
        %660 = vst [vmem:[#allocation3 + $0x3b0] sm:$0xff] %v569
        %661 = vst [vmem:[#allocation3 + $0x3f8] sm:$0xff] %v572
        %662 = vst [vmem:[#allocation3 + $0x440] sm:$0xff] %v574
        %663 = vst [vmem:[#allocation3 + $0x488] sm:$0xff] %v577
        %664 = vst [vmem:[#allocation3 + $0x4d0] sm:$0xff] %v579
        %665 = vst [vmem:[#allocation3 + $0x518] sm:$0xff] %v582
        %666 = vst [vmem:[#allocation3 + $0x560] sm:$0xff] %v584
        %667 = vst [vmem:[#allocation3 + $0x5a8] sm:$0xff] %v587
        %668 = vst [vmem:[#allocation3 + $0x5f0] sm:$0xff] %v589
        %669 = vst [vmem:[#allocation3 + $0x638] sm:$0xff] %v592
        %670 = vst [vmem:[#allocation3 + $0x680] sm:$0xff] %v594
        %671 = vst [vmem:[#allocation3 + $0x6c8] sm:$0xff] %v597
        %672 = vst [vmem:[#allocation3 + $0x710] sm:$0xff] %v599
        %673 = vst [vmem:[#allocation3 + $0x758] sm:$0xff] %v602
        %674 = vst [vmem:[#allocation3 + $0x7a0] sm:$0xff] %v604
        %675 = vst [vmem:[#allocation3 + $0x7e8] sm:$0xff] %v607
        %676 = vst [vmem:[#allocation3 + $0x830] sm:$0xff] %v609
        %677 = vst [vmem:[#allocation3 + $0x878] sm:$0xff] %v612
        %678 = vst [vmem:[#allocation3 + $0x8c0] sm:$0xff] %v614
        %vm679 = vcmask 1045504
        %v680 = vrot.slane %v400, 2
        %v681 = vrot.slane %v401, 2
        %v682 = vsel %vm679, %v680, %v681
        %v683 = vrot.slane %v402, 2
        %v684 = vsel %vm679, %v681, %v683
        %v685 = vrot.slane %v403, 2
        %v686 = vrot.slane %v404, 2
        %v687 = vsel %vm679, %v685, %v686
        %v688 = vrot.slane %v405, 2
        %v689 = vsel %vm679, %v686, %v688
        %v690 = vrot.slane %v406, 2
        %v691 = vrot.slane %v407, 2
        %v692 = vsel %vm679, %v690, %v691
        %v693 = vrot.slane %v408, 2
        %v694 = vsel %vm679, %v691, %v693
        %v695 = vrot.slane %v409, 2
        %v696 = vrot.slane %v410, 2
        %v697 = vsel %vm679, %v695, %v696
        %v698 = vrot.slane %v411, 2
        %v699 = vsel %vm679, %v696, %v698
        %v700 = vrot.slane %v412, 2
        %v701 = vrot.slane %v413, 2
        %v702 = vsel %vm679, %v700, %v701
        %v703 = vrot.slane %v414, 2
        %v704 = vsel %vm679, %v701, %v703
        %v705 = vrot.slane %v415, 2
        %v706 = vrot.slane %v416, 2
        %v707 = vsel %vm679, %v705, %v706
        %v708 = vrot.slane %v417, 2
        %v709 = vsel %vm679, %v706, %v708
        %v710 = vrot.slane %v418, 2
        %v711 = vrot.slane %v419, 2
        %v712 = vsel %vm679, %v710, %v711
        %v713 = vrot.slane %v420, 2
        %v714 = vsel %vm679, %v711, %v713
        %v715 = vrot.slane %v421, 2
        %v716 = vrot.slane %v422, 2
        %v717 = vsel %vm679, %v715, %v716
        %v718 = vrot.slane %v423, 2
        %v719 = vsel %vm679, %v716, %v718
        %v720 = vrot.slane %v424, 2
        %v721 = vrot.slane %v425, 2
        %v722 = vsel %vm679, %v720, %v721
        %v723 = vrot.slane %v426, 2
        %v724 = vsel %vm679, %v721, %v723
        %v725 = vrot.slane %v427, 2
        %v726 = vrot.slane %v428, 2
        %v727 = vsel %vm679, %v725, %v726
        %v728 = vrot.slane %v429, 2
        %v729 = vsel %vm679, %v726, %v728
        %v730 = vrot.slane %v430, 2
        %v731 = vrot.slane %v431, 2
        %v732 = vsel %vm679, %v730, %v731
        %v733 = vrot.slane %v432, 2
        %v734 = vsel %vm679, %v731, %v733
        %v735 = vrot.slane %v433, 2
        %v736 = vrot.slane %v434, 2
        %v737 = vsel %vm679, %v735, %v736
        %v738 = vrot.slane %v435, 2
        %v739 = vsel %vm679, %v736, %v738
        %v740 = vrot.slane %v436, 2
        %v741 = vrot.slane %v437, 2
        %v742 = vsel %vm679, %v740, %v741
        %v743 = vrot.slane %v438, 2
        %v744 = vsel %vm679, %v741, %v743
        %v745 = vrot.slane %v439, 2
        %v746 = vrot.slane %v440, 2
        %v747 = vsel %vm679, %v745, %v746
        %v748 = vrot.slane %v441, 2
        %v749 = vsel %vm679, %v746, %v748
        %v750 = vrot.slane %v442, 2
        %v751 = vrot.slane %v443, 2
        %v752 = vsel %vm679, %v750, %v751
        %v753 = vrot.slane %v444, 2
        %v754 = vsel %vm679, %v751, %v753
        %v755 = vrot.slane %v445, 2
        %v756 = vrot.slane %v446, 2
        %v757 = vsel %vm679, %v755, %v756
        %v758 = vrot.slane %v447, 2
        %v759 = vsel %vm679, %v756, %v758
        %792 = vst [vmem:[#allocation3 + $0x10] sm:$0xff] %v682
        %793 = vst [vmem:[#allocation3 + $0x58] sm:$0xff] %v684
        %794 = vst [vmem:[#allocation3 + $0xa0] sm:$0xff] %v687
        %795 = vst [vmem:[#allocation3 + $0xe8] sm:$0xff] %v689
        %796 = vst [vmem:[#allocation3 + $0x130] sm:$0xff] %v692
        %797 = vst [vmem:[#allocation3 + $0x178] sm:$0xff] %v694
        %798 = vst [vmem:[#allocation3 + $0x1c0] sm:$0xff] %v697
        %799 = vst [vmem:[#allocation3 + $0x208] sm:$0xff] %v699
        %800 = vst [vmem:[#allocation3 + $0x250] sm:$0xff] %v702
        %801 = vst [vmem:[#allocation3 + $0x298] sm:$0xff] %v704
        %802 = vst [vmem:[#allocation3 + $0x2e0] sm:$0xff] %v707
        %803 = vst [vmem:[#allocation3 + $0x328] sm:$0xff] %v709
        %804 = vst [vmem:[#allocation3 + $0x370] sm:$0xff] %v712
        %805 = vst [vmem:[#allocation3 + $0x3b8] sm:$0xff] %v714
        %806 = vst [vmem:[#allocation3 + $0x400] sm:$0xff] %v717
        %807 = vst [vmem:[#allocation3 + $0x448] sm:$0xff] %v719
        %808 = vst [vmem:[#allocation3 + $0x490] sm:$0xff] %v722
        %809 = vst [vmem:[#allocation3 + $0x4d8] sm:$0xff] %v724
        %810 = vst [vmem:[#allocation3 + $0x520] sm:$0xff] %v727
        %811 = vst [vmem:[#allocation3 + $0x568] sm:$0xff] %v729
        %812 = vst [vmem:[#allocation3 + $0x5b0] sm:$0xff] %v732
        %813 = vst [vmem:[#allocation3 + $0x5f8] sm:$0xff] %v734
        %814 = vst [vmem:[#allocation3 + $0x640] sm:$0xff] %v737
        %815 = vst [vmem:[#allocation3 + $0x688] sm:$0xff] %v739
        %816 = vst [vmem:[#allocation3 + $0x6d0] sm:$0xff] %v742
        %817 = vst [vmem:[#allocation3 + $0x718] sm:$0xff] %v744
        %818 = vst [vmem:[#allocation3 + $0x760] sm:$0xff] %v747
        %819 = vst [vmem:[#allocation3 + $0x7a8] sm:$0xff] %v749
        %820 = vst [vmem:[#allocation3 + $0x7f0] sm:$0xff] %v752
        %821 = vst [vmem:[#allocation3 + $0x838] sm:$0xff] %v754
        %822 = vst [vmem:[#allocation3 + $0x880] sm:$0xff] %v757
        %823 = vst [vmem:[#allocation3 + $0x8c8] sm:$0xff] %v759
        %824 = vst [vmem:[#allocation3 + $0x18] sm:$0xff] %v403
        %825 = vst [vmem:[#allocation3 + $0x60] sm:$0xff] %v404
        %826 = vst [vmem:[#allocation3 + $0xa8] sm:$0xff] %v406
        %827 = vst [vmem:[#allocation3 + $0xf0] sm:$0xff] %v407
        %828 = vst [vmem:[#allocation3 + $0x138] sm:$0xff] %v409
        %829 = vst [vmem:[#allocation3 + $0x180] sm:$0xff] %v410
        %830 = vst [vmem:[#allocation3 + $0x1c8] sm:$0xff] %v412
        %831 = vst [vmem:[#allocation3 + $0x210] sm:$0xff] %v413
        %832 = vst [vmem:[#allocation3 + $0x258] sm:$0xff] %v415
        %833 = vst [vmem:[#allocation3 + $0x2a0] sm:$0xff] %v416
        %834 = vst [vmem:[#allocation3 + $0x2e8] sm:$0xff] %v418
        %835 = vst [vmem:[#allocation3 + $0x330] sm:$0xff] %v419
        %836 = vst [vmem:[#allocation3 + $0x378] sm:$0xff] %v421
        %837 = vst [vmem:[#allocation3 + $0x3c0] sm:$0xff] %v422
        %838 = vst [vmem:[#allocation3 + $0x408] sm:$0xff] %v424
        %839 = vst [vmem:[#allocation3 + $0x450] sm:$0xff] %v425
        %840 = vst [vmem:[#allocation3 + $0x498] sm:$0xff] %v427
        %841 = vst [vmem:[#allocation3 + $0x4e0] sm:$0xff] %v428
        %842 = vst [vmem:[#allocation3 + $0x528] sm:$0xff] %v430
        %843 = vst [vmem:[#allocation3 + $0x570] sm:$0xff] %v431
        %844 = vst [vmem:[#allocation3 + $0x5b8] sm:$0xff] %v433
        %845 = vst [vmem:[#allocation3 + $0x600] sm:$0xff] %v434
        %846 = vst [vmem:[#allocation3 + $0x648] sm:$0xff] %v436
        %847 = vst [vmem:[#allocation3 + $0x690] sm:$0xff] %v437
        %848 = vst [vmem:[#allocation3 + $0x6d8] sm:$0xff] %v439
        %849 = vst [vmem:[#allocation3 + $0x720] sm:$0xff] %v440
        %850 = vst [vmem:[#allocation3 + $0x768] sm:$0xff] %v442
        %851 = vst [vmem:[#allocation3 + $0x7b0] sm:$0xff] %v443
        %852 = vst [vmem:[#allocation3 + $0x7f8] sm:$0xff] %v445
        %853 = vst [vmem:[#allocation3 + $0x840] sm:$0xff] %v446
        %854 = vst [vmem:[#allocation3 + $0x888] sm:$0xff] %v448
        %855 = vst [vmem:[#allocation3 + $0x8d0] sm:$0xff] %v449
        %v859 = vrot.slane %v448, 1
        %v860 = vrot.slane %v449, 1
        %v861 = vsel %vm534, %v859, %v860
        %v862 = vrot.slane %v450, 1
        %v863 = vsel %vm534, %v860, %v862
        %866 = vst [vmem:[#allocation3 + $0x20] sm:$0xff] %v542
        %867 = vst [vmem:[#allocation3 + $0x68] sm:$0xff] %v544
        %868 = vst [vmem:[#allocation3 + $0xb0] sm:$0xff] %v547
        %869 = vst [vmem:[#allocation3 + $0xf8] sm:$0xff] %v549
        %870 = vst [vmem:[#allocation3 + $0x140] sm:$0xff] %v552
        %871 = vst [vmem:[#allocation3 + $0x188] sm:$0xff] %v554
        %872 = vst [vmem:[#allocation3 + $0x1d0] sm:$0xff] %v557
        %873 = vst [vmem:[#allocation3 + $0x218] sm:$0xff] %v559
        %874 = vst [vmem:[#allocation3 + $0x260] sm:$0xff] %v562
        %875 = vst [vmem:[#allocation3 + $0x2a8] sm:$0xff] %v564
        %876 = vst [vmem:[#allocation3 + $0x2f0] sm:$0xff] %v567
        %877 = vst [vmem:[#allocation3 + $0x338] sm:$0xff] %v569
        %878 = vst [vmem:[#allocation3 + $0x380] sm:$0xff] %v572
        %879 = vst [vmem:[#allocation3 + $0x3c8] sm:$0xff] %v574
        %880 = vst [vmem:[#allocation3 + $0x410] sm:$0xff] %v577
        %881 = vst [vmem:[#allocation3 + $0x458] sm:$0xff] %v579
        %882 = vst [vmem:[#allocation3 + $0x4a0] sm:$0xff] %v582
        %883 = vst [vmem:[#allocation3 + $0x4e8] sm:$0xff] %v584
        %884 = vst [vmem:[#allocation3 + $0x530] sm:$0xff] %v587
        %885 = vst [vmem:[#allocation3 + $0x578] sm:$0xff] %v589
        %886 = vst [vmem:[#allocation3 + $0x5c0] sm:$0xff] %v592
        %887 = vst [vmem:[#allocation3 + $0x608] sm:$0xff] %v594
        %888 = vst [vmem:[#allocation3 + $0x650] sm:$0xff] %v597
        %889 = vst [vmem:[#allocation3 + $0x698] sm:$0xff] %v599
        %890 = vst [vmem:[#allocation3 + $0x6e0] sm:$0xff] %v602
        %891 = vst [vmem:[#allocation3 + $0x728] sm:$0xff] %v604
        %892 = vst [vmem:[#allocation3 + $0x770] sm:$0xff] %v607
        %893 = vst [vmem:[#allocation3 + $0x7b8] sm:$0xff] %v609
        %894 = vst [vmem:[#allocation3 + $0x800] sm:$0xff] %v612
        %895 = vst [vmem:[#allocation3 + $0x848] sm:$0xff] %v614
        %896 = vst [vmem:[#allocation3 + $0x890] sm:$0xff] %v861
        %897 = vst [vmem:[#allocation3 + $0x8d8] sm:$0xff] %v863
        %v898 = vrot.slane %v448, 2
        %v899 = vrot.slane %v449, 2
        %v900 = vsel %vm679, %v898, %v899
        %v901 = vrot.slane %v450, 2
        %v902 = vsel %vm679, %v899, %v901
        %905 = vst [vmem:[#allocation3 + $0x28] sm:$0xff] %v687
        %906 = vst [vmem:[#allocation3 + $0x70] sm:$0xff] %v689
        %907 = vst [vmem:[#allocation3 + $0xb8] sm:$0xff] %v692
        %908 = vst [vmem:[#allocation3 + $0x100] sm:$0xff] %v694
        %909 = vst [vmem:[#allocation3 + $0x148] sm:$0xff] %v697
        %910 = vst [vmem:[#allocation3 + $0x190] sm:$0xff] %v699
        %911 = vst [vmem:[#allocation3 + $0x1d8] sm:$0xff] %v702
        %912 = vst [vmem:[#allocation3 + $0x220] sm:$0xff] %v704
        %913 = vst [vmem:[#allocation3 + $0x268] sm:$0xff] %v707
        %914 = vst [vmem:[#allocation3 + $0x2b0] sm:$0xff] %v709
        %915 = vst [vmem:[#allocation3 + $0x2f8] sm:$0xff] %v712
        %916 = vst [vmem:[#allocation3 + $0x340] sm:$0xff] %v714
        %917 = vst [vmem:[#allocation3 + $0x388] sm:$0xff] %v717
        %918 = vst [vmem:[#allocation3 + $0x3d0] sm:$0xff] %v719
        %919 = vst [vmem:[#allocation3 + $0x418] sm:$0xff] %v722
        %920 = vst [vmem:[#allocation3 + $0x460] sm:$0xff] %v724
        %921 = vst [vmem:[#allocation3 + $0x4a8] sm:$0xff] %v727
        %922 = vst [vmem:[#allocation3 + $0x4f0] sm:$0xff] %v729
        %923 = vst [vmem:[#allocation3 + $0x538] sm:$0xff] %v732
        %924 = vst [vmem:[#allocation3 + $0x580] sm:$0xff] %v734
        %925 = vst [vmem:[#allocation3 + $0x5c8] sm:$0xff] %v737
        %926 = vst [vmem:[#allocation3 + $0x610] sm:$0xff] %v739
        %927 = vst [vmem:[#allocation3 + $0x658] sm:$0xff] %v742
        %928 = vst [vmem:[#allocation3 + $0x6a0] sm:$0xff] %v744
        %929 = vst [vmem:[#allocation3 + $0x6e8] sm:$0xff] %v747
        %930 = vst [vmem:[#allocation3 + $0x730] sm:$0xff] %v749
        %931 = vst [vmem:[#allocation3 + $0x778] sm:$0xff] %v752
        %932 = vst [vmem:[#allocation3 + $0x7c0] sm:$0xff] %v754
        %933 = vst [vmem:[#allocation3 + $0x808] sm:$0xff] %v757
        %934 = vst [vmem:[#allocation3 + $0x850] sm:$0xff] %v759
        %935 = vst [vmem:[#allocation3 + $0x898] sm:$0xff] %v900
        %936 = vst [vmem:[#allocation3 + $0x8e0] sm:$0xff] %v902
        %937 = vst [vmem:[#allocation3 + $0x30] sm:$0xff] %v406
        %938 = vst [vmem:[#allocation3 + $0x78] sm:$0xff] %v407
        %939 = vst [vmem:[#allocation3 + $0xc0] sm:$0xff] %v409
        %940 = vst [vmem:[#allocation3 + $0x108] sm:$0xff] %v410
        %941 = vst [vmem:[#allocation3 + $0x150] sm:$0xff] %v412
        %942 = vst [vmem:[#allocation3 + $0x198] sm:$0xff] %v413
        %943 = vst [vmem:[#allocation3 + $0x1e0] sm:$0xff] %v415
        %944 = vst [vmem:[#allocation3 + $0x228] sm:$0xff] %v416
        %945 = vst [vmem:[#allocation3 + $0x270] sm:$0xff] %v418
        %946 = vst [vmem:[#allocation3 + $0x2b8] sm:$0xff] %v419
        %947 = vst [vmem:[#allocation3 + $0x300] sm:$0xff] %v421
        %948 = vst [vmem:[#allocation3 + $0x348] sm:$0xff] %v422
        %949 = vst [vmem:[#allocation3 + $0x390] sm:$0xff] %v424
        %950 = vst [vmem:[#allocation3 + $0x3d8] sm:$0xff] %v425
        %951 = vst [vmem:[#allocation3 + $0x420] sm:$0xff] %v427
        %952 = vst [vmem:[#allocation3 + $0x468] sm:$0xff] %v428
        %953 = vst [vmem:[#allocation3 + $0x4b0] sm:$0xff] %v430
        %954 = vst [vmem:[#allocation3 + $0x4f8] sm:$0xff] %v431
        %955 = vst [vmem:[#allocation3 + $0x540] sm:$0xff] %v433
        %956 = vst [vmem:[#allocation3 + $0x588] sm:$0xff] %v434
        %957 = vst [vmem:[#allocation3 + $0x5d0] sm:$0xff] %v436
        %958 = vst [vmem:[#allocation3 + $0x618] sm:$0xff] %v437
        %959 = vst [vmem:[#allocation3 + $0x660] sm:$0xff] %v439
        %960 = vst [vmem:[#allocation3 + $0x6a8] sm:$0xff] %v440
        %961 = vst [vmem:[#allocation3 + $0x6f0] sm:$0xff] %v442
        %962 = vst [vmem:[#allocation3 + $0x738] sm:$0xff] %v443
        %963 = vst [vmem:[#allocation3 + $0x780] sm:$0xff] %v445
        %964 = vst [vmem:[#allocation3 + $0x7c8] sm:$0xff] %v446
        %965 = vst [vmem:[#allocation3 + $0x810] sm:$0xff] %v448
        %966 = vst [vmem:[#allocation3 + $0x858] sm:$0xff] %v449
        %967 = vst [vmem:[#allocation3 + $0x8a0] sm:$0xff] %v451
        %968 = vst [vmem:[#allocation3 + $0x8e8] sm:$0xff] %v452
        %v972 = vrot.slane %v451, 1
        %v973 = vrot.slane %v452, 1
        %v974 = vsel %vm534, %v972, %v973
        %v975 = vrot.slane %v453, 1
        %v976 = vsel %vm534, %v973, %v975
        %979 = vst [vmem:[#allocation3 + $0x38] sm:$0xff] %v547
        %980 = vst [vmem:[#allocation3 + $0x80] sm:$0xff] %v549
        %981 = vst [vmem:[#allocation3 + $0xc8] sm:$0xff] %v552
        %982 = vst [vmem:[#allocation3 + $0x110] sm:$0xff] %v554
        %983 = vst [vmem:[#allocation3 + $0x158] sm:$0xff] %v557
        %984 = vst [vmem:[#allocation3 + $0x1a0] sm:$0xff] %v559
        %985 = vst [vmem:[#allocation3 + $0x1e8] sm:$0xff] %v562
        %986 = vst [vmem:[#allocation3 + $0x230] sm:$0xff] %v564
        %987 = vst [vmem:[#allocation3 + $0x278] sm:$0xff] %v567
        %988 = vst [vmem:[#allocation3 + $0x2c0] sm:$0xff] %v569
        %989 = vst [vmem:[#allocation3 + $0x308] sm:$0xff] %v572
        %990 = vst [vmem:[#allocation3 + $0x350] sm:$0xff] %v574
        %991 = vst [vmem:[#allocation3 + $0x398] sm:$0xff] %v577
        %992 = vst [vmem:[#allocation3 + $0x3e0] sm:$0xff] %v579
        %993 = vst [vmem:[#allocation3 + $0x428] sm:$0xff] %v582
        %994 = vst [vmem:[#allocation3 + $0x470] sm:$0xff] %v584
        %995 = vst [vmem:[#allocation3 + $0x4b8] sm:$0xff] %v587
        %996 = vst [vmem:[#allocation3 + $0x500] sm:$0xff] %v589
        %997 = vst [vmem:[#allocation3 + $0x548] sm:$0xff] %v592
        %998 = vst [vmem:[#allocation3 + $0x590] sm:$0xff] %v594
        %999 = vst [vmem:[#allocation3 + $0x5d8] sm:$0xff] %v597
        %1000 = vst [vmem:[#allocation3 + $0x620] sm:$0xff] %v599
        %1001 = vst [vmem:[#allocation3 + $0x668] sm:$0xff] %v602
        %1002 = vst [vmem:[#allocation3 + $0x6b0] sm:$0xff] %v604
        %1003 = vst [vmem:[#allocation3 + $0x6f8] sm:$0xff] %v607
        %1004 = vst [vmem:[#allocation3 + $0x740] sm:$0xff] %v609
        %1005 = vst [vmem:[#allocation3 + $0x788] sm:$0xff] %v612
        %1006 = vst [vmem:[#allocation3 + $0x7d0] sm:$0xff] %v614
        %1007 = vst [vmem:[#allocation3 + $0x818] sm:$0xff] %v861
        %1008 = vst [vmem:[#allocation3 + $0x860] sm:$0xff] %v863
        %1009 = vst [vmem:[#allocation3 + $0x8a8] sm:$0xff] %v974
        %1010 = vst [vmem:[#allocation3 + $0x8f0] sm:$0xff] %v976
        %v1011 = vrot.slane %v451, 2
        %v1012 = vrot.slane %v452, 2
        %v1013 = vsel %vm679, %v1011, %v1012
        %v1014 = vrot.slane %v453, 2
        %v1015 = vsel %vm679, %v1012, %v1014
        %1018 = vst [vmem:[#allocation3 + $0x40] sm:$0xff] %v692
        %1019 = vst [vmem:[#allocation3 + $0x88] sm:$0xff] %v694
        %1020 = vst [vmem:[#allocation3 + $0xd0] sm:$0xff] %v697
        %1021 = vst [vmem:[#allocation3 + $0x118] sm:$0xff] %v699
        %1022 = vst [vmem:[#allocation3 + $0x160] sm:$0xff] %v702
        %1023 = vst [vmem:[#allocation3 + $0x1a8] sm:$0xff] %v704
        %1024 = vst [vmem:[#allocation3 + $0x1f0] sm:$0xff] %v707
        %1025 = vst [vmem:[#allocation3 + $0x238] sm:$0xff] %v709
        %1026 = vst [vmem:[#allocation3 + $0x280] sm:$0xff] %v712
        %1027 = vst [vmem:[#allocation3 + $0x2c8] sm:$0xff] %v714
        %1028 = vst [vmem:[#allocation3 + $0x310] sm:$0xff] %v717
        %1029 = vst [vmem:[#allocation3 + $0x358] sm:$0xff] %v719
        %1030 = vst [vmem:[#allocation3 + $0x3a0] sm:$0xff] %v722
        %1031 = vst [vmem:[#allocation3 + $0x3e8] sm:$0xff] %v724
        %1032 = vst [vmem:[#allocation3 + $0x430] sm:$0xff] %v727
        %1033 = vst [vmem:[#allocation3 + $0x478] sm:$0xff] %v729
        %1034 = vst [vmem:[#allocation3 + $0x4c0] sm:$0xff] %v732
        %1035 = vst [vmem:[#allocation3 + $0x508] sm:$0xff] %v734
        %1036 = vst [vmem:[#allocation3 + $0x550] sm:$0xff] %v737
        %1037 = vst [vmem:[#allocation3 + $0x598] sm:$0xff] %v739
        %1038 = vst [vmem:[#allocation3 + $0x5e0] sm:$0xff] %v742
        %1039 = vst [vmem:[#allocation3 + $0x628] sm:$0xff] %v744
        %1040 = vst [vmem:[#allocation3 + $0x670] sm:$0xff] %v747
        %1041 = vst [vmem:[#allocation3 + $0x6b8] sm:$0xff] %v749
        %1042 = vst [vmem:[#allocation3 + $0x700] sm:$0xff] %v752
        %1043 = vst [vmem:[#allocation3 + $0x748] sm:$0xff] %v754
        %1044 = vst [vmem:[#allocation3 + $0x790] sm:$0xff] %v757
        %1045 = vst [vmem:[#allocation3 + $0x7d8] sm:$0xff] %v759
        %1046 = vst [vmem:[#allocation3 + $0x820] sm:$0xff] %v900
        %1047 = vst [vmem:[#allocation3 + $0x868] sm:$0xff] %v902
        %1048 = vst [vmem:[#allocation3 + $0x8b0] sm:$0xff] %v1013
        %1049 = vst [vmem:[#allocation3 + $0x8f8] sm:$0xff] %v1015
        %v1050 = vld [vmem:[#allocation3] sm:$0xff]
        %v1051 = vld [vmem:[#allocation3 + $0x8] sm:$0xff]
        %v1052 = vld [vmem:[#allocation3 + $0x10] sm:$0xff]
        %v1053 = vld [vmem:[#allocation3 + $0x18] sm:$0xff]
        %v1054 = vld [vmem:[#allocation3 + $0x20] sm:$0xff]
        %v1055 = vld [vmem:[#allocation3 + $0x28] sm:$0xff]
        %v1056 = vld [vmem:[#allocation3 + $0x30] sm:$0xff]
        %v1057 = vld [vmem:[#allocation3 + $0x38] sm:$0xff]
        %v1058 = vld [vmem:[#allocation3 + $0x40] sm:$0xff]
        %v1059 = vld [vmem:[#allocation3 + $0x48] sm:$0xff]
        %v1060 = vld [vmem:[#allocation3 + $0x50] sm:$0xff]
        %v1061 = vld [vmem:[#allocation3 + $0x58] sm:$0xff]
        %v1062 = vld [vmem:[#allocation3 + $0x60] sm:$0xff]
        %v1063 = vld [vmem:[#allocation3 + $0x68] sm:$0xff]
        %v1064 = vld [vmem:[#allocation3 + $0x70] sm:$0xff]
        %v1065 = vld [vmem:[#allocation3 + $0x78] sm:$0xff]
        %v1066 = vld [vmem:[#allocation3 + $0x80] sm:$0xff]
        %v1067 = vld [vmem:[#allocation3 + $0x88] sm:$0xff]
        %v1068 = vld [vmem:[#allocation3 + $0x90] sm:$0xff]
        %v1069 = vld [vmem:[#allocation3 + $0x98] sm:$0xff]
        %v1070 = vld [vmem:[#allocation3 + $0xa0] sm:$0xff]
        %v1071 = vld [vmem:[#allocation3 + $0xa8] sm:$0xff]
        %v1072 = vld [vmem:[#allocation3 + $0xb0] sm:$0xff]
        %v1073 = vld [vmem:[#allocation3 + $0xb8] sm:$0xff]
        %v1074 = vld [vmem:[#allocation3 + $0xc0] sm:$0xff]
        %v1075 = vld [vmem:[#allocation3 + $0xc8] sm:$0xff]
        %v1076 = vld [vmem:[#allocation3 + $0xd0] sm:$0xff]
        %v1077 = vld [vmem:[#allocation3 + $0xd8] sm:$0xff]
        %v1078 = vld [vmem:[#allocation3 + $0xe0] sm:$0xff]
        %v1079 = vld [vmem:[#allocation3 + $0xe8] sm:$0xff]
        %v1080 = vld [vmem:[#allocation3 + $0xf0] sm:$0xff]
        %v1081 = vld [vmem:[#allocation3 + $0xf8] sm:$0xff]
        %v1082 = vld [vmem:[#allocation3 + $0x100] sm:$0xff]
        %v1083 = vld [vmem:[#allocation3 + $0x108] sm:$0xff]
        %v1084 = vld [vmem:[#allocation3 + $0x110] sm:$0xff]
        %v1085 = vld [vmem:[#allocation3 + $0x118] sm:$0xff]
        %v1086 = vld [vmem:[#allocation3 + $0x120] sm:$0xff]
        %v1087 = vld [vmem:[#allocation3 + $0x128] sm:$0xff]
        %v1088 = vld [vmem:[#allocation3 + $0x130] sm:$0xff]
        %v1089 = vld [vmem:[#allocation3 + $0x138] sm:$0xff]
        %v1090 = vld [vmem:[#allocation3 + $0x140] sm:$0xff]
        %v1091 = vld [vmem:[#allocation3 + $0x148] sm:$0xff]
        %v1092 = vld [vmem:[#allocation3 + $0x150] sm:$0xff]
        %v1093 = vld [vmem:[#allocation3 + $0x158] sm:$0xff]
        %v1094 = vld [vmem:[#allocation3 + $0x160] sm:$0xff]
        %v1095 = vld [vmem:[#allocation3 + $0x168] sm:$0xff]
        %v1096 = vld [vmem:[#allocation3 + $0x170] sm:$0xff]
        %v1097 = vld [vmem:[#allocation3 + $0x178] sm:$0xff]
        %v1098 = vld [vmem:[#allocation3 + $0x180] sm:$0xff]
        %v1099 = vld [vmem:[#allocation3 + $0x188] sm:$0xff]
        %v1100 = vld [vmem:[#allocation3 + $0x190] sm:$0xff]
        %v1101 = vld [vmem:[#allocation3 + $0x198] sm:$0xff]
        %v1102 = vld [vmem:[#allocation3 + $0x1a0] sm:$0xff]
        %v1103 = vld [vmem:[#allocation3 + $0x1a8] sm:$0xff]
        %v1104 = vld [vmem:[#allocation3 + $0x1b0] sm:$0xff]
        %v1105 = vld [vmem:[#allocation3 + $0x1b8] sm:$0xff]
        %v1106 = vld [vmem:[#allocation3 + $0x1c0] sm:$0xff]
        %v1107 = vld [vmem:[#allocation3 + $0x1c8] sm:$0xff]
        %v1108 = vld [vmem:[#allocation3 + $0x1d0] sm:$0xff]
        %v1109 = vld [vmem:[#allocation3 + $0x1d8] sm:$0xff]
        %v1110 = vld [vmem:[#allocation3 + $0x1e0] sm:$0xff]
        %v1111 = vld [vmem:[#allocation3 + $0x1e8] sm:$0xff]
        %v1112 = vld [vmem:[#allocation3 + $0x1f0] sm:$0xff]
        %v1113 = vld [vmem:[#allocation3 + $0x1f8] sm:$0xff]
        %v1114 = vld [vmem:[#allocation3 + $0x200] sm:$0xff]
        %v1115 = vld [vmem:[#allocation3 + $0x208] sm:$0xff]
        %v1116 = vld [vmem:[#allocation3 + $0x210] sm:$0xff]
        %v1117 = vld [vmem:[#allocation3 + $0x218] sm:$0xff]
        %v1118 = vld [vmem:[#allocation3 + $0x220] sm:$0xff]
        %v1119 = vld [vmem:[#allocation3 + $0x228] sm:$0xff]
        %v1120 = vld [vmem:[#allocation3 + $0x230] sm:$0xff]
        %v1121 = vld [vmem:[#allocation3 + $0x238] sm:$0xff]
        %v1122 = vld [vmem:[#allocation3 + $0x240] sm:$0xff]
        %v1123 = vld [vmem:[#allocation3 + $0x248] sm:$0xff]
        %v1124 = vld [vmem:[#allocation3 + $0x250] sm:$0xff]
        %v1125 = vld [vmem:[#allocation3 + $0x258] sm:$0xff]
        %v1126 = vld [vmem:[#allocation3 + $0x260] sm:$0xff]
        %v1127 = vld [vmem:[#allocation3 + $0x268] sm:$0xff]
        %v1128 = vld [vmem:[#allocation3 + $0x270] sm:$0xff]
        %v1129 = vld [vmem:[#allocation3 + $0x278] sm:$0xff]
        %v1130 = vld [vmem:[#allocation3 + $0x280] sm:$0xff]
        %v1131 = vld [vmem:[#allocation3 + $0x288] sm:$0xff]
        %v1132 = vld [vmem:[#allocation3 + $0x290] sm:$0xff]
        %v1133 = vld [vmem:[#allocation3 + $0x298] sm:$0xff]
        %v1134 = vld [vmem:[#allocation3 + $0x2a0] sm:$0xff]
        %v1135 = vld [vmem:[#allocation3 + $0x2a8] sm:$0xff]
        %v1136 = vld [vmem:[#allocation3 + $0x2b0] sm:$0xff]
        %v1137 = vld [vmem:[#allocation3 + $0x2b8] sm:$0xff]
        %v1138 = vld [vmem:[#allocation3 + $0x2c0] sm:$0xff]
        %v1139 = vld [vmem:[#allocation3 + $0x2c8] sm:$0xff]
        %v1140 = vld [vmem:[#allocation3 + $0x2d0] sm:$0xff]
        %v1141 = vld [vmem:[#allocation3 + $0x2d8] sm:$0xff]
        %v1142 = vld [vmem:[#allocation3 + $0x2e0] sm:$0xff]
        %v1143 = vld [vmem:[#allocation3 + $0x2e8] sm:$0xff]
        %v1144 = vld [vmem:[#allocation3 + $0x2f0] sm:$0xff]
        %v1145 = vld [vmem:[#allocation3 + $0x2f8] sm:$0xff]
        %v1146 = vld [vmem:[#allocation3 + $0x300] sm:$0xff]
        %v1147 = vld [vmem:[#allocation3 + $0x308] sm:$0xff]
        %v1148 = vld [vmem:[#allocation3 + $0x310] sm:$0xff]
        %v1149 = vld [vmem:[#allocation3 + $0x318] sm:$0xff]
        %v1150 = vld [vmem:[#allocation3 + $0x320] sm:$0xff]
        %v1151 = vld [vmem:[#allocation3 + $0x328] sm:$0xff]
        %v1152 = vld [vmem:[#allocation3 + $0x330] sm:$0xff]
        %v1153 = vld [vmem:[#allocation3 + $0x338] sm:$0xff]
        %v1154 = vld [vmem:[#allocation3 + $0x340] sm:$0xff]
        %v1155 = vld [vmem:[#allocation3 + $0x348] sm:$0xff]
        %v1156 = vld [vmem:[#allocation3 + $0x350] sm:$0xff]
        %v1157 = vld [vmem:[#allocation3 + $0x358] sm:$0xff]
        %v1158 = vld [vmem:[#allocation3 + $0x360] sm:$0xff]
        %v1159 = vld [vmem:[#allocation3 + $0x368] sm:$0xff]
        %v1160 = vld [vmem:[#allocation3 + $0x370] sm:$0xff]
        %v1161 = vld [vmem:[#allocation3 + $0x378] sm:$0xff]
        %v1162 = vld [vmem:[#allocation3 + $0x380] sm:$0xff]
        %v1163 = vld [vmem:[#allocation3 + $0x388] sm:$0xff]
        %v1164 = vld [vmem:[#allocation3 + $0x390] sm:$0xff]
        %v1165 = vld [vmem:[#allocation3 + $0x398] sm:$0xff]
        %v1166 = vld [vmem:[#allocation3 + $0x3a0] sm:$0xff]
        %v1167 = vld [vmem:[#allocation3 + $0x3a8] sm:$0xff]
        %v1168 = vld [vmem:[#allocation3 + $0x3b0] sm:$0xff]
        %v1169 = vld [vmem:[#allocation3 + $0x3b8] sm:$0xff]
        %v1170 = vld [vmem:[#allocation3 + $0x3c0] sm:$0xff]
        %v1171 = vld [vmem:[#allocation3 + $0x3c8] sm:$0xff]
        %v1172 = vld [vmem:[#allocation3 + $0x3d0] sm:$0xff]
        %v1173 = vld [vmem:[#allocation3 + $0x3d8] sm:$0xff]
        %v1174 = vld [vmem:[#allocation3 + $0x3e0] sm:$0xff]
        %v1175 = vld [vmem:[#allocation3 + $0x3e8] sm:$0xff]
        %v1176 = vld [vmem:[#allocation3 + $0x3f0] sm:$0xff]
        %v1177 = vld [vmem:[#allocation3 + $0x3f8] sm:$0xff]
        %v1178 = vld [vmem:[#allocation3 + $0x400] sm:$0xff]
        %v1179 = vld [vmem:[#allocation3 + $0x408] sm:$0xff]
        %v1180 = vld [vmem:[#allocation3 + $0x410] sm:$0xff]
        %v1181 = vld [vmem:[#allocation3 + $0x418] sm:$0xff]
        %v1182 = vld [vmem:[#allocation3 + $0x420] sm:$0xff]
        %v1183 = vld [vmem:[#allocation3 + $0x428] sm:$0xff]
        %v1184 = vld [vmem:[#allocation3 + $0x430] sm:$0xff]
        %v1185 = vld [vmem:[#allocation3 + $0x438] sm:$0xff]
        %v1186 = vld [vmem:[#allocation3 + $0x440] sm:$0xff]
        %v1187 = vld [vmem:[#allocation3 + $0x448] sm:$0xff]
        %v1188 = vld [vmem:[#allocation3 + $0x450] sm:$0xff]
        %v1189 = vld [vmem:[#allocation3 + $0x458] sm:$0xff]
        %v1190 = vld [vmem:[#allocation3 + $0x460] sm:$0xff]
        %v1191 = vld [vmem:[#allocation3 + $0x468] sm:$0xff]
        %v1192 = vld [vmem:[#allocation3 + $0x470] sm:$0xff]
        %v1193 = vld [vmem:[#allocation3 + $0x478] sm:$0xff]
        %v1194 = vld [vmem:[#allocation3 + $0x480] sm:$0xff]
        %v1195 = vld [vmem:[#allocation3 + $0x488] sm:$0xff]
        %v1196 = vld [vmem:[#allocation3 + $0x490] sm:$0xff]
        %v1197 = vld [vmem:[#allocation3 + $0x498] sm:$0xff]
        %v1198 = vld [vmem:[#allocation3 + $0x4a0] sm:$0xff]
        %v1199 = vld [vmem:[#allocation3 + $0x4a8] sm:$0xff]
        %v1200 = vld [vmem:[#allocation3 + $0x4b0] sm:$0xff]
        %v1201 = vld [vmem:[#allocation3 + $0x4b8] sm:$0xff]
        %v1202 = vld [vmem:[#allocation3 + $0x4c0] sm:$0xff]
        %v1203 = vld [vmem:[#allocation3 + $0x4c8] sm:$0xff]
        %v1204 = vld [vmem:[#allocation3 + $0x4d0] sm:$0xff]
        %v1205 = vld [vmem:[#allocation3 + $0x4d8] sm:$0xff]
        %v1206 = vld [vmem:[#allocation3 + $0x4e0] sm:$0xff]
        %v1207 = vld [vmem:[#allocation3 + $0x4e8] sm:$0xff]
        %v1208 = vld [vmem:[#allocation3 + $0x4f0] sm:$0xff]
        %v1209 = vld [vmem:[#allocation3 + $0x4f8] sm:$0xff]
        %v1210 = vld [vmem:[#allocation3 + $0x500] sm:$0xff]
        %v1211 = vld [vmem:[#allocation3 + $0x508] sm:$0xff]
        %v1212 = vld [vmem:[#allocation3 + $0x510] sm:$0xff]
        %v1213 = vld [vmem:[#allocation3 + $0x518] sm:$0xff]
        %v1214 = vld [vmem:[#allocation3 + $0x520] sm:$0xff]
        %v1215 = vld [vmem:[#allocation3 + $0x528] sm:$0xff]
        %v1216 = vld [vmem:[#allocation3 + $0x530] sm:$0xff]
        %v1217 = vld [vmem:[#allocation3 + $0x538] sm:$0xff]
        %v1218 = vld [vmem:[#allocation3 + $0x540] sm:$0xff]
        %v1219 = vld [vmem:[#allocation3 + $0x548] sm:$0xff]
        %v1220 = vld [vmem:[#allocation3 + $0x550] sm:$0xff]
        %v1221 = vld [vmem:[#allocation3 + $0x558] sm:$0xff]
        %v1222 = vld [vmem:[#allocation3 + $0x560] sm:$0xff]
        %v1223 = vld [vmem:[#allocation3 + $0x568] sm:$0xff]
        %v1224 = vld [vmem:[#allocation3 + $0x570] sm:$0xff]
        %v1225 = vld [vmem:[#allocation3 + $0x578] sm:$0xff]
        %v1226 = vld [vmem:[#allocation3 + $0x580] sm:$0xff]
        %v1227 = vld [vmem:[#allocation3 + $0x588] sm:$0xff]
        %v1228 = vld [vmem:[#allocation3 + $0x590] sm:$0xff]
        %v1229 = vld [vmem:[#allocation3 + $0x598] sm:$0xff]
        %v1230 = vld [vmem:[#allocation3 + $0x5a0] sm:$0xff]
        %v1231 = vld [vmem:[#allocation3 + $0x5a8] sm:$0xff]
        %v1232 = vld [vmem:[#allocation3 + $0x5b0] sm:$0xff]
        %v1233 = vld [vmem:[#allocation3 + $0x5b8] sm:$0xff]
        %v1234 = vld [vmem:[#allocation3 + $0x5c0] sm:$0xff]
        %v1235 = vld [vmem:[#allocation3 + $0x5c8] sm:$0xff]
        %v1236 = vld [vmem:[#allocation3 + $0x5d0] sm:$0xff]
        %v1237 = vld [vmem:[#allocation3 + $0x5d8] sm:$0xff]
        %v1238 = vld [vmem:[#allocation3 + $0x5e0] sm:$0xff]
        %v1239 = vld [vmem:[#allocation3 + $0x5e8] sm:$0xff]
        %v1240 = vld [vmem:[#allocation3 + $0x5f0] sm:$0xff]
        %v1241 = vld [vmem:[#allocation3 + $0x5f8] sm:$0xff]
        %v1242 = vld [vmem:[#allocation3 + $0x600] sm:$0xff]
        %v1243 = vld [vmem:[#allocation3 + $0x608] sm:$0xff]
        %v1244 = vld [vmem:[#allocation3 + $0x610] sm:$0xff]
        %v1245 = vld [vmem:[#allocation3 + $0x618] sm:$0xff]
        %v1246 = vld [vmem:[#allocation3 + $0x620] sm:$0xff]
        %v1247 = vld [vmem:[#allocation3 + $0x628] sm:$0xff]
        %v1248 = vld [vmem:[#allocation3 + $0x630] sm:$0xff]
        %v1249 = vld [vmem:[#allocation3 + $0x638] sm:$0xff]
        %v1250 = vld [vmem:[#allocation3 + $0x640] sm:$0xff]
        %v1251 = vld [vmem:[#allocation3 + $0x648] sm:$0xff]
        %v1252 = vld [vmem:[#allocation3 + $0x650] sm:$0xff]
        %v1253 = vld [vmem:[#allocation3 + $0x658] sm:$0xff]
        %v1254 = vld [vmem:[#allocation3 + $0x660] sm:$0xff]
        %v1255 = vld [vmem:[#allocation3 + $0x668] sm:$0xff]
        %v1256 = vld [vmem:[#allocation3 + $0x670] sm:$0xff]
        %v1257 = vld [vmem:[#allocation3 + $0x678] sm:$0xff]
        %v1258 = vld [vmem:[#allocation3 + $0x680] sm:$0xff]
        %v1259 = vld [vmem:[#allocation3 + $0x688] sm:$0xff]
        %v1260 = vld [vmem:[#allocation3 + $0x690] sm:$0xff]
        %v1261 = vld [vmem:[#allocation3 + $0x698] sm:$0xff]
        %v1262 = vld [vmem:[#allocation3 + $0x6a0] sm:$0xff]
        %v1263 = vld [vmem:[#allocation3 + $0x6a8] sm:$0xff]
        %v1264 = vld [vmem:[#allocation3 + $0x6b0] sm:$0xff]
        %v1265 = vld [vmem:[#allocation3 + $0x6b8] sm:$0xff]
        %v1266 = vld [vmem:[#allocation3 + $0x6c0] sm:$0xff]
        %v1267 = vld [vmem:[#allocation3 + $0x6c8] sm:$0xff]
        %v1268 = vld [vmem:[#allocation3 + $0x6d0] sm:$0xff]
        %v1269 = vld [vmem:[#allocation3 + $0x6d8] sm:$0xff]
        %v1270 = vld [vmem:[#allocation3 + $0x6e0] sm:$0xff]
        %v1271 = vld [vmem:[#allocation3 + $0x6e8] sm:$0xff]
        %v1272 = vld [vmem:[#allocation3 + $0x6f0] sm:$0xff]
        %v1273 = vld [vmem:[#allocation3 + $0x6f8] sm:$0xff]
        %v1274 = vld [vmem:[#allocation3 + $0x700] sm:$0xff]
        %v1275 = vld [vmem:[#allocation3 + $0x708] sm:$0xff]
        %v1276 = vld [vmem:[#allocation3 + $0x710] sm:$0xff]
        %v1277 = vld [vmem:[#allocation3 + $0x718] sm:$0xff]
        %v1278 = vld [vmem:[#allocation3 + $0x720] sm:$0xff]
        %v1279 = vld [vmem:[#allocation3 + $0x728] sm:$0xff]
        %v1280 = vld [vmem:[#allocation3 + $0x730] sm:$0xff]
        %v1281 = vld [vmem:[#allocation3 + $0x738] sm:$0xff]
        %v1282 = vld [vmem:[#allocation3 + $0x740] sm:$0xff]
        %v1283 = vld [vmem:[#allocation3 + $0x748] sm:$0xff]
        %v1284 = vld [vmem:[#allocation3 + $0x750] sm:$0xff]
        %v1285 = vld [vmem:[#allocation3 + $0x758] sm:$0xff]
        %v1286 = vld [vmem:[#allocation3 + $0x760] sm:$0xff]
        %v1287 = vld [vmem:[#allocation3 + $0x768] sm:$0xff]
        %v1288 = vld [vmem:[#allocation3 + $0x770] sm:$0xff]
        %v1289 = vld [vmem:[#allocation3 + $0x778] sm:$0xff]
        %v1290 = vld [vmem:[#allocation3 + $0x780] sm:$0xff]
        %v1291 = vld [vmem:[#allocation3 + $0x788] sm:$0xff]
        %v1292 = vld [vmem:[#allocation3 + $0x790] sm:$0xff]
        %v1293 = vld [vmem:[#allocation3 + $0x798] sm:$0xff]
        %v1294 = vld [vmem:[#allocation3 + $0x7a0] sm:$0xff]
        %v1295 = vld [vmem:[#allocation3 + $0x7a8] sm:$0xff]
        %v1296 = vld [vmem:[#allocation3 + $0x7b0] sm:$0xff]
        %v1297 = vld [vmem:[#allocation3 + $0x7b8] sm:$0xff]
        %v1298 = vld [vmem:[#allocation3 + $0x7c0] sm:$0xff]
        %v1299 = vld [vmem:[#allocation3 + $0x7c8] sm:$0xff]
        %v1300 = vld [vmem:[#allocation3 + $0x7d0] sm:$0xff]
        %v1301 = vld [vmem:[#allocation3 + $0x7d8] sm:$0xff]
        %v1302 = vld [vmem:[#allocation3 + $0x7e0] sm:$0xff]
        %v1303 = vld [vmem:[#allocation3 + $0x7e8] sm:$0xff]
        %v1304 = vld [vmem:[#allocation3 + $0x7f0] sm:$0xff]
        %v1305 = vld [vmem:[#allocation3 + $0x7f8] sm:$0xff]
        %v1306 = vld [vmem:[#allocation3 + $0x800] sm:$0xff]
        %v1307 = vld [vmem:[#allocation3 + $0x808] sm:$0xff]
        %v1308 = vld [vmem:[#allocation3 + $0x810] sm:$0xff]
        %v1309 = vld [vmem:[#allocation3 + $0x818] sm:$0xff]
        %v1310 = vld [vmem:[#allocation3 + $0x820] sm:$0xff]
        %v1311 = vld [vmem:[#allocation3 + $0x828] sm:$0xff]
        %v1312 = vld [vmem:[#allocation3 + $0x830] sm:$0xff]
        %v1313 = vld [vmem:[#allocation3 + $0x838] sm:$0xff]
        %v1314 = vld [vmem:[#allocation3 + $0x840] sm:$0xff]
        %v1315 = vld [vmem:[#allocation3 + $0x848] sm:$0xff]
        %v1316 = vld [vmem:[#allocation3 + $0x850] sm:$0xff]
        %v1317 = vld [vmem:[#allocation3 + $0x858] sm:$0xff]
        %v1318 = vld [vmem:[#allocation3 + $0x860] sm:$0xff]
        %v1319 = vld [vmem:[#allocation3 + $0x868] sm:$0xff]
        %v1320 = vld [vmem:[#allocation3 + $0x870] sm:$0xff]
        %v1321 = vld [vmem:[#allocation3 + $0x878] sm:$0xff]
        %v1322 = vld [vmem:[#allocation3 + $0x880] sm:$0xff]
        %v1323 = vld [vmem:[#allocation3 + $0x888] sm:$0xff]
        %v1324 = vld [vmem:[#allocation3 + $0x890] sm:$0xff]
        %v1325 = vld [vmem:[#allocation3 + $0x898] sm:$0xff]
        %v1326 = vld [vmem:[#allocation3 + $0x8a0] sm:$0xff]
        %v1327 = vld [vmem:[#allocation3 + $0x8a8] sm:$0xff]
        %v1328 = vld [vmem:[#allocation3 + $0x8b0] sm:$0xff]
        %v1329 = vld [vmem:[#allocation3 + $0x8b8] sm:$0xff]
        %v1330 = vld [vmem:[#allocation3 + $0x8c0] sm:$0xff]
        %v1331 = vld [vmem:[#allocation3 + $0x8c8] sm:$0xff]
        %v1332 = vld [vmem:[#allocation3 + $0x8d0] sm:$0xff]
        %v1333 = vld [vmem:[#allocation3 + $0x8d8] sm:$0xff]
        %v1334 = vld [vmem:[#allocation3 + $0x8e0] sm:$0xff]
        %v1335 = vld [vmem:[#allocation3 + $0x8e8] sm:$0xff]
        %v1336 = vld [vmem:[#allocation3 + $0x8f0] sm:$0xff]
        %v1337 = vld [vmem:[#allocation3 + $0x8f8] sm:$0xff]
        %v1338 = vld [vmem:[#allocation7] sm:$0xff]
        %v1339 = vld [vmem:[#allocation7 + $0x8] sm:$0xff]
        %v1340 = vld [vmem:[#allocation7 + $0x10] sm:$0xff]
        %v1341 = vld [vmem:[#allocation7 + $0x18] sm:$0xff]
        %v1342 = vld [vmem:[#allocation7 + $0x20] sm:$0xff]
        %v1343 = vld [vmem:[#allocation7 + $0x28] sm:$0xff]
        %v1344 = vld [vmem:[#allocation7 + $0x30] sm:$0xff]
        %v1345 = vld [vmem:[#allocation7 + $0x38] sm:$0xff]
        %v1346 = vld [vmem:[#allocation7 + $0x40] sm:$0xff]
        %v1347 = vld [vmem:[#allocation7 + $0x48] sm:$0xff]
        %v1348 = vld [vmem:[#allocation7 + $0x50] sm:$0xff]
        %v1349 = vld [vmem:[#allocation7 + $0x58] sm:$0xff]
        %v1350 = vld [vmem:[#allocation7 + $0x60] sm:$0xff]
        %v1351 = vld [vmem:[#allocation7 + $0x68] sm:$0xff]
        %v1352 = vld [vmem:[#allocation7 + $0x70] sm:$0xff]
        %v1353 = vld [vmem:[#allocation7 + $0x78] sm:$0xff]
        %v1354 = vld [vmem:[#allocation7 + $0x80] sm:$0xff]
        %v1355 = vld [vmem:[#allocation7 + $0x88] sm:$0xff]
        %v1356 = vld [vmem:[#allocation7 + $0x90] sm:$0xff]
        %v1357 = vld [vmem:[#allocation7 + $0x98] sm:$0xff]
        %v1358 = vld [vmem:[#allocation7 + $0xa0] sm:$0xff]
        %v1359 = vld [vmem:[#allocation7 + $0xa8] sm:$0xff]
        %v1360 = vld [vmem:[#allocation7 + $0xb0] sm:$0xff]
        %v1361 = vld [vmem:[#allocation7 + $0xb8] sm:$0xff]
        %v1362 = vld [vmem:[#allocation7 + $0xc0] sm:$0xff]
        %v1363 = vld [vmem:[#allocation7 + $0xc8] sm:$0xff]
        %v1364 = vld [vmem:[#allocation7 + $0xd0] sm:$0xff]
        %v1365 = vld [vmem:[#allocation7 + $0xd8] sm:$0xff]
        %v1366 = vld [vmem:[#allocation7 + $0xe0] sm:$0xff]
        %v1367 = vld [vmem:[#allocation7 + $0xe8] sm:$0xff]
        %v1368 = vld [vmem:[#allocation7 + $0xf0] sm:$0xff]
        %v1369 = vld [vmem:[#allocation7 + $0xf8] sm:$0xff]
        %v1370 = vld [vmem:[#allocation7 + $0x100] sm:$0xff]
        %v1371 = vld [vmem:[#allocation7 + $0x108] sm:$0xff]
        %v1372 = vld [vmem:[#allocation7 + $0x110] sm:$0xff]
        %v1373 = vld [vmem:[#allocation7 + $0x118] sm:$0xff]
        %v1374 = vld [vmem:[#allocation7 + $0x120] sm:$0xff]
        %v1375 = vld [vmem:[#allocation7 + $0x128] sm:$0xff]
        %v1376 = vld [vmem:[#allocation7 + $0x130] sm:$0xff]
        %v1377 = vld [vmem:[#allocation7 + $0x138] sm:$0xff]
        %v1378 = vld [vmem:[#allocation7 + $0x140] sm:$0xff]
        %v1379 = vld [vmem:[#allocation7 + $0x148] sm:$0xff]
        %v1380 = vld [vmem:[#allocation7 + $0x150] sm:$0xff]
        %v1381 = vld [vmem:[#allocation7 + $0x158] sm:$0xff]
        %v1382 = vld [vmem:[#allocation7 + $0x160] sm:$0xff]
        %v1383 = vld [vmem:[#allocation7 + $0x168] sm:$0xff]
        %v1384 = vld [vmem:[#allocation7 + $0x170] sm:$0xff]
        %v1385 = vld [vmem:[#allocation7 + $0x178] sm:$0xff]
        %v1386 = vld [vmem:[#allocation7 + $0x180] sm:$0xff]
        %v1387 = vld [vmem:[#allocation7 + $0x188] sm:$0xff]
        %v1388 = vld [vmem:[#allocation7 + $0x190] sm:$0xff]
        %v1389 = vld [vmem:[#allocation7 + $0x198] sm:$0xff]
        %v1390 = vld [vmem:[#allocation7 + $0x1a0] sm:$0xff]
        %v1391 = vld [vmem:[#allocation7 + $0x1a8] sm:$0xff]
        %v1392 = vld [vmem:[#allocation7 + $0x1b0] sm:$0xff]
        %v1393 = vld [vmem:[#allocation7 + $0x1b8] sm:$0xff]
        %v1394 = vld [vmem:[#allocation7 + $0x1c0] sm:$0xff]
        %v1395 = vld [vmem:[#allocation7 + $0x1c8] sm:$0xff]
        %v1396 = vld [vmem:[#allocation7 + $0x1d0] sm:$0xff]
        %v1397 = vld [vmem:[#allocation7 + $0x1d8] sm:$0xff]
        %v1398 = vld [vmem:[#allocation7 + $0x1e0] sm:$0xff]
        %v1399 = vld [vmem:[#allocation7 + $0x1e8] sm:$0xff]
        %v1400 = vld [vmem:[#allocation7 + $0x1f0] sm:$0xff]
        %v1401 = vld [vmem:[#allocation7 + $0x1f8] sm:$0xff]
        %v1402 = vld [vmem:[#allocation7 + $0x200] sm:$0xff]
        %v1403 = vld [vmem:[#allocation7 + $0x208] sm:$0xff]
        %v1404 = vld [vmem:[#allocation7 + $0x210] sm:$0xff]
        %v1405 = vld [vmem:[#allocation7 + $0x218] sm:$0xff]
        %v1406 = vld [vmem:[#allocation7 + $0x220] sm:$0xff]
        %v1407 = vld [vmem:[#allocation7 + $0x228] sm:$0xff]
        %v1408 = vld [vmem:[#allocation7 + $0x230] sm:$0xff]
        %v1409 = vld [vmem:[#allocation7 + $0x238] sm:$0xff]
        %v1410 = vld [vmem:[#allocation7 + $0x240] sm:$0xff]
        %v1411 = vld [vmem:[#allocation7 + $0x248] sm:$0xff]
        %v1412 = vld [vmem:[#allocation7 + $0x250] sm:$0xff]
        %v1413 = vld [vmem:[#allocation7 + $0x258] sm:$0xff]
        %v1414 = vld [vmem:[#allocation7 + $0x260] sm:$0xff]
        %v1415 = vld [vmem:[#allocation7 + $0x268] sm:$0xff]
        %v1416 = vld [vmem:[#allocation7 + $0x270] sm:$0xff]
        %v1417 = vld [vmem:[#allocation7 + $0x278] sm:$0xff]
        %v1418 = vld [vmem:[#allocation7 + $0x280] sm:$0xff]
        %v1419 = vld [vmem:[#allocation7 + $0x288] sm:$0xff]
        %v1420 = vld [vmem:[#allocation7 + $0x290] sm:$0xff]
        %v1421 = vld [vmem:[#allocation7 + $0x298] sm:$0xff]
        %v1422 = vld [vmem:[#allocation7 + $0x2a0] sm:$0xff]
        %v1423 = vld [vmem:[#allocation7 + $0x2a8] sm:$0xff]
        %v1424 = vld [vmem:[#allocation7 + $0x2b0] sm:$0xff]
        %v1425 = vld [vmem:[#allocation7 + $0x2b8] sm:$0xff]
        %v1426 = vld [vmem:[#allocation7 + $0x2c0] sm:$0xff]
        %v1427 = vld [vmem:[#allocation7 + $0x2c8] sm:$0xff]
        %v1428 = vld [vmem:[#allocation7 + $0x2d0] sm:$0xff]
        %v1429 = vld [vmem:[#allocation7 + $0x2d8] sm:$0xff]
        %v1430 = vld [vmem:[#allocation7 + $0x2e0] sm:$0xff]
        %v1431 = vld [vmem:[#allocation7 + $0x2e8] sm:$0xff]
        %v1432 = vld [vmem:[#allocation7 + $0x2f0] sm:$0xff]
        %v1433 = vld [vmem:[#allocation7 + $0x2f8] sm:$0xff]
        %v1434 = vld [vmem:[#allocation7 + $0x300] sm:$0xff]
        %v1435 = vld [vmem:[#allocation7 + $0x308] sm:$0xff]
        %v1436 = vld [vmem:[#allocation7 + $0x310] sm:$0xff]
        %v1437 = vld [vmem:[#allocation7 + $0x318] sm:$0xff]
        %v1438 = vld [vmem:[#allocation7 + $0x320] sm:$0xff]
        %v1439 = vld [vmem:[#allocation7 + $0x328] sm:$0xff]
        %v1440 = vld [vmem:[#allocation7 + $0x330] sm:$0xff]
        %v1441 = vld [vmem:[#allocation7 + $0x338] sm:$0xff]
        %v1442 = vld [vmem:[#allocation7 + $0x340] sm:$0xff]
        %v1443 = vld [vmem:[#allocation7 + $0x348] sm:$0xff]
        %v1444 = vld [vmem:[#allocation7 + $0x350] sm:$0xff]
        %v1445 = vld [vmem:[#allocation7 + $0x358] sm:$0xff]
        %v1446 = vld [vmem:[#allocation7 + $0x360] sm:$0xff]
        %v1447 = vld [vmem:[#allocation7 + $0x368] sm:$0xff]
        %v1448 = vld [vmem:[#allocation7 + $0x370] sm:$0xff]
        %v1449 = vld [vmem:[#allocation7 + $0x378] sm:$0xff]
        %v1450 = vld [vmem:[#allocation7 + $0x380] sm:$0xff]
        %v1451 = vld [vmem:[#allocation7 + $0x388] sm:$0xff]
        %v1452 = vld [vmem:[#allocation7 + $0x390] sm:$0xff]
        %v1453 = vld [vmem:[#allocation7 + $0x398] sm:$0xff]
        %v1454 = vld [vmem:[#allocation7 + $0x3a0] sm:$0xff]
        %v1455 = vld [vmem:[#allocation7 + $0x3a8] sm:$0xff]
        %v1456 = vld [vmem:[#allocation7 + $0x3b0] sm:$0xff]
        %v1457 = vld [vmem:[#allocation7 + $0x3b8] sm:$0xff]
        %v1458 = vld [vmem:[#allocation7 + $0x3c0] sm:$0xff]
        %v1459 = vld [vmem:[#allocation7 + $0x3c8] sm:$0xff]
        %v1460 = vld [vmem:[#allocation7 + $0x3d0] sm:$0xff]
        %v1461 = vld [vmem:[#allocation7 + $0x3d8] sm:$0xff]
        %v1462 = vld [vmem:[#allocation7 + $0x3e0] sm:$0xff]
        %v1463 = vld [vmem:[#allocation7 + $0x3e8] sm:$0xff]
        %v1464 = vld [vmem:[#allocation7 + $0x3f0] sm:$0xff]
        %v1465 = vld [vmem:[#allocation7 + $0x3f8] sm:$0xff]
        %v1466 = vld [vmem:[#allocation7 + $0x400] sm:$0xff]
        %v1467 = vld [vmem:[#allocation7 + $0x408] sm:$0xff]
        %v1468 = vld [vmem:[#allocation7 + $0x410] sm:$0xff]
        %v1469 = vld [vmem:[#allocation7 + $0x418] sm:$0xff]
        %v1470 = vld [vmem:[#allocation7 + $0x420] sm:$0xff]
        %v1471 = vld [vmem:[#allocation7 + $0x428] sm:$0xff]
        %v1472 = vld [vmem:[#allocation7 + $0x430] sm:$0xff]
        %v1473 = vld [vmem:[#allocation7 + $0x438] sm:$0xff]
        %v1474 = vld [vmem:[#allocation7 + $0x440] sm:$0xff]
        %v1475 = vld [vmem:[#allocation7 + $0x448] sm:$0xff]
        %v1476 = vld [vmem:[#allocation7 + $0x450] sm:$0xff]
        %v1477 = vld [vmem:[#allocation7 + $0x458] sm:$0xff]
        %v1478 = vld [vmem:[#allocation7 + $0x460] sm:$0xff]
        %v1479 = vld [vmem:[#allocation7 + $0x468] sm:$0xff]
        %v1480 = vld [vmem:[#allocation7 + $0x470] sm:$0xff]
        %v1481 = vld [vmem:[#allocation7 + $0x478] sm:$0xff]
        %1482 = vmatprep.subr.mxu0 0.0
        %1483 = vmatpush1.msra.mxu0 %v1353
        %1484 = vmatprep.subr.mxu0 0.0
        %1485 = vmatpush1.msra.mxu0 %v1352
        %1486 = vmatprep.subr.mxu0 0.0
        %1487 = vmatpush1.msra.mxu0 %v1351
        %1488 = vmatprep.subr.mxu0 0.0
        %1489 = vmatpush1.msra.mxu0 %v1350
        %1490 = vmatprep.subr.mxu0 0.0
        %1491 = vmatpush1.msra.mxu0 %v1349
        %1492 = vmatprep.subr.mxu0 0.0
        %1493 = vmatpush1.msra.mxu0 %v1348
        %1494 = vmatprep.subr.mxu0 0.0
        %1495 = vmatpush1.msra.mxu0 %v1347
        %1496 = vmatprep.subr.mxu0 0.0
        %1497 = vmatpush1.msra.mxu0 %v1346
        %1498 = vmatprep.subr.mxu0 0.0
        %1499 = vmatpush1.msra.mxu0 %v1345
        %1500 = vmatprep.subr.mxu0 0.0
        %1501 = vmatpush1.msra.mxu0 %v1344
        %1502 = vmatprep.subr.mxu0 0.0
        %1503 = vmatpush1.msra.mxu0 %v1343
        %1504 = vmatprep.subr.mxu0 0.0
        %1505 = vmatpush1.msra.mxu0 %v1342
        %1506 = vmatprep.subr.mxu0 0.0
        %1507 = vmatpush1.msra.mxu0 %v1341
        %1508 = vmatprep.subr.mxu0 0.0
        %1509 = vmatpush1.msra.mxu0 %v1340
        %1510 = vmatprep.subr.mxu0 0.0
        %1511 = vmatpush1.msra.mxu0 %v1339
        %1512 = vmatprep.subr.mxu0 0.0
        %1513 = vmatpush1.msra.mxu0 %v1338
        %1514 = vmatprep.subr.mxu0 0.0
        %1515 = vmatpush2.msra.mxu0 %v1369
        %1516 = vmatprep.subr.mxu0 0.0
        %1517 = vmatpush2.msra.mxu0 %v1368
        %1518 = vmatprep.subr.mxu0 0.0
        %1519 = vmatpush2.msra.mxu0 %v1367
        %1520 = vmatprep.subr.mxu0 0.0
        %1521 = vmatpush2.msra.mxu0 %v1366
        %1522 = vmatprep.subr.mxu0 0.0
        %1523 = vmatpush2.msra.mxu0 %v1365
        %1524 = vmatprep.subr.mxu0 0.0
        %1525 = vmatpush2.msra.mxu0 %v1364
        %1526 = vmatprep.subr.mxu0 0.0
        %1527 = vmatpush2.msra.mxu0 %v1363
        %1528 = vmatprep.subr.mxu0 0.0
        %1529 = vmatpush2.msra.mxu0 %v1362
        %1530 = vmatprep.subr.mxu0 0.0
        %1531 = vmatpush2.msra.mxu0 %v1361
        %1532 = vmatprep.subr.mxu0 0.0
        %1533 = vmatpush2.msra.mxu0 %v1360
        %1534 = vmatprep.subr.mxu0 0.0
        %1535 = vmatpush2.msra.mxu0 %v1359
        %1536 = vmatprep.subr.mxu0 0.0
        %1537 = vmatpush2.msra.mxu0 %v1358
        %1538 = vmatprep.subr.mxu0 0.0
        %1539 = vmatpush2.msra.mxu0 %v1357
        %1540 = vmatprep.subr.mxu0 0.0
        %1541 = vmatpush2.msra.mxu0 %v1356
        %1542 = vmatprep.subr.mxu0 0.0
        %1543 = vmatpush2.msra.mxu0 %v1355
        %1544 = vmatprep.subr.mxu0 0.0
        %1545 = vmatpush2.msra.mxu0 %v1354
        %1546 = vmatprep.mubr.f32.mxu0 %v1051
        %1547 = vmatmul.mubr.f32.gmra.mxu0 %v1050
        %v1548 = vpop.f32.mrf.mxu0
        %v1549 = vadd.f32 0.0, %v1548
        %v1550 = vpop.f32.mrf.mxu0
        %1551 = vmatprep.mubr.f32.mxu0 %v1060
        %1552 = vmatmul.mubr.f32.gmra.mxu0 %v1059
        %v1553 = vpop.f32.mrf.mxu0
        %v1554 = vadd.f32 0.0, %v1553
        %v1555 = vpop.f32.mrf.mxu0
        %1556 = vmatprep.mubr.f32.mxu0 %v1069
        %1557 = vmatmul.mubr.f32.gmra.mxu0 %v1068
        %v1558 = vpop.f32.mrf.mxu0
        %v1559 = vadd.f32 0.0, %v1558
        %v1560 = vpop.f32.mrf.mxu0
        %1561 = vmatprep.mubr.f32.mxu0 %v1078
        %1562 = vmatmul.mubr.f32.gmra.mxu0 %v1077
        %v1563 = vpop.f32.mrf.mxu0
        %v1564 = vadd.f32 0.0, %v1563
        %v1565 = vpop.f32.mrf.mxu0
        %1566 = vmatprep.mubr.f32.mxu0 %v1087
        %1567 = vmatmul.mubr.f32.gmra.mxu0 %v1086
        %v1568 = vpop.f32.mrf.mxu0
        %v1569 = vadd.f32 0.0, %v1568
        %v1570 = vpop.f32.mrf.mxu0
        %1571 = vmatprep.mubr.f32.mxu0 %v1096
        %1572 = vmatmul.mubr.f32.gmra.mxu0 %v1095
        %v1573 = vpop.f32.mrf.mxu0
        %v1574 = vadd.f32 0.0, %v1573
        %v1575 = vpop.f32.mrf.mxu0
        %1576 = vmatprep.mubr.f32.mxu0 %v1105
        %1577 = vmatmul.mubr.f32.gmra.mxu0 %v1104
        %v1578 = vpop.f32.mrf.mxu0
        %v1579 = vadd.f32 0.0, %v1578
        %v1580 = vpop.f32.mrf.mxu0
        %1581 = vmatprep.mubr.f32.mxu0 %v1114
        %1582 = vmatmul.mubr.f32.gmra.mxu0 %v1113
        %v1583 = vpop.f32.mrf.mxu0
        %v1584 = vadd.f32 0.0, %v1583
        %v1585 = vpop.f32.mrf.mxu0
        %1586 = vmatprep.mubr.f32.mxu0 %v1123
        %1587 = vmatmul.mubr.f32.gmra.mxu0 %v1122
        %v1588 = vpop.f32.mrf.mxu0
        %v1589 = vadd.f32 0.0, %v1588
        %v1590 = vpop.f32.mrf.mxu0
        %1591 = vmatprep.mubr.f32.mxu0 %v1132
        %1592 = vmatmul.mubr.f32.gmra.mxu0 %v1131
        %v1593 = vpop.f32.mrf.mxu0
        %v1594 = vadd.f32 0.0, %v1593
        %v1595 = vpop.f32.mrf.mxu0
        %1596 = vmatprep.mubr.f32.mxu0 %v1141
        %1597 = vmatmul.mubr.f32.gmra.mxu0 %v1140
        %v1598 = vpop.f32.mrf.mxu0
        %v1599 = vadd.f32 0.0, %v1598
        %v1600 = vpop.f32.mrf.mxu0
        %1601 = vmatprep.mubr.f32.mxu0 %v1150
        %1602 = vmatmul.mubr.f32.gmra.mxu0 %v1149
        %v1603 = vpop.f32.mrf.mxu0
        %v1604 = vadd.f32 0.0, %v1603
        %v1605 = vpop.f32.mrf.mxu0
        %1606 = vmatprep.mubr.f32.mxu0 %v1159
        %1607 = vmatmul.mubr.f32.gmra.mxu0 %v1158
        %v1608 = vpop.f32.mrf.mxu0
        %v1609 = vadd.f32 0.0, %v1608
        %v1610 = vpop.f32.mrf.mxu0
        %1611 = vmatprep.mubr.f32.mxu0 %v1168
        %1612 = vmatmul.mubr.f32.gmra.mxu0 %v1167
        %v1613 = vpop.f32.mrf.mxu0
        %v1614 = vadd.f32 0.0, %v1613
        %v1615 = vpop.f32.mrf.mxu0
        %1616 = vmatprep.mubr.f32.mxu0 %v1177
        %1617 = vmatmul.mubr.f32.gmra.mxu0 %v1176
        %v1618 = vpop.f32.mrf.mxu0
        %v1619 = vadd.f32 0.0, %v1618
        %v1620 = vpop.f32.mrf.mxu0
        %1621 = vmatprep.mubr.f32.mxu0 %v1186
        %1622 = vmatmul.mubr.f32.gmra.mxu0 %v1185
        %v1623 = vpop.f32.mrf.mxu0
        %v1624 = vadd.f32 0.0, %v1623
        %v1625 = vpop.f32.mrf.mxu0
        %1626 = vmatprep.mubr.f32.mxu0 %v1195
        %1627 = vmatmul.mubr.f32.gmra.mxu0 %v1194
        %v1628 = vpop.f32.mrf.mxu0
        %v1629 = vadd.f32 0.0, %v1628
        %v1630 = vpop.f32.mrf.mxu0
        %1631 = vmatprep.mubr.f32.mxu0 %v1204
        %1632 = vmatmul.mubr.f32.gmra.mxu0 %v1203
        %v1633 = vpop.f32.mrf.mxu0
        %v1634 = vadd.f32 0.0, %v1633
        %v1635 = vpop.f32.mrf.mxu0
        %1636 = vmatprep.mubr.f32.mxu0 %v1213
        %1637 = vmatmul.mubr.f32.gmra.mxu0 %v1212
        %v1638 = vpop.f32.mrf.mxu0
        %v1639 = vadd.f32 0.0, %v1638
        %v1640 = vpop.f32.mrf.mxu0
        %1641 = vmatprep.mubr.f32.mxu0 %v1222
        %1642 = vmatmul.mubr.f32.gmra.mxu0 %v1221
        %v1643 = vpop.f32.mrf.mxu0
        %v1644 = vadd.f32 0.0, %v1643
        %v1645 = vpop.f32.mrf.mxu0
        %1646 = vmatprep.mubr.f32.mxu0 %v1231
        %1647 = vmatmul.mubr.f32.gmra.mxu0 %v1230
        %v1648 = vpop.f32.mrf.mxu0
        %v1649 = vadd.f32 0.0, %v1648
        %v1650 = vpop.f32.mrf.mxu0
        %1651 = vmatprep.mubr.f32.mxu0 %v1240
        %1652 = vmatmul.mubr.f32.gmra.mxu0 %v1239
        %v1653 = vpop.f32.mrf.mxu0
        %v1654 = vadd.f32 0.0, %v1653
        %v1655 = vpop.f32.mrf.mxu0
        %1656 = vmatprep.mubr.f32.mxu0 %v1249
        %1657 = vmatmul.mubr.f32.gmra.mxu0 %v1248
        %v1658 = vpop.f32.mrf.mxu0
        %v1659 = vadd.f32 0.0, %v1658
        %v1660 = vpop.f32.mrf.mxu0
        %1661 = vmatprep.mubr.f32.mxu0 %v1258
        %1662 = vmatmul.mubr.f32.gmra.mxu0 %v1257
        %v1663 = vpop.f32.mrf.mxu0
        %v1664 = vadd.f32 0.0, %v1663
        %v1665 = vpop.f32.mrf.mxu0
        %1666 = vmatprep.mubr.f32.mxu0 %v1267
        %1667 = vmatmul.mubr.f32.gmra.mxu0 %v1266
        %v1668 = vpop.f32.mrf.mxu0
        %v1669 = vadd.f32 0.0, %v1668
        %v1670 = vpop.f32.mrf.mxu0
        %1671 = vmatprep.mubr.f32.mxu0 %v1276
        %1672 = vmatmul.mubr.f32.gmra.mxu0 %v1275
        %v1673 = vpop.f32.mrf.mxu0
        %v1674 = vadd.f32 0.0, %v1673
        %v1675 = vpop.f32.mrf.mxu0
        %1676 = vmatprep.mubr.f32.mxu0 %v1285
        %1677 = vmatmul.mubr.f32.gmra.mxu0 %v1284
        %v1678 = vpop.f32.mrf.mxu0
        %v1679 = vadd.f32 0.0, %v1678
        %v1680 = vpop.f32.mrf.mxu0
        %1681 = vmatprep.mubr.f32.mxu0 %v1294
        %1682 = vmatmul.mubr.f32.gmra.mxu0 %v1293
        %v1683 = vpop.f32.mrf.mxu0
        %v1684 = vadd.f32 0.0, %v1683
        %v1685 = vpop.f32.mrf.mxu0
        %1686 = vmatprep.mubr.f32.mxu0 %v1303
        %1687 = vmatmul.mubr.f32.gmra.mxu0 %v1302
        %v1688 = vpop.f32.mrf.mxu0
        %v1689 = vadd.f32 0.0, %v1688
        %v1690 = vpop.f32.mrf.mxu0
        %1691 = vmatprep.mubr.f32.mxu0 %v1312
        %1692 = vmatmul.mubr.f32.gmra.mxu0 %v1311
        %v1693 = vpop.f32.mrf.mxu0
        %v1694 = vadd.f32 0.0, %v1693
        %v1695 = vpop.f32.mrf.mxu0
        %1696 = vmatprep.mubr.f32.mxu0 %v1321
        %1697 = vmatmul.mubr.f32.gmra.mxu0 %v1320
        %v1698 = vpop.f32.mrf.mxu0
        %v1699 = vadd.f32 0.0, %v1698
        %v1700 = vpop.f32.mrf.mxu0
        %1701 = vmatprep.mubr.f32.mxu0 %v1330
        %1702 = vmatmul.mubr.f32.gmra.mxu0 %v1329
        %v1703 = vpop.f32.mrf.mxu0
        %v1704 = vadd.f32 0.0, %v1703
        %v1705 = vpop.f32.mrf.mxu0
        %1706 = vdwg.mxu0
        %1707 = vmatprep.subr.mxu0 0.0
        %1708 = vmatpush1.msra.mxu0 %v1385
        %1709 = vmatprep.subr.mxu0 0.0
        %1710 = vmatpush1.msra.mxu0 %v1384
        %1711 = vmatprep.subr.mxu0 0.0
        %1712 = vmatpush1.msra.mxu0 %v1383
        %1713 = vmatprep.subr.mxu0 0.0
        %1714 = vmatpush1.msra.mxu0 %v1382
        %1715 = vmatprep.subr.mxu0 0.0
        %1716 = vmatpush1.msra.mxu0 %v1381
        %1717 = vmatprep.subr.mxu0 0.0
        %1718 = vmatpush1.msra.mxu0 %v1380
        %1719 = vmatprep.subr.mxu0 0.0
        %1720 = vmatpush1.msra.mxu0 %v1379
        %1721 = vmatprep.subr.mxu0 0.0
        %1722 = vmatpush1.msra.mxu0 %v1378
        %1723 = vmatprep.subr.mxu0 0.0
        %1724 = vmatpush1.msra.mxu0 %v1377
        %1725 = vmatprep.subr.mxu0 0.0
        %1726 = vmatpush1.msra.mxu0 %v1376
        %1727 = vmatprep.subr.mxu0 0.0
        %1728 = vmatpush1.msra.mxu0 %v1375
        %1729 = vmatprep.subr.mxu0 0.0
        %1730 = vmatpush1.msra.mxu0 %v1374
        %1731 = vmatprep.subr.mxu0 0.0
        %1732 = vmatpush1.msra.mxu0 %v1373
        %1733 = vmatprep.subr.mxu0 0.0
        %1734 = vmatpush1.msra.mxu0 %v1372
        %1735 = vmatprep.subr.mxu0 0.0
        %1736 = vmatpush1.msra.mxu0 %v1371
        %1737 = vmatprep.subr.mxu0 0.0
        %1738 = vmatpush1.msra.mxu0 %v1370
        %1739 = vmatprep.subr.mxu0 0.0
        %1740 = vmatpush2.msra.mxu0 %v1401
        %1741 = vmatprep.subr.mxu0 0.0
        %1742 = vmatpush2.msra.mxu0 %v1400
        %1743 = vmatprep.subr.mxu0 0.0
        %1744 = vmatpush2.msra.mxu0 %v1399
        %1745 = vmatprep.subr.mxu0 0.0
        %1746 = vmatpush2.msra.mxu0 %v1398
        %1747 = vmatprep.subr.mxu0 0.0
        %1748 = vmatpush2.msra.mxu0 %v1397
        %1749 = vmatprep.subr.mxu0 0.0
        %1750 = vmatpush2.msra.mxu0 %v1396
        %1751 = vmatprep.subr.mxu0 0.0
        %1752 = vmatpush2.msra.mxu0 %v1395
        %1753 = vmatprep.subr.mxu0 0.0
        %1754 = vmatpush2.msra.mxu0 %v1394
        %1755 = vmatprep.subr.mxu0 0.0
        %1756 = vmatpush2.msra.mxu0 %v1393
        %1757 = vmatprep.subr.mxu0 0.0
        %1758 = vmatpush2.msra.mxu0 %v1392
        %1759 = vmatprep.subr.mxu0 0.0
        %1760 = vmatpush2.msra.mxu0 %v1391
        %1761 = vmatprep.subr.mxu0 0.0
        %1762 = vmatpush2.msra.mxu0 %v1390
        %1763 = vmatprep.subr.mxu0 0.0
        %1764 = vmatpush2.msra.mxu0 %v1389
        %1765 = vmatprep.subr.mxu0 0.0
        %1766 = vmatpush2.msra.mxu0 %v1388
        %1767 = vmatprep.subr.mxu0 0.0
        %1768 = vmatpush2.msra.mxu0 %v1387
        %1769 = vmatprep.subr.mxu0 0.0
        %1770 = vmatpush2.msra.mxu0 %v1386
        %1771 = vmatprep.mubr.f32.mxu0 %v1053
        %1772 = vmatmul.mubr.f32.gmra.mxu0 %v1052
        %v1773 = vpop.f32.mrf.mxu0
        %v1774 = vadd.f32 %v1549, %v1773
        %v1775 = vpop.f32.mrf.mxu0
        %1776 = vmatprep.mubr.f32.mxu0 %v1062
        %1777 = vmatmul.mubr.f32.gmra.mxu0 %v1061
        %v1778 = vpop.f32.mrf.mxu0
        %v1779 = vadd.f32 %v1554, %v1778
        %v1780 = vpop.f32.mrf.mxu0
        %1781 = vmatprep.mubr.f32.mxu0 %v1071
        %1782 = vmatmul.mubr.f32.gmra.mxu0 %v1070
        %v1783 = vpop.f32.mrf.mxu0
        %v1784 = vadd.f32 %v1559, %v1783
        %v1785 = vpop.f32.mrf.mxu0
        %1786 = vmatprep.mubr.f32.mxu0 %v1080
        %1787 = vmatmul.mubr.f32.gmra.mxu0 %v1079
        %v1788 = vpop.f32.mrf.mxu0
        %v1789 = vadd.f32 %v1564, %v1788
        %v1790 = vpop.f32.mrf.mxu0
        %1791 = vmatprep.mubr.f32.mxu0 %v1089
        %1792 = vmatmul.mubr.f32.gmra.mxu0 %v1088
        %v1793 = vpop.f32.mrf.mxu0
        %v1794 = vadd.f32 %v1569, %v1793
        %v1795 = vpop.f32.mrf.mxu0
        %1796 = vmatprep.mubr.f32.mxu0 %v1098
        %1797 = vmatmul.mubr.f32.gmra.mxu0 %v1097
        %v1798 = vpop.f32.mrf.mxu0
        %v1799 = vadd.f32 %v1574, %v1798
        %v1800 = vpop.f32.mrf.mxu0
        %1801 = vmatprep.mubr.f32.mxu0 %v1107
        %1802 = vmatmul.mubr.f32.gmra.mxu0 %v1106
        %v1803 = vpop.f32.mrf.mxu0
        %v1804 = vadd.f32 %v1579, %v1803
        %v1805 = vpop.f32.mrf.mxu0
        %1806 = vmatprep.mubr.f32.mxu0 %v1116
        %1807 = vmatmul.mubr.f32.gmra.mxu0 %v1115
        %v1808 = vpop.f32.mrf.mxu0
        %v1809 = vadd.f32 %v1584, %v1808
        %v1810 = vpop.f32.mrf.mxu0
        %1811 = vmatprep.mubr.f32.mxu0 %v1125
        %1812 = vmatmul.mubr.f32.gmra.mxu0 %v1124
        %v1813 = vpop.f32.mrf.mxu0
        %v1814 = vadd.f32 %v1589, %v1813
        %v1815 = vpop.f32.mrf.mxu0
        %1816 = vmatprep.mubr.f32.mxu0 %v1134
        %1817 = vmatmul.mubr.f32.gmra.mxu0 %v1133
        %v1818 = vpop.f32.mrf.mxu0
        %v1819 = vadd.f32 %v1594, %v1818
        %v1820 = vpop.f32.mrf.mxu0
        %1821 = vmatprep.mubr.f32.mxu0 %v1143
        %1822 = vmatmul.mubr.f32.gmra.mxu0 %v1142
        %v1823 = vpop.f32.mrf.mxu0
        %v1824 = vadd.f32 %v1599, %v1823
        %v1825 = vpop.f32.mrf.mxu0
        %1826 = vmatprep.mubr.f32.mxu0 %v1152
        %1827 = vmatmul.mubr.f32.gmra.mxu0 %v1151
        %v1828 = vpop.f32.mrf.mxu0
        %v1829 = vadd.f32 %v1604, %v1828
        %v1830 = vpop.f32.mrf.mxu0
        %1831 = vmatprep.mubr.f32.mxu0 %v1161
        %1832 = vmatmul.mubr.f32.gmra.mxu0 %v1160
        %v1833 = vpop.f32.mrf.mxu0
        %v1834 = vadd.f32 %v1609, %v1833
        %v1835 = vpop.f32.mrf.mxu0
        %1836 = vmatprep.mubr.f32.mxu0 %v1170
        %1837 = vmatmul.mubr.f32.gmra.mxu0 %v1169
        %v1838 = vpop.f32.mrf.mxu0
        %v1839 = vadd.f32 %v1614, %v1838
        %v1840 = vpop.f32.mrf.mxu0
        %1841 = vmatprep.mubr.f32.mxu0 %v1179
        %1842 = vmatmul.mubr.f32.gmra.mxu0 %v1178
        %v1843 = vpop.f32.mrf.mxu0
        %v1844 = vadd.f32 %v1619, %v1843
        %v1845 = vpop.f32.mrf.mxu0
        %1846 = vmatprep.mubr.f32.mxu0 %v1188
        %1847 = vmatmul.mubr.f32.gmra.mxu0 %v1187
        %v1848 = vpop.f32.mrf.mxu0
        %v1849 = vadd.f32 %v1624, %v1848
        %v1850 = vpop.f32.mrf.mxu0
        %1851 = vmatprep.mubr.f32.mxu0 %v1197
        %1852 = vmatmul.mubr.f32.gmra.mxu0 %v1196
        %v1853 = vpop.f32.mrf.mxu0
        %v1854 = vadd.f32 %v1629, %v1853
        %v1855 = vpop.f32.mrf.mxu0
        %1856 = vmatprep.mubr.f32.mxu0 %v1206
        %1857 = vmatmul.mubr.f32.gmra.mxu0 %v1205
        %v1858 = vpop.f32.mrf.mxu0
        %v1859 = vadd.f32 %v1634, %v1858
        %v1860 = vpop.f32.mrf.mxu0
        %1861 = vmatprep.mubr.f32.mxu0 %v1215
        %1862 = vmatmul.mubr.f32.gmra.mxu0 %v1214
        %v1863 = vpop.f32.mrf.mxu0
        %v1864 = vadd.f32 %v1639, %v1863
        %v1865 = vpop.f32.mrf.mxu0
        %1866 = vmatprep.mubr.f32.mxu0 %v1224
        %1867 = vmatmul.mubr.f32.gmra.mxu0 %v1223
        %v1868 = vpop.f32.mrf.mxu0
        %v1869 = vadd.f32 %v1644, %v1868
        %v1870 = vpop.f32.mrf.mxu0
        %1871 = vmatprep.mubr.f32.mxu0 %v1233
        %1872 = vmatmul.mubr.f32.gmra.mxu0 %v1232
        %v1873 = vpop.f32.mrf.mxu0
        %v1874 = vadd.f32 %v1649, %v1873
        %v1875 = vpop.f32.mrf.mxu0
        %1876 = vmatprep.mubr.f32.mxu0 %v1242
        %1877 = vmatmul.mubr.f32.gmra.mxu0 %v1241
        %v1878 = vpop.f32.mrf.mxu0
        %v1879 = vadd.f32 %v1654, %v1878
        %v1880 = vpop.f32.mrf.mxu0
        %1881 = vmatprep.mubr.f32.mxu0 %v1251
        %1882 = vmatmul.mubr.f32.gmra.mxu0 %v1250
        %v1883 = vpop.f32.mrf.mxu0
        %v1884 = vadd.f32 %v1659, %v1883
        %v1885 = vpop.f32.mrf.mxu0
        %1886 = vmatprep.mubr.f32.mxu0 %v1260
        %1887 = vmatmul.mubr.f32.gmra.mxu0 %v1259
        %v1888 = vpop.f32.mrf.mxu0
        %v1889 = vadd.f32 %v1664, %v1888
        %v1890 = vpop.f32.mrf.mxu0
        %1891 = vmatprep.mubr.f32.mxu0 %v1269
        %1892 = vmatmul.mubr.f32.gmra.mxu0 %v1268
        %v1893 = vpop.f32.mrf.mxu0
        %v1894 = vadd.f32 %v1669, %v1893
        %v1895 = vpop.f32.mrf.mxu0
        %1896 = vmatprep.mubr.f32.mxu0 %v1278
        %1897 = vmatmul.mubr.f32.gmra.mxu0 %v1277
        %v1898 = vpop.f32.mrf.mxu0
        %v1899 = vadd.f32 %v1674, %v1898
        %v1900 = vpop.f32.mrf.mxu0
        %1901 = vmatprep.mubr.f32.mxu0 %v1287
        %1902 = vmatmul.mubr.f32.gmra.mxu0 %v1286
        %v1903 = vpop.f32.mrf.mxu0
        %v1904 = vadd.f32 %v1679, %v1903
        %v1905 = vpop.f32.mrf.mxu0
        %1906 = vmatprep.mubr.f32.mxu0 %v1296
        %1907 = vmatmul.mubr.f32.gmra.mxu0 %v1295
        %v1908 = vpop.f32.mrf.mxu0
        %v1909 = vadd.f32 %v1684, %v1908
        %v1910 = vpop.f32.mrf.mxu0
        %1911 = vmatprep.mubr.f32.mxu0 %v1305
        %1912 = vmatmul.mubr.f32.gmra.mxu0 %v1304
        %v1913 = vpop.f32.mrf.mxu0
        %v1914 = vadd.f32 %v1689, %v1913
        %v1915 = vpop.f32.mrf.mxu0
        %1916 = vmatprep.mubr.f32.mxu0 %v1314
        %1917 = vmatmul.mubr.f32.gmra.mxu0 %v1313
        %v1918 = vpop.f32.mrf.mxu0
        %v1919 = vadd.f32 %v1694, %v1918
        %v1920 = vpop.f32.mrf.mxu0
        %1921 = vmatprep.mubr.f32.mxu0 %v1323
        %1922 = vmatmul.mubr.f32.gmra.mxu0 %v1322
        %v1923 = vpop.f32.mrf.mxu0
        %v1924 = vadd.f32 %v1699, %v1923
        %v1925 = vpop.f32.mrf.mxu0
        %1926 = vmatprep.mubr.f32.mxu0 %v1332
        %1927 = vmatmul.mubr.f32.gmra.mxu0 %v1331
        %v1928 = vpop.f32.mrf.mxu0
        %v1929 = vadd.f32 %v1704, %v1928
        %v1930 = vpop.f32.mrf.mxu0
        %1931 = vdwg.mxu0
        %1932 = vmatprep.subr.mxu0 0.0
        %1933 = vmatpush1.msra.mxu0 %v1417
        %1934 = vmatprep.subr.mxu0 0.0
        %1935 = vmatpush1.msra.mxu0 %v1416
        %1936 = vmatprep.subr.mxu0 0.0
        %1937 = vmatpush1.msra.mxu0 %v1415
        %1938 = vmatprep.subr.mxu0 0.0
        %1939 = vmatpush1.msra.mxu0 %v1414
        %1940 = vmatprep.subr.mxu0 0.0
        %1941 = vmatpush1.msra.mxu0 %v1413
        %1942 = vmatprep.subr.mxu0 0.0
        %1943 = vmatpush1.msra.mxu0 %v1412
        %1944 = vmatprep.subr.mxu0 0.0
        %1945 = vmatpush1.msra.mxu0 %v1411
        %1946 = vmatprep.subr.mxu0 0.0
        %1947 = vmatpush1.msra.mxu0 %v1410
        %1948 = vmatprep.subr.mxu0 0.0
        %1949 = vmatpush1.msra.mxu0 %v1409
        %1950 = vmatprep.subr.mxu0 0.0
        %1951 = vmatpush1.msra.mxu0 %v1408
        %1952 = vmatprep.subr.mxu0 0.0
        %1953 = vmatpush1.msra.mxu0 %v1407
        %1954 = vmatprep.subr.mxu0 0.0
        %1955 = vmatpush1.msra.mxu0 %v1406
        %1956 = vmatprep.subr.mxu0 0.0
        %1957 = vmatpush1.msra.mxu0 %v1405
        %1958 = vmatprep.subr.mxu0 0.0
        %1959 = vmatpush1.msra.mxu0 %v1404
        %1960 = vmatprep.subr.mxu0 0.0
        %1961 = vmatpush1.msra.mxu0 %v1403
        %1962 = vmatprep.subr.mxu0 0.0
        %1963 = vmatpush1.msra.mxu0 %v1402
        %1964 = vmatprep.subr.mxu0 0.0
        %1965 = vmatpush2.msra.mxu0 %v1433
        %1966 = vmatprep.subr.mxu0 0.0
        %1967 = vmatpush2.msra.mxu0 %v1432
        %1968 = vmatprep.subr.mxu0 0.0
        %1969 = vmatpush2.msra.mxu0 %v1431
        %1970 = vmatprep.subr.mxu0 0.0
        %1971 = vmatpush2.msra.mxu0 %v1430
        %1972 = vmatprep.subr.mxu0 0.0
        %1973 = vmatpush2.msra.mxu0 %v1429
        %1974 = vmatprep.subr.mxu0 0.0
        %1975 = vmatpush2.msra.mxu0 %v1428
        %1976 = vmatprep.subr.mxu0 0.0
        %1977 = vmatpush2.msra.mxu0 %v1427
        %1978 = vmatprep.subr.mxu0 0.0
        %1979 = vmatpush2.msra.mxu0 %v1426
        %1980 = vmatprep.subr.mxu0 0.0
        %1981 = vmatpush2.msra.mxu0 %v1425
        %1982 = vmatprep.subr.mxu0 0.0
        %1983 = vmatpush2.msra.mxu0 %v1424
        %1984 = vmatprep.subr.mxu0 0.0
        %1985 = vmatpush2.msra.mxu0 %v1423
        %1986 = vmatprep.subr.mxu0 0.0
        %1987 = vmatpush2.msra.mxu0 %v1422
        %1988 = vmatprep.subr.mxu0 0.0
        %1989 = vmatpush2.msra.mxu0 %v1421
        %1990 = vmatprep.subr.mxu0 0.0
        %1991 = vmatpush2.msra.mxu0 %v1420
        %1992 = vmatprep.subr.mxu0 0.0
        %1993 = vmatpush2.msra.mxu0 %v1419
        %1994 = vmatprep.subr.mxu0 0.0
        %1995 = vmatpush2.msra.mxu0 %v1418
        %1996 = vmatprep.mubr.f32.mxu0 %v1055
        %1997 = vmatmul.mubr.f32.gmra.mxu0 %v1054
        %v1998 = vpop.f32.mrf.mxu0
        %v1999 = vadd.f32 %v1774, %v1998
        %v2000 = vpop.f32.mrf.mxu0
        %2001 = vmatprep.mubr.f32.mxu0 %v1064
        %2002 = vmatmul.mubr.f32.gmra.mxu0 %v1063
        %v2003 = vpop.f32.mrf.mxu0
        %v2004 = vadd.f32 %v1779, %v2003
        %v2005 = vpop.f32.mrf.mxu0
        %2006 = vmatprep.mubr.f32.mxu0 %v1073
        %2007 = vmatmul.mubr.f32.gmra.mxu0 %v1072
        %v2008 = vpop.f32.mrf.mxu0
        %v2009 = vadd.f32 %v1784, %v2008
        %v2010 = vpop.f32.mrf.mxu0
        %2011 = vmatprep.mubr.f32.mxu0 %v1082
        %2012 = vmatmul.mubr.f32.gmra.mxu0 %v1081
        %v2013 = vpop.f32.mrf.mxu0
        %v2014 = vadd.f32 %v1789, %v2013
        %v2015 = vpop.f32.mrf.mxu0
        %2016 = vmatprep.mubr.f32.mxu0 %v1091
        %2017 = vmatmul.mubr.f32.gmra.mxu0 %v1090
        %v2018 = vpop.f32.mrf.mxu0
        %v2019 = vadd.f32 %v1794, %v2018
        %v2020 = vpop.f32.mrf.mxu0
        %2021 = vmatprep.mubr.f32.mxu0 %v1100
        %2022 = vmatmul.mubr.f32.gmra.mxu0 %v1099
        %v2023 = vpop.f32.mrf.mxu0
        %v2024 = vadd.f32 %v1799, %v2023
        %v2025 = vpop.f32.mrf.mxu0
        %2026 = vmatprep.mubr.f32.mxu0 %v1109
        %2027 = vmatmul.mubr.f32.gmra.mxu0 %v1108
        %v2028 = vpop.f32.mrf.mxu0
        %v2029 = vadd.f32 %v1804, %v2028
        %v2030 = vpop.f32.mrf.mxu0
        %2031 = vmatprep.mubr.f32.mxu0 %v1118
        %2032 = vmatmul.mubr.f32.gmra.mxu0 %v1117
        %v2033 = vpop.f32.mrf.mxu0
        %v2034 = vadd.f32 %v1809, %v2033
        %v2035 = vpop.f32.mrf.mxu0
        %2036 = vmatprep.mubr.f32.mxu0 %v1127
        %2037 = vmatmul.mubr.f32.gmra.mxu0 %v1126
        %v2038 = vpop.f32.mrf.mxu0
        %v2039 = vadd.f32 %v1814, %v2038
        %v2040 = vpop.f32.mrf.mxu0
        %2041 = vmatprep.mubr.f32.mxu0 %v1136
        %2042 = vmatmul.mubr.f32.gmra.mxu0 %v1135
        %v2043 = vpop.f32.mrf.mxu0
        %v2044 = vadd.f32 %v1819, %v2043
        %v2045 = vpop.f32.mrf.mxu0
        %2046 = vmatprep.mubr.f32.mxu0 %v1145
        %2047 = vmatmul.mubr.f32.gmra.mxu0 %v1144
        %v2048 = vpop.f32.mrf.mxu0
        %v2049 = vadd.f32 %v1824, %v2048
        %v2050 = vpop.f32.mrf.mxu0
        %2051 = vmatprep.mubr.f32.mxu0 %v1154
        %2052 = vmatmul.mubr.f32.gmra.mxu0 %v1153
        %v2053 = vpop.f32.mrf.mxu0
        %v2054 = vadd.f32 %v1829, %v2053
        %v2055 = vpop.f32.mrf.mxu0
        %2056 = vmatprep.mubr.f32.mxu0 %v1163
        %2057 = vmatmul.mubr.f32.gmra.mxu0 %v1162
        %v2058 = vpop.f32.mrf.mxu0
        %v2059 = vadd.f32 %v1834, %v2058
        %v2060 = vpop.f32.mrf.mxu0
        %2061 = vmatprep.mubr.f32.mxu0 %v1172
        %2062 = vmatmul.mubr.f32.gmra.mxu0 %v1171
        %v2063 = vpop.f32.mrf.mxu0
        %v2064 = vadd.f32 %v1839, %v2063
        %v2065 = vpop.f32.mrf.mxu0
        %2066 = vmatprep.mubr.f32.mxu0 %v1181
        %2067 = vmatmul.mubr.f32.gmra.mxu0 %v1180
        %v2068 = vpop.f32.mrf.mxu0
        %v2069 = vadd.f32 %v1844, %v2068
        %v2070 = vpop.f32.mrf.mxu0
        %2071 = vmatprep.mubr.f32.mxu0 %v1190
        %2072 = vmatmul.mubr.f32.gmra.mxu0 %v1189
        %v2073 = vpop.f32.mrf.mxu0
        %v2074 = vadd.f32 %v1849, %v2073
        %v2075 = vpop.f32.mrf.mxu0
        %2076 = vmatprep.mubr.f32.mxu0 %v1199
        %2077 = vmatmul.mubr.f32.gmra.mxu0 %v1198
        %v2078 = vpop.f32.mrf.mxu0
        %v2079 = vadd.f32 %v1854, %v2078
        %v2080 = vpop.f32.mrf.mxu0
        %2081 = vmatprep.mubr.f32.mxu0 %v1208
        %2082 = vmatmul.mubr.f32.gmra.mxu0 %v1207
        %v2083 = vpop.f32.mrf.mxu0
        %v2084 = vadd.f32 %v1859, %v2083
        %v2085 = vpop.f32.mrf.mxu0
        %2086 = vmatprep.mubr.f32.mxu0 %v1217
        %2087 = vmatmul.mubr.f32.gmra.mxu0 %v1216
        %v2088 = vpop.f32.mrf.mxu0
        %v2089 = vadd.f32 %v1864, %v2088
        %v2090 = vpop.f32.mrf.mxu0
        %2091 = vmatprep.mubr.f32.mxu0 %v1226
        %2092 = vmatmul.mubr.f32.gmra.mxu0 %v1225
        %v2093 = vpop.f32.mrf.mxu0
        %v2094 = vadd.f32 %v1869, %v2093
        %v2095 = vpop.f32.mrf.mxu0
        %2096 = vmatprep.mubr.f32.mxu0 %v1235
        %2097 = vmatmul.mubr.f32.gmra.mxu0 %v1234
        %v2098 = vpop.f32.mrf.mxu0
        %v2099 = vadd.f32 %v1874, %v2098
        %v2100 = vpop.f32.mrf.mxu0
        %2101 = vmatprep.mubr.f32.mxu0 %v1244
        %2102 = vmatmul.mubr.f32.gmra.mxu0 %v1243
        %v2103 = vpop.f32.mrf.mxu0
        %v2104 = vadd.f32 %v1879, %v2103
        %v2105 = vpop.f32.mrf.mxu0
        %2106 = vmatprep.mubr.f32.mxu0 %v1253
        %2107 = vmatmul.mubr.f32.gmra.mxu0 %v1252
        %v2108 = vpop.f32.mrf.mxu0
        %v2109 = vadd.f32 %v1884, %v2108
        %v2110 = vpop.f32.mrf.mxu0
        %2111 = vmatprep.mubr.f32.mxu0 %v1262
        %2112 = vmatmul.mubr.f32.gmra.mxu0 %v1261
        %v2113 = vpop.f32.mrf.mxu0
        %v2114 = vadd.f32 %v1889, %v2113
        %v2115 = vpop.f32.mrf.mxu0
        %2116 = vmatprep.mubr.f32.mxu0 %v1271
        %2117 = vmatmul.mubr.f32.gmra.mxu0 %v1270
        %v2118 = vpop.f32.mrf.mxu0
        %v2119 = vadd.f32 %v1894, %v2118
        %v2120 = vpop.f32.mrf.mxu0
        %2121 = vmatprep.mubr.f32.mxu0 %v1280
        %2122 = vmatmul.mubr.f32.gmra.mxu0 %v1279
        %v2123 = vpop.f32.mrf.mxu0
        %v2124 = vadd.f32 %v1899, %v2123
        %v2125 = vpop.f32.mrf.mxu0
        %2126 = vmatprep.mubr.f32.mxu0 %v1289
        %2127 = vmatmul.mubr.f32.gmra.mxu0 %v1288
        %v2128 = vpop.f32.mrf.mxu0
        %v2129 = vadd.f32 %v1904, %v2128
        %v2130 = vpop.f32.mrf.mxu0
        %2131 = vmatprep.mubr.f32.mxu0 %v1298
        %2132 = vmatmul.mubr.f32.gmra.mxu0 %v1297
        %v2133 = vpop.f32.mrf.mxu0
        %v2134 = vadd.f32 %v1909, %v2133
        %v2135 = vpop.f32.mrf.mxu0
        %2136 = vmatprep.mubr.f32.mxu0 %v1307
        %2137 = vmatmul.mubr.f32.gmra.mxu0 %v1306
        %v2138 = vpop.f32.mrf.mxu0
        %v2139 = vadd.f32 %v1914, %v2138
        %v2140 = vpop.f32.mrf.mxu0
        %2141 = vmatprep.mubr.f32.mxu0 %v1316
        %2142 = vmatmul.mubr.f32.gmra.mxu0 %v1315
        %v2143 = vpop.f32.mrf.mxu0
        %v2144 = vadd.f32 %v1919, %v2143
        %v2145 = vpop.f32.mrf.mxu0
        %2146 = vmatprep.mubr.f32.mxu0 %v1325
        %2147 = vmatmul.mubr.f32.gmra.mxu0 %v1324
        %v2148 = vpop.f32.mrf.mxu0
        %v2149 = vadd.f32 %v1924, %v2148
        %v2150 = vpop.f32.mrf.mxu0
        %2151 = vmatprep.mubr.f32.mxu0 %v1334
        %2152 = vmatmul.mubr.f32.gmra.mxu0 %v1333
        %v2153 = vpop.f32.mrf.mxu0
        %v2154 = vadd.f32 %v1929, %v2153
        %v2155 = vpop.f32.mrf.mxu0
        %2156 = vdwg.mxu0
        %2157 = vmatprep.subr.mxu0 0.0
        %2158 = vmatpush1.msra.mxu0 %v1449
        %2159 = vmatprep.subr.mxu0 0.0
        %2160 = vmatpush1.msra.mxu0 %v1448
        %2161 = vmatprep.subr.mxu0 0.0
        %2162 = vmatpush1.msra.mxu0 %v1447
        %2163 = vmatprep.subr.mxu0 0.0
        %2164 = vmatpush1.msra.mxu0 %v1446
        %2165 = vmatprep.subr.mxu0 0.0
        %2166 = vmatpush1.msra.mxu0 %v1445
        %2167 = vmatprep.subr.mxu0 0.0
        %2168 = vmatpush1.msra.mxu0 %v1444
        %2169 = vmatprep.subr.mxu0 0.0
        %2170 = vmatpush1.msra.mxu0 %v1443
        %2171 = vmatprep.subr.mxu0 0.0
        %2172 = vmatpush1.msra.mxu0 %v1442
        %2173 = vmatprep.subr.mxu0 0.0
        %2174 = vmatpush1.msra.mxu0 %v1441
        %2175 = vmatprep.subr.mxu0 0.0
        %2176 = vmatpush1.msra.mxu0 %v1440
        %2177 = vmatprep.subr.mxu0 0.0
        %2178 = vmatpush1.msra.mxu0 %v1439
        %2179 = vmatprep.subr.mxu0 0.0
        %2180 = vmatpush1.msra.mxu0 %v1438
        %2181 = vmatprep.subr.mxu0 0.0
        %2182 = vmatpush1.msra.mxu0 %v1437
        %2183 = vmatprep.subr.mxu0 0.0
        %2184 = vmatpush1.msra.mxu0 %v1436
        %2185 = vmatprep.subr.mxu0 0.0
        %2186 = vmatpush1.msra.mxu0 %v1435
        %2187 = vmatprep.subr.mxu0 0.0
        %2188 = vmatpush1.msra.mxu0 %v1434
        %2189 = vmatprep.subr.mxu0 0.0
        %2190 = vmatpush2.msra.mxu0 %v1465
        %2191 = vmatprep.subr.mxu0 0.0
        %2192 = vmatpush2.msra.mxu0 %v1464
        %2193 = vmatprep.subr.mxu0 0.0
        %2194 = vmatpush2.msra.mxu0 %v1463
        %2195 = vmatprep.subr.mxu0 0.0
        %2196 = vmatpush2.msra.mxu0 %v1462
        %2197 = vmatprep.subr.mxu0 0.0
        %2198 = vmatpush2.msra.mxu0 %v1461
        %2199 = vmatprep.subr.mxu0 0.0
        %2200 = vmatpush2.msra.mxu0 %v1460
        %2201 = vmatprep.subr.mxu0 0.0
        %2202 = vmatpush2.msra.mxu0 %v1459
        %2203 = vmatprep.subr.mxu0 0.0
        %2204 = vmatpush2.msra.mxu0 %v1458
        %2205 = vmatprep.subr.mxu0 0.0
        %2206 = vmatpush2.msra.mxu0 %v1457
        %2207 = vmatprep.subr.mxu0 0.0
        %2208 = vmatpush2.msra.mxu0 %v1456
        %2209 = vmatprep.subr.mxu0 0.0
        %2210 = vmatpush2.msra.mxu0 %v1455
        %2211 = vmatprep.subr.mxu0 0.0
        %2212 = vmatpush2.msra.mxu0 %v1454
        %2213 = vmatprep.subr.mxu0 0.0
        %2214 = vmatpush2.msra.mxu0 %v1453
        %2215 = vmatprep.subr.mxu0 0.0
        %2216 = vmatpush2.msra.mxu0 %v1452
        %2217 = vmatprep.subr.mxu0 0.0
        %2218 = vmatpush2.msra.mxu0 %v1451
        %2219 = vmatprep.subr.mxu0 0.0
        %2220 = vmatpush2.msra.mxu0 %v1450
        %2221 = vmatprep.mubr.f32.mxu0 %v1057
        %2222 = vmatmul.mubr.f32.gmra.mxu0 %v1056
        %v2223 = vpop.f32.mrf.mxu0
        %v2224 = vadd.f32 %v1999, %v2223
        %v2225 = vpop.f32.mrf.mxu0
        %2226 = vmatprep.mubr.f32.mxu0 %v1066
        %2227 = vmatmul.mubr.f32.gmra.mxu0 %v1065
        %v2228 = vpop.f32.mrf.mxu0
        %v2229 = vadd.f32 %v2004, %v2228
        %v2230 = vpop.f32.mrf.mxu0
        %2231 = vmatprep.mubr.f32.mxu0 %v1075
        %2232 = vmatmul.mubr.f32.gmra.mxu0 %v1074
        %v2233 = vpop.f32.mrf.mxu0
        %v2234 = vadd.f32 %v2009, %v2233
        %v2235 = vpop.f32.mrf.mxu0
        %2236 = vmatprep.mubr.f32.mxu0 %v1084
        %2237 = vmatmul.mubr.f32.gmra.mxu0 %v1083
        %v2238 = vpop.f32.mrf.mxu0
        %v2239 = vadd.f32 %v2014, %v2238
        %v2240 = vpop.f32.mrf.mxu0
        %2241 = vmatprep.mubr.f32.mxu0 %v1093
        %2242 = vmatmul.mubr.f32.gmra.mxu0 %v1092
        %v2243 = vpop.f32.mrf.mxu0
        %v2244 = vadd.f32 %v2019, %v2243
        %v2245 = vpop.f32.mrf.mxu0
        %2246 = vmatprep.mubr.f32.mxu0 %v1102
        %2247 = vmatmul.mubr.f32.gmra.mxu0 %v1101
        %v2248 = vpop.f32.mrf.mxu0
        %v2249 = vadd.f32 %v2024, %v2248
        %v2250 = vpop.f32.mrf.mxu0
        %2251 = vmatprep.mubr.f32.mxu0 %v1111
        %2252 = vmatmul.mubr.f32.gmra.mxu0 %v1110
        %v2253 = vpop.f32.mrf.mxu0
        %v2254 = vadd.f32 %v2029, %v2253
        %v2255 = vpop.f32.mrf.mxu0
        %2256 = vmatprep.mubr.f32.mxu0 %v1120
        %2257 = vmatmul.mubr.f32.gmra.mxu0 %v1119
        %v2258 = vpop.f32.mrf.mxu0
        %v2259 = vadd.f32 %v2034, %v2258
        %v2260 = vpop.f32.mrf.mxu0
        %2261 = vmatprep.mubr.f32.mxu0 %v1129
        %2262 = vmatmul.mubr.f32.gmra.mxu0 %v1128
        %v2263 = vpop.f32.mrf.mxu0
        %v2264 = vadd.f32 %v2039, %v2263
        %v2265 = vpop.f32.mrf.mxu0
        %2266 = vmatprep.mubr.f32.mxu0 %v1138
        %2267 = vmatmul.mubr.f32.gmra.mxu0 %v1137
        %v2268 = vpop.f32.mrf.mxu0
        %v2269 = vadd.f32 %v2044, %v2268
        %v2270 = vpop.f32.mrf.mxu0
        %2271 = vmatprep.mubr.f32.mxu0 %v1147
        %2272 = vmatmul.mubr.f32.gmra.mxu0 %v1146
        %v2273 = vpop.f32.mrf.mxu0
        %v2274 = vadd.f32 %v2049, %v2273
        %v2275 = vpop.f32.mrf.mxu0
        %2276 = vmatprep.mubr.f32.mxu0 %v1156
        %2277 = vmatmul.mubr.f32.gmra.mxu0 %v1155
        %v2278 = vpop.f32.mrf.mxu0
        %v2279 = vadd.f32 %v2054, %v2278
        %v2280 = vpop.f32.mrf.mxu0
        %2281 = vmatprep.mubr.f32.mxu0 %v1165
        %2282 = vmatmul.mubr.f32.gmra.mxu0 %v1164
        %v2283 = vpop.f32.mrf.mxu0
        %v2284 = vadd.f32 %v2059, %v2283
        %v2285 = vpop.f32.mrf.mxu0
        %2286 = vmatprep.mubr.f32.mxu0 %v1174
        %2287 = vmatmul.mubr.f32.gmra.mxu0 %v1173
        %v2288 = vpop.f32.mrf.mxu0
        %v2289 = vadd.f32 %v2064, %v2288
        %v2290 = vpop.f32.mrf.mxu0
        %2291 = vmatprep.mubr.f32.mxu0 %v1183
        %2292 = vmatmul.mubr.f32.gmra.mxu0 %v1182
        %v2293 = vpop.f32.mrf.mxu0
        %v2294 = vadd.f32 %v2069, %v2293
        %v2295 = vpop.f32.mrf.mxu0
        %2296 = vmatprep.mubr.f32.mxu0 %v1192
        %2297 = vmatmul.mubr.f32.gmra.mxu0 %v1191
        %v2298 = vpop.f32.mrf.mxu0
        %v2299 = vadd.f32 %v2074, %v2298
        %v2300 = vpop.f32.mrf.mxu0
        %2301 = vmatprep.mubr.f32.mxu0 %v1201
        %2302 = vmatmul.mubr.f32.gmra.mxu0 %v1200
        %v2303 = vpop.f32.mrf.mxu0
        %v2304 = vadd.f32 %v2079, %v2303
        %v2305 = vpop.f32.mrf.mxu0
        %2306 = vmatprep.mubr.f32.mxu0 %v1210
        %2307 = vmatmul.mubr.f32.gmra.mxu0 %v1209
        %v2308 = vpop.f32.mrf.mxu0
        %v2309 = vadd.f32 %v2084, %v2308
        %v2310 = vpop.f32.mrf.mxu0
        %2311 = vmatprep.mubr.f32.mxu0 %v1219
        %2312 = vmatmul.mubr.f32.gmra.mxu0 %v1218
        %v2313 = vpop.f32.mrf.mxu0
        %v2314 = vadd.f32 %v2089, %v2313
        %v2315 = vpop.f32.mrf.mxu0
        %2316 = vmatprep.mubr.f32.mxu0 %v1228
        %2317 = vmatmul.mubr.f32.gmra.mxu0 %v1227
        %v2318 = vpop.f32.mrf.mxu0
        %v2319 = vadd.f32 %v2094, %v2318
        %v2320 = vpop.f32.mrf.mxu0
        %2321 = vmatprep.mubr.f32.mxu0 %v1237
        %2322 = vmatmul.mubr.f32.gmra.mxu0 %v1236
        %v2323 = vpop.f32.mrf.mxu0
        %v2324 = vadd.f32 %v2099, %v2323
        %v2325 = vpop.f32.mrf.mxu0
        %2326 = vmatprep.mubr.f32.mxu0 %v1246
        %2327 = vmatmul.mubr.f32.gmra.mxu0 %v1245
        %v2328 = vpop.f32.mrf.mxu0
        %v2329 = vadd.f32 %v2104, %v2328
        %v2330 = vpop.f32.mrf.mxu0
        %2331 = vmatprep.mubr.f32.mxu0 %v1255
        %2332 = vmatmul.mubr.f32.gmra.mxu0 %v1254
        %v2333 = vpop.f32.mrf.mxu0
        %v2334 = vadd.f32 %v2109, %v2333
        %v2335 = vpop.f32.mrf.mxu0
        %2336 = vmatprep.mubr.f32.mxu0 %v1264
        %2337 = vmatmul.mubr.f32.gmra.mxu0 %v1263
        %v2338 = vpop.f32.mrf.mxu0
        %v2339 = vadd.f32 %v2114, %v2338
        %v2340 = vpop.f32.mrf.mxu0
        %2341 = vmatprep.mubr.f32.mxu0 %v1273
        %2342 = vmatmul.mubr.f32.gmra.mxu0 %v1272
        %v2343 = vpop.f32.mrf.mxu0
        %v2344 = vadd.f32 %v2119, %v2343
        %v2345 = vpop.f32.mrf.mxu0
        %2346 = vmatprep.mubr.f32.mxu0 %v1282
        %2347 = vmatmul.mubr.f32.gmra.mxu0 %v1281
        %v2348 = vpop.f32.mrf.mxu0
        %v2349 = vadd.f32 %v2124, %v2348
        %v2350 = vpop.f32.mrf.mxu0
        %2351 = vmatprep.mubr.f32.mxu0 %v1291
        %2352 = vmatmul.mubr.f32.gmra.mxu0 %v1290
        %v2353 = vpop.f32.mrf.mxu0
        %v2354 = vadd.f32 %v2129, %v2353
        %v2355 = vpop.f32.mrf.mxu0
        %2356 = vmatprep.mubr.f32.mxu0 %v1300
        %2357 = vmatmul.mubr.f32.gmra.mxu0 %v1299
        %v2358 = vpop.f32.mrf.mxu0
        %v2359 = vadd.f32 %v2134, %v2358
        %v2360 = vpop.f32.mrf.mxu0
        %2361 = vmatprep.mubr.f32.mxu0 %v1309
        %2362 = vmatmul.mubr.f32.gmra.mxu0 %v1308
        %v2363 = vpop.f32.mrf.mxu0
        %v2364 = vadd.f32 %v2139, %v2363
        %v2365 = vpop.f32.mrf.mxu0
        %2366 = vmatprep.mubr.f32.mxu0 %v1318
        %2367 = vmatmul.mubr.f32.gmra.mxu0 %v1317
        %v2368 = vpop.f32.mrf.mxu0
        %v2369 = vadd.f32 %v2144, %v2368
        %v2370 = vpop.f32.mrf.mxu0
        %2371 = vmatprep.mubr.f32.mxu0 %v1327
        %2372 = vmatmul.mubr.f32.gmra.mxu0 %v1326
        %v2373 = vpop.f32.mrf.mxu0
        %v2374 = vadd.f32 %v2149, %v2373
        %v2375 = vpop.f32.mrf.mxu0
        %2376 = vmatprep.mubr.f32.mxu0 %v1336
        %2377 = vmatmul.mubr.f32.gmra.mxu0 %v1335
        %v2378 = vpop.f32.mrf.mxu0
        %v2379 = vadd.f32 %v2154, %v2378
        %v2380 = vpop.f32.mrf.mxu0
        %2381 = vdwg.mxu0
        %2382 = vmatprep.subr.mxu0 0.0
        %2383 = vmatpush1.msra.mxu0 %v1481
        %2384 = vmatprep.subr.mxu0 0.0
        %2385 = vmatpush1.msra.mxu0 %v1480
        %2386 = vmatprep.subr.mxu0 0.0
        %2387 = vmatpush1.msra.mxu0 %v1479
        %2388 = vmatprep.subr.mxu0 0.0
        %2389 = vmatpush1.msra.mxu0 %v1478
        %2390 = vmatprep.subr.mxu0 0.0
        %2391 = vmatpush1.msra.mxu0 %v1477
        %2392 = vmatprep.subr.mxu0 0.0
        %2393 = vmatpush1.msra.mxu0 %v1476
        %2394 = vmatprep.subr.mxu0 0.0
        %2395 = vmatpush1.msra.mxu0 %v1475
        %2396 = vmatprep.subr.mxu0 0.0
        %2397 = vmatpush1.msra.mxu0 %v1474
        %2398 = vmatprep.subr.mxu0 0.0
        %2399 = vmatpush1.msra.mxu0 %v1473
        %2400 = vmatprep.subr.mxu0 0.0
        %2401 = vmatpush1.msra.mxu0 %v1472
        %2402 = vmatprep.subr.mxu0 0.0
        %2403 = vmatpush1.msra.mxu0 %v1471
        %2404 = vmatprep.subr.mxu0 0.0
        %2405 = vmatpush1.msra.mxu0 %v1470
        %2406 = vmatprep.subr.mxu0 0.0
        %2407 = vmatpush1.msra.mxu0 %v1469
        %2408 = vmatprep.subr.mxu0 0.0
        %2409 = vmatpush1.msra.mxu0 %v1468
        %2410 = vmatprep.subr.mxu0 0.0
        %2411 = vmatpush1.msra.mxu0 %v1467
        %2412 = vmatprep.subr.mxu0 0.0
        %2413 = vmatpush1.msra.mxu0 %v1466
        %2414 = vmatprep.subr.mxu0 0.0
        %2415 = vmatpush2.msra.mxu0 0.0
        %2416 = vmatprep.subr.mxu0 0.0
        %2417 = vmatpush2.msra.mxu0 0.0
        %2418 = vmatprep.subr.mxu0 0.0
        %2419 = vmatpush2.msra.mxu0 0.0
        %2420 = vmatprep.subr.mxu0 0.0
        %2421 = vmatpush2.msra.mxu0 0.0
        %2422 = vmatprep.subr.mxu0 0.0
        %2423 = vmatpush2.msra.mxu0 0.0
        %2424 = vmatprep.subr.mxu0 0.0
        %2425 = vmatpush2.msra.mxu0 0.0
        %2426 = vmatprep.subr.mxu0 0.0
        %2427 = vmatpush2.msra.mxu0 0.0
        %2428 = vmatprep.subr.mxu0 0.0
        %2429 = vmatpush2.msra.mxu0 0.0
        %2430 = vmatprep.subr.mxu0 0.0
        %2431 = vmatpush2.msra.mxu0 0.0
        %2432 = vmatprep.subr.mxu0 0.0
        %2433 = vmatpush2.msra.mxu0 0.0
        %2434 = vmatprep.subr.mxu0 0.0
        %2435 = vmatpush2.msra.mxu0 0.0
        %2436 = vmatprep.subr.mxu0 0.0
        %2437 = vmatpush2.msra.mxu0 0.0
        %2438 = vmatprep.subr.mxu0 0.0
        %2439 = vmatpush2.msra.mxu0 0.0
        %2440 = vmatprep.subr.mxu0 0.0
        %2441 = vmatpush2.msra.mxu0 0.0
        %2442 = vmatprep.subr.mxu0 0.0
        %2443 = vmatpush2.msra.mxu0 0.0
        %2444 = vmatprep.subr.mxu0 0.0
        %2445 = vmatpush2.msra.mxu0 0.0
        %2446 = vmatprep.mubr.f32.mxu0 0.0
        %2447 = vmatmul.mubr.f32.gmra.mxu0 %v1058
        %v2448 = vpop.f32.mrf.mxu0
        %v2449 = vadd.f32 %v2224, %v2448
        %v2450 = vpop.f32.mrf.mxu0
        %2451 = vmatprep.mubr.f32.mxu0 0.0
        %2452 = vmatmul.mubr.f32.gmra.mxu0 %v1067
        %v2453 = vpop.f32.mrf.mxu0
        %v2454 = vadd.f32 %v2229, %v2453
        %v2455 = vpop.f32.mrf.mxu0
        %2456 = vmatprep.mubr.f32.mxu0 0.0
        %2457 = vmatmul.mubr.f32.gmra.mxu0 %v1076
        %v2458 = vpop.f32.mrf.mxu0
        %v2459 = vadd.f32 %v2234, %v2458
        %v2460 = vpop.f32.mrf.mxu0
        %2461 = vmatprep.mubr.f32.mxu0 0.0
        %2462 = vmatmul.mubr.f32.gmra.mxu0 %v1085
        %v2463 = vpop.f32.mrf.mxu0
        %v2464 = vadd.f32 %v2239, %v2463
        %v2465 = vpop.f32.mrf.mxu0
        %2466 = vmatprep.mubr.f32.mxu0 0.0
        %2467 = vmatmul.mubr.f32.gmra.mxu0 %v1094
        %v2468 = vpop.f32.mrf.mxu0
        %v2469 = vadd.f32 %v2244, %v2468
        %v2470 = vpop.f32.mrf.mxu0
        %2471 = vmatprep.mubr.f32.mxu0 0.0
        %2472 = vmatmul.mubr.f32.gmra.mxu0 %v1103
        %v2473 = vpop.f32.mrf.mxu0
        %v2474 = vadd.f32 %v2249, %v2473
        %v2475 = vpop.f32.mrf.mxu0
        %2476 = vmatprep.mubr.f32.mxu0 0.0
        %2477 = vmatmul.mubr.f32.gmra.mxu0 %v1112
        %v2478 = vpop.f32.mrf.mxu0
        %v2479 = vadd.f32 %v2254, %v2478
        %v2480 = vpop.f32.mrf.mxu0
        %2481 = vmatprep.mubr.f32.mxu0 0.0
        %2482 = vmatmul.mubr.f32.gmra.mxu0 %v1121
        %v2483 = vpop.f32.mrf.mxu0
        %v2484 = vadd.f32 %v2259, %v2483
        %v2485 = vpop.f32.mrf.mxu0
        %2486 = vmatprep.mubr.f32.mxu0 0.0
        %2487 = vmatmul.mubr.f32.gmra.mxu0 %v1130
        %v2488 = vpop.f32.mrf.mxu0
        %v2489 = vadd.f32 %v2264, %v2488
        %v2490 = vpop.f32.mrf.mxu0
        %2491 = vmatprep.mubr.f32.mxu0 0.0
        %2492 = vmatmul.mubr.f32.gmra.mxu0 %v1139
        %v2493 = vpop.f32.mrf.mxu0
        %v2494 = vadd.f32 %v2269, %v2493
        %v2495 = vpop.f32.mrf.mxu0
        %2496 = vmatprep.mubr.f32.mxu0 0.0
        %2497 = vmatmul.mubr.f32.gmra.mxu0 %v1148
        %v2498 = vpop.f32.mrf.mxu0
        %v2499 = vadd.f32 %v2274, %v2498
        %v2500 = vpop.f32.mrf.mxu0
        %2501 = vmatprep.mubr.f32.mxu0 0.0
        %2502 = vmatmul.mubr.f32.gmra.mxu0 %v1157
        %v2503 = vpop.f32.mrf.mxu0
        %v2504 = vadd.f32 %v2279, %v2503
        %v2505 = vpop.f32.mrf.mxu0
        %2506 = vmatprep.mubr.f32.mxu0 0.0
        %2507 = vmatmul.mubr.f32.gmra.mxu0 %v1166
        %v2508 = vpop.f32.mrf.mxu0
        %v2509 = vadd.f32 %v2284, %v2508
        %v2510 = vpop.f32.mrf.mxu0
        %2511 = vmatprep.mubr.f32.mxu0 0.0
        %2512 = vmatmul.mubr.f32.gmra.mxu0 %v1175
        %v2513 = vpop.f32.mrf.mxu0
        %v2514 = vadd.f32 %v2289, %v2513
        %v2515 = vpop.f32.mrf.mxu0
        %2516 = vmatprep.mubr.f32.mxu0 0.0
        %2517 = vmatmul.mubr.f32.gmra.mxu0 %v1184
        %v2518 = vpop.f32.mrf.mxu0
        %v2519 = vadd.f32 %v2294, %v2518
        %v2520 = vpop.f32.mrf.mxu0
        %2521 = vmatprep.mubr.f32.mxu0 0.0
        %2522 = vmatmul.mubr.f32.gmra.mxu0 %v1193
        %v2523 = vpop.f32.mrf.mxu0
        %v2524 = vadd.f32 %v2299, %v2523
        %v2525 = vpop.f32.mrf.mxu0
        %2526 = vmatprep.mubr.f32.mxu0 0.0
        %2527 = vmatmul.mubr.f32.gmra.mxu0 %v1202
        %v2528 = vpop.f32.mrf.mxu0
        %v2529 = vadd.f32 %v2304, %v2528
        %v2530 = vpop.f32.mrf.mxu0
        %2531 = vmatprep.mubr.f32.mxu0 0.0
        %2532 = vmatmul.mubr.f32.gmra.mxu0 %v1211
        %v2533 = vpop.f32.mrf.mxu0
        %v2534 = vadd.f32 %v2309, %v2533
        %v2535 = vpop.f32.mrf.mxu0
        %2536 = vmatprep.mubr.f32.mxu0 0.0
        %2537 = vmatmul.mubr.f32.gmra.mxu0 %v1220
        %v2538 = vpop.f32.mrf.mxu0
        %v2539 = vadd.f32 %v2314, %v2538
        %v2540 = vpop.f32.mrf.mxu0
        %2541 = vmatprep.mubr.f32.mxu0 0.0
        %2542 = vmatmul.mubr.f32.gmra.mxu0 %v1229
        %v2543 = vpop.f32.mrf.mxu0
        %v2544 = vadd.f32 %v2319, %v2543
        %v2545 = vpop.f32.mrf.mxu0
        %2546 = vmatprep.mubr.f32.mxu0 0.0
        %2547 = vmatmul.mubr.f32.gmra.mxu0 %v1238
        %v2548 = vpop.f32.mrf.mxu0
        %v2549 = vadd.f32 %v2324, %v2548
        %v2550 = vpop.f32.mrf.mxu0
        %2551 = vmatprep.mubr.f32.mxu0 0.0
        %2552 = vmatmul.mubr.f32.gmra.mxu0 %v1247
        %v2553 = vpop.f32.mrf.mxu0
        %v2554 = vadd.f32 %v2329, %v2553
        %v2555 = vpop.f32.mrf.mxu0
        %2556 = vmatprep.mubr.f32.mxu0 0.0
        %2557 = vmatmul.mubr.f32.gmra.mxu0 %v1256
        %v2558 = vpop.f32.mrf.mxu0
        %v2559 = vadd.f32 %v2334, %v2558
        %v2560 = vpop.f32.mrf.mxu0
        %2561 = vmatprep.mubr.f32.mxu0 0.0
        %2562 = vmatmul.mubr.f32.gmra.mxu0 %v1265
        %v2563 = vpop.f32.mrf.mxu0
        %v2564 = vadd.f32 %v2339, %v2563
        %v2565 = vpop.f32.mrf.mxu0
        %2566 = vmatprep.mubr.f32.mxu0 0.0
        %2567 = vmatmul.mubr.f32.gmra.mxu0 %v1274
        %v2568 = vpop.f32.mrf.mxu0
        %v2569 = vadd.f32 %v2344, %v2568
        %v2570 = vpop.f32.mrf.mxu0
        %2571 = vmatprep.mubr.f32.mxu0 0.0
        %2572 = vmatmul.mubr.f32.gmra.mxu0 %v1283
        %v2573 = vpop.f32.mrf.mxu0
        %v2574 = vadd.f32 %v2349, %v2573
        %v2575 = vpop.f32.mrf.mxu0
        %2576 = vmatprep.mubr.f32.mxu0 0.0
        %2577 = vmatmul.mubr.f32.gmra.mxu0 %v1292
        %v2578 = vpop.f32.mrf.mxu0
        %v2579 = vadd.f32 %v2354, %v2578
        %v2580 = vpop.f32.mrf.mxu0
        %2581 = vmatprep.mubr.f32.mxu0 0.0
        %2582 = vmatmul.mubr.f32.gmra.mxu0 %v1301
        %v2583 = vpop.f32.mrf.mxu0
        %v2584 = vadd.f32 %v2359, %v2583
        %v2585 = vpop.f32.mrf.mxu0
        %2586 = vmatprep.mubr.f32.mxu0 0.0
        %2587 = vmatmul.mubr.f32.gmra.mxu0 %v1310
        %v2588 = vpop.f32.mrf.mxu0
        %v2589 = vadd.f32 %v2364, %v2588
        %v2590 = vpop.f32.mrf.mxu0
        %2591 = vmatprep.mubr.f32.mxu0 0.0
        %2592 = vmatmul.mubr.f32.gmra.mxu0 %v1319
        %v2593 = vpop.f32.mrf.mxu0
        %v2594 = vadd.f32 %v2369, %v2593
        %v2595 = vpop.f32.mrf.mxu0
        %2596 = vmatprep.mubr.f32.mxu0 0.0
        %2597 = vmatmul.mubr.f32.gmra.mxu0 %v1328
        %v2598 = vpop.f32.mrf.mxu0
        %v2599 = vadd.f32 %v2374, %v2598
        %v2600 = vpop.f32.mrf.mxu0
        %2601 = vmatprep.mubr.f32.mxu0 0.0
        %2602 = vmatmul.mubr.f32.gmra.mxu0 %v1337
        %v2603 = vpop.f32.mrf.mxu0
        %v2604 = vadd.f32 %v2379, %v2603
        %v2605 = vpop.f32.mrf.mxu0
        %2606 = vdwg.mxu0
        %2607 = vst [vmem:[%s276] sm:$0xff] %v2449
        %2608 = vst [vmem:[%s276 + $0x8] sm:$0xff] %v2454
        %2609 = vst [vmem:[%s276 + $0x10] sm:$0xff] %v2459
        %2610 = vst [vmem:[%s276 + $0x18] sm:$0xff] %v2464
        %2611 = vst [vmem:[%s276 + $0x20] sm:$0xff] %v2469
        %2612 = vst [vmem:[%s276 + $0x28] sm:$0xff] %v2474
        %2613 = vst [vmem:[%s276 + $0x30] sm:$0xff] %v2479
        %2614 = vst [vmem:[%s276 + $0x38] sm:$0xff] %v2484
        %2615 = vst [vmem:[%s276 + $0x40] sm:$0xff] %v2489
        %2616 = vst [vmem:[%s276 + $0x48] sm:$0xff] %v2494
        %2617 = vst [vmem:[%s276 + $0x50] sm:$0xff] %v2499
        %2618 = vst [vmem:[%s276 + $0x58] sm:$0xff] %v2504
        %2619 = vst [vmem:[%s276 + $0x60] sm:$0xff] %v2509
        %2620 = vst [vmem:[%s276 + $0x68] sm:$0xff] %v2514
        %2621 = vst [vmem:[%s276 + $0x70] sm:$0xff] %v2519
        %2622 = vst [vmem:[%s276 + $0x78] sm:$0xff] %v2524
        %2623 = vst [vmem:[%s276 + $0x80] sm:$0xff] %v2529
        %2624 = vst [vmem:[%s276 + $0x88] sm:$0xff] %v2534
        %2625 = vst [vmem:[%s276 + $0x90] sm:$0xff] %v2539
        %2626 = vst [vmem:[%s276 + $0x98] sm:$0xff] %v2544
        %2627 = vst [vmem:[%s276 + $0xa0] sm:$0xff] %v2549
        %2628 = vst [vmem:[%s276 + $0xa8] sm:$0xff] %v2554
        %2629 = vst [vmem:[%s276 + $0xb0] sm:$0xff] %v2559
        %2630 = vst [vmem:[%s276 + $0xb8] sm:$0xff] %v2564
        %2631 = vst [vmem:[%s276 + $0xc0] sm:$0xff] %v2569
        %2632 = vst [vmem:[%s276 + $0xc8] sm:$0xff] %v2574
        %2633 = vst [vmem:[%s276 + $0xd0] sm:$0xff] %v2579
        %2634 = vst [vmem:[%s276 + $0xd8] sm:$0xff] %v2584
        %2635 = vst [vmem:[%s276 + $0xe0] sm:$0xff] %v2589
        %2636 = vst [vmem:[%s276 + $0xe8] sm:$0xff] %v2594
        %2637 = vst [vmem:[%s276 + $0xf0] sm:$0xff] %v2599
        %2638 = vst [vmem:[%s276 + $0xf8] sm:$0xff] %v2604
        %p2639 = scmp.eq.s32.totalorder %s26, 0
        // Predicated region
        $region45: #{tpu_custom_call.1} parent=35 // pred_check
          %p2640 = pneg %p2639
        $region46: #{tpu_custom_call.1} parent=35 // pred_check_branch
          %2642 = sbr.rel (%p2640) target = $region48
        $region47: #{tpu_custom_call.1} parent=35 // pred_region
          %2643 = vst [vmem:[#allocation10] sm:$0x1] 0.0
          %2644 = vst [vmem:[#allocation12] sm:$0x1] 0.0
        $region48: #{tpu_custom_call.1} parent=35 // pred_fallthru
          _
        %v2645 = vld [vmem:[#allocation10] sm:$0x1]
        %v2646 = vadd.f32 %v2449, %v2454
        %v2647 = vadd.f32 %v2646, %v2459
        %v2648 = vadd.f32 %v2647, %v2464
        %v2649 = vadd.f32 %v2648, %v2469
        %v2650 = vadd.f32 %v2649, %v2474
        %v2651 = vadd.f32 %v2650, %v2479
        %v2652 = vadd.f32 %v2651, %v2484
        %v2653 = vadd.f32 %v2652, %v2489
        %v2654 = vadd.f32 %v2653, %v2494
        %v2655 = vadd.f32 %v2654, %v2499
        %v2656 = vadd.f32 %v2655, %v2504
        %v2657 = vadd.f32 %v2656, %v2509
        %v2658 = vadd.f32 %v2657, %v2514
        %v2659 = vadd.f32 %v2658, %v2519
        %v2660 = vadd.f32 %v2659, %v2524
        %v2661 = vadd.f32 %v2660, %v2529
        %v2662 = vadd.f32 %v2661, %v2534
        %v2663 = vadd.f32 %v2662, %v2539
        %v2664 = vadd.f32 %v2663, %v2544
        %v2665 = vadd.f32 %v2664, %v2549
        %v2666 = vadd.f32 %v2665, %v2554
        %v2667 = vadd.f32 %v2666, %v2559
        %v2668 = vadd.f32 %v2667, %v2564
        %v2669 = vadd.f32 %v2668, %v2569
        %v2670 = vadd.f32 %v2669, %v2574
        %v2671 = vadd.f32 %v2670, %v2579
        %v2672 = vadd.f32 %v2671, %v2584
        %v2673 = vadd.f32 %v2672, %v2589
        %v2674 = vadd.f32 %v2673, %v2594
        %v2675 = vadd.f32 %v2674, %v2599
        %v2676 = vadd.f32 %v2675, %v2604
        %v2677 = vrot.slane %v2676, 4
        %v2678 = vadd.f32 %v2676, %v2677
        %v2679 = vrot.slane %v2678, 2
        %v2680 = vadd.f32 %v2678, %v2679
        %v2681 = vrot.slane %v2680, 1
        %v2682 = vadd.f32 %v2680, %v2681
        %v2683 = vadd.f32 %v2645, %v2682
        %2684 = vst [vmem:[#allocation10] sm:$0x1] %v2683
        %v2685 = vld [vmem:[#allocation12] sm:$0x1]
        %v2686 = vmul.f32 %v2449, %v2449
        %v2687 = vmul.f32 %v2454, %v2454
        %v2688 = vmul.f32 %v2459, %v2459
        %v2689 = vmul.f32 %v2464, %v2464
        %v2690 = vmul.f32 %v2469, %v2469
        %v2691 = vmul.f32 %v2474, %v2474
        %v2692 = vmul.f32 %v2479, %v2479
        %v2693 = vmul.f32 %v2484, %v2484
        %v2694 = vmul.f32 %v2489, %v2489
        %v2695 = vmul.f32 %v2494, %v2494
        %v2696 = vmul.f32 %v2499, %v2499
        %v2697 = vmul.f32 %v2504, %v2504
        %v2698 = vmul.f32 %v2509, %v2509
        %v2699 = vmul.f32 %v2514, %v2514
        %v2700 = vmul.f32 %v2519, %v2519
        %v2701 = vmul.f32 %v2524, %v2524
        %v2702 = vmul.f32 %v2529, %v2529
        %v2703 = vmul.f32 %v2534, %v2534
        %v2704 = vmul.f32 %v2539, %v2539
        %v2705 = vmul.f32 %v2544, %v2544
        %v2706 = vmul.f32 %v2549, %v2549
        %v2707 = vmul.f32 %v2554, %v2554
        %v2708 = vmul.f32 %v2559, %v2559
        %v2709 = vmul.f32 %v2564, %v2564
        %v2710 = vmul.f32 %v2569, %v2569
        %v2711 = vmul.f32 %v2574, %v2574
        %v2712 = vmul.f32 %v2579, %v2579
        %v2713 = vmul.f32 %v2584, %v2584
        %v2714 = vmul.f32 %v2589, %v2589
        %v2715 = vmul.f32 %v2594, %v2594
        %v2716 = vmul.f32 %v2599, %v2599
        %v2717 = vmul.f32 %v2604, %v2604
        %v2718 = vadd.f32 %v2686, %v2687
        %v2719 = vadd.f32 %v2718, %v2688
        %v2720 = vadd.f32 %v2719, %v2689
        %v2721 = vadd.f32 %v2720, %v2690
        %v2722 = vadd.f32 %v2721, %v2691
        %v2723 = vadd.f32 %v2722, %v2692
        %v2724 = vadd.f32 %v2723, %v2693
        %v2725 = vadd.f32 %v2724, %v2694
        %v2726 = vadd.f32 %v2725, %v2695
        %v2727 = vadd.f32 %v2726, %v2696
        %v2728 = vadd.f32 %v2727, %v2697
        %v2729 = vadd.f32 %v2728, %v2698
        %v2730 = vadd.f32 %v2729, %v2699
        %v2731 = vadd.f32 %v2730, %v2700
        %v2732 = vadd.f32 %v2731, %v2701
        %v2733 = vadd.f32 %v2732, %v2702
        %v2734 = vadd.f32 %v2733, %v2703
        %v2735 = vadd.f32 %v2734, %v2704
        %v2736 = vadd.f32 %v2735, %v2705
        %v2737 = vadd.f32 %v2736, %v2706
        %v2738 = vadd.f32 %v2737, %v2707
        %v2739 = vadd.f32 %v2738, %v2708
        %v2740 = vadd.f32 %v2739, %v2709
        %v2741 = vadd.f32 %v2740, %v2710
        %v2742 = vadd.f32 %v2741, %v2711
        %v2743 = vadd.f32 %v2742, %v2712
        %v2744 = vadd.f32 %v2743, %v2713
        %v2745 = vadd.f32 %v2744, %v2714
        %v2746 = vadd.f32 %v2745, %v2715
        %v2747 = vadd.f32 %v2746, %v2716
        %v2748 = vadd.f32 %v2747, %v2717
        %v2749 = vrot.slane %v2748, 4
        %v2750 = vadd.f32 %v2748, %v2749
        %v2751 = vrot.slane %v2750, 2
        %v2752 = vadd.f32 %v2750, %v2751
        %v2753 = vrot.slane %v2752, 1
        %v2754 = vadd.f32 %v2752, %v2753
        %v2755 = vadd.f32 %v2685, %v2754
        %2756 = vst [vmem:[#allocation12] sm:$0x1] %v2755
        %s2757 = sand.u32 %s123, 1
        %s2758 = scalar_lea.sflag [#allocation6], %s2757
        %s2759 = sand.u32 %s123, 1
        %s2760 = smul.addr %s2759, 256
        %s2761 = scalar_lea.vmem [#allocation9], %s2760
        // Predicated region
        $region49: #{tpu_custom_call.1} parent=35 // pred_check
          %p2762 = pneg %p133
        $region50: #{tpu_custom_call.1} parent=35 // pred_check_branch
          %2764 = sbr.rel (%p2762) target = $region52
        $region51: #{tpu_custom_call.1} parent=35 // pred_region
          %s2766 = ssub.s32 4096, 4096
          %2767 = vsyncadd %s2758, %s2766
          %s2768 = smul.addr %s26, 32
          %s2769 = smul.addr %s2768, 128
          %s2770 = scalar_lea.hbm %s4, %s2769
          %s2771 = sshll.u32 %s2761, 4
          %s2772 = int_to_ptr.vmem [resolvable:$true] %s2771
          %2777 = dma.vmem_to_hbm [thread:$0]  %s2772, 4096, %s2770, %s2758, 128, 128, 8
        $region52: #{tpu_custom_call.1} parent=35 // pred_fallthru
          _
        // Predicated region
        $region53: #{tpu_custom_call.1} parent=35 // pred_check
          %p2778 = pneg %p154
        $region54: #{tpu_custom_call.1} parent=35 // pred_check_branch
          %2780 = sbr.rel (%p2778) target = $region56
        $region55: #{tpu_custom_call.1} parent=35 // pred_region
          %s2782 = ssub.s32 16, 16
          %2783 = vsyncadd [#allocation11], %s2782
          %s2785 = sshll.u32 [#allocation10], 4
          %s2786 = int_to_ptr.vmem [resolvable:$true] %s2785
          %2788 = dma.vmem_to_hbm [thread:$0]  %s2786, 16, %s5, [#allocation11]
        $region56: #{tpu_custom_call.1} parent=35 // pred_fallthru
          _
        // Predicated region
        $region57: #{tpu_custom_call.1} parent=35 // pred_check
          %p2789 = pneg %p175
        $region58: #{tpu_custom_call.1} parent=35 // pred_check_branch
          %2791 = sbr.rel (%p2789) target = $region60
        $region59: #{tpu_custom_call.1} parent=35 // pred_region
          %s2793 = ssub.s32 16, 16
          %2794 = vsyncadd [#allocation11], %s2793
          %s2796 = sshll.u32 [#allocation12], 4
          %s2797 = int_to_ptr.vmem [resolvable:$true] %s2796
          %2799 = dma.vmem_to_hbm [thread:$0]  %s2797, 16, %s6, [#allocation11]
        $region60: #{tpu_custom_call.1} parent=35 // pred_fallthru
          _
        // Predicated region
        $region61: #{tpu_custom_call.1} parent=35 // pred_check
          %p2800 = pneg %p154
        $region62: #{tpu_custom_call.1} parent=35 // pred_check_branch
          %2802 = sbr.rel (%p2800) target = $region64
        $region63: #{tpu_custom_call.1} parent=35 // pred_region
          %2803 = dma.done [#allocation11], 16
        $region64: #{tpu_custom_call.1} parent=35 // pred_fallthru
          _
        // Predicated region
        $region65: #{tpu_custom_call.1} parent=35 // pred_check
          %p2804 = pneg %p175
        $region66: #{tpu_custom_call.1} parent=35 // pred_check_branch
          %2806 = sbr.rel (%p2804) target = $region68
        $region67: #{tpu_custom_call.1} parent=35 // pred_region
          %2807 = dma.done [#allocation11], 16
        $region68: #{tpu_custom_call.1} parent=35 // pred_fallthru
          _
      $region36: #{tpu_custom_call.1} parent=5 // pred_fallthru
        _
      %p2808 = scmp.le.s32.totalorder 2, %s21
      // Predicated region
      $region69: #{tpu_custom_call.1} parent=5 // pred_check
        %p2809 = pneg %p2808
      $region70: #{tpu_custom_call.1} parent=5 // pred_check_branch
        %2811 = sbr.rel (%p2809) target = $region72
      $region71: #{tpu_custom_call.1} parent=5 // pred_region
        %s2812 = ssub.s32 %s21, 2
        // Predicated region
        $region73: #{tpu_custom_call.1} parent=71 // pred_check
          %p2813 = pneg %p139
        $region74: #{tpu_custom_call.1} parent=71 // pred_check_branch
          %2815 = sbr.rel (%p2813) target = $region76
        $region75: #{tpu_custom_call.1} parent=71 // pred_region
          %s2816 = sand.u32 %s124, 1
          %s2817 = scalar_lea.sflag [#allocation6], %s2816
          %s2818 = sand.u32 %s124, 1
          %s2819 = smul.addr %s2818, 256
          %s2820 = scalar_lea.vmem [#allocation9], %s2819
          %2821 = dma.done %s2817, 4096
        $region76: #{tpu_custom_call.1} parent=71 // pred_fallthru
          _
      $region72: #{tpu_custom_call.1} parent=5 // pred_fallthru
        _
    $region6: #{tpu_custom_call.1} parent=1 // loop_footer
      %s25 = sadd.s32 1, %s21
    $region7: #{tpu_custom_call.1} parent=1 // loop_footer_branch
      %20 = sbr.rel target = $region3
    $region8: #{tpu_custom_call.1} parent=1 // loop_exit
      _
    %2822 = vsyncpa [#allocation5], 1
    %s2823 = scalar_lea.sflag [#allocation5], 1
    %2824 = vsyncpa %s2823, 1
    %2825 = vsyncpa [#allocation8], 1
    %2826 = vsyncpa [#allocation6], 1
    %s2827 = scalar_lea.sflag [#allocation6], 1
    %2828 = vsyncpa %s2827, 1
    %2829 = vsyncpa [#allocation11], 1

</llo_original>
